<compile_context>
chip_gen: v7x
topology: tpu7x:2x2x1
jax: 0.10.0
libtpu: 0.0.40
codegen_flags: <defaults>
</compile_context>

<pallas_src>
import numpy as np
import jax
import jax.numpy as jnp
from jax import lax
from jax.experimental import pallas as pl
from jax.experimental.pallas import tpu as pltpu


# ----------------------------------------------------------------------------------
# Legendre / quadrature setup for the (injected) RealSHT / InverseRealSHT transforms.
# (ortho-normalized associated Legendre functions, Gauss-Legendre grid, CS phase)
# ----------------------------------------------------------------------------------
def _legpoly(mmax, lmax, x, csphase=True):
    nmax = max(mmax, lmax)
    vdm = np.zeros((nmax, nmax, len(x)), dtype=np.float64)
    vdm[0, 0, :] = 1.0 / np.sqrt(4.0 * np.pi)
    for l in range(1, nmax):
        vdm[l - 1, l, :] = np.sqrt(2 * l + 1) * x * vdm[l - 1, l - 1, :]
        vdm[l, l, :] = np.sqrt((2 * l + 1) * (1 + x) * (1 - x) / (2 * l)) * vdm[l - 1, l - 1, :]
    for l in range(2, nmax):
        for m in range(0, l - 1):
            vdm[m, l, :] = (x * np.sqrt((2 * l - 1) / (l - m) * (2 * l + 1) / (l + m)) * vdm[m, l - 1, :]
                            - np.sqrt((l + m - 1) / (l - m) * (2 * l + 1) / (2 * l - 3)
                                      * (l - m - 1) / (l + m)) * vdm[m, l - 2, :])
    vdm = vdm[:mmax, :lmax]
    if csphase:
        for m in range(1, mmax, 2):
            vdm[m] *= -1.0
    return vdm  # (mmax, lmax, nlat)


def make_sht_mats(nlat, nlon, block_m=8, table_dtype=jnp.bfloat16):
    """Analysis/synthesis Legendre tables, zero-padded along m to a multiple of block_m.

    * The 2*pi forward-SHT scale is folded into w_fwd_T (no separate scaling pass).
    * Tables are stored in bf16 (they dominate the kernel's HBM stream at production
      nlat/lmax); all dots accumulate in f32 via preferred_element_type.
    * block_m = wavenumbers m per grid step.  8 is fine for small nlat; at production
      nlat=lmax ~ 360-720 use 2-4 on v7x (64 MiB VMEM) and raise vmem_limit_bytes.
    """
    lmax = nlat
    mmax = nlon // 2 + 1
    mp = ((mmax + block_m - 1) // block_m) * block_m
    cost, wq = np.polynomial.legendre.leggauss(nlat)
    pct = _legpoly(mmax, lmax, cost)                                  # (mmax, lmax, nlat)
    w_fwd = 2.0 * np.pi * pct * wq[None, None, :]                     # analysis weights, 2*pi folded in
    w_fwd_T = np.zeros((mp, nlat, lmax), dtype=np.float32)
    w_fwd_T[:mmax] = np.transpose(w_fwd, (0, 2, 1))                   # (m, nlat, lmax)
    w_inv = np.zeros((mp, lmax, nlat), dtype=np.float32)
    w_inv[:mmax] = pct                                                # (m, lmax, nlat)
    return {"w_fwd_T": jnp.asarray(w_fwd_T, dtype=table_dtype),
            "w_inv": jnp.asarray(w_inv, dtype=table_dtype),
            "lmax": lmax, "mmax": mmax, "mp": mp, "block_m": block_m}


# ----------------------------------------------------------------------------------
# Host-side block-complex weight packing for right-multiplication:
#   y = x @ (Wr + i Wi) on channel row-vectors  <=>  [yr | yi] = [xr | xi] @ W_pack
#   W_pack = [[Wr, Wi], [-Wi, Wr]]   shape (2*Cin, 2*Cout)
# ----------------------------------------------------------------------------------
def pack_complex_weight_rhs(w_r, w_i, dtype=jnp.bfloat16):
    top = jnp.concatenate([w_r, w_i], axis=1)      # real input rows
    bot = jnp.concatenate([-w_i, w_r], axis=1)     # imag input rows
    return jnp.concatenate([top, bot], axis=0).astype(dtype)


# ----------------------------------------------------------------------------------
# Fused Pallas kernel: per block of tm wavenumbers m, do
#   Legendre analysis -> complex channel MLP -> Legendre synthesis, all in VMEM.
#
# Layout: x/out blocks are (tm, R, nlat) with R = B*2C rows ordered per batch as
#         [C real channels ; C imag channels]; lanes carry the latitude axis
#         (lane-dense at production nlat >= 128).
# ----------------------------------------------------------------------------------
def make_fused_kernel(tm, batch, c_in, hidden, n_layers, lmax):
    two_c = 2 * c_in
    two_h = 2 * hidden
    n_rows = tm * batch * lmax            # rows of the batched MLP dots

    def kernel(x_ref, wf_ref, wi_ref, *rest):
        layer_refs = rest[:n_layers]
        wout_ref = rest[n_layers]
        o_ref = rest[-1]

        dot_dt = wf_ref.dtype             # bf16 operands, f32 accumulation

        # ---- Legendre analysis: one m-batched dot for all batches & real/imag rows ----
        x = x_ref[...].astype(dot_dt)                                 # (tm, R, nlat)
        c = jnp.einsum("mrk,mkl->mrl", x, wf_ref[...],
                       preferred_element_type=jnp.float32)            # (tm, R, lmax) f32

        # ---- move channels to the contraction (minor) axis for the MLP ----
        c = c.reshape(tm, batch, two_c, lmax)
        c = jnp.swapaxes(c, 2, 3)                                      # (tm, B, lmax, 2C)
        h = c.reshape(n_rows, two_c)                                   # (tm*B*lmax, 2C)

        # ComplexReLU('real'): ReLU on the real half of the columns only (hoisted mask).
        relu_mask = lax.broadcasted_iota(jnp.int32, (1, two_h), 1) < hidden

        # ---- spectral MLP: ONE (n_rows, 2Cin) @ (2Cin, 2Hout) dot per layer ----
        for w_ref in layer_refs:
            h = jnp.dot(h.astype(dot_dt), w_ref[...],
                        preferred_element_type=jnp.float32)            # (n_rows, 2H)
            h = jnp.where(relu_mask, jnp.maximum(h, 0.0), h)
            # drop_rate = 0.0 -> Identity
        y = jnp.dot(h.astype(dot_dt), wout_ref[...],
                    preferred_element_type=jnp.float32)                # (n_rows, 2C)

        # ---- back to (tm, R, lmax) row layout for the synthesis ----
        y = y.reshape(tm, batch, lmax, two_c)
        y = jnp.swapaxes(y, 2, 3)                                      # (tm, B, 2C, lmax)
        z = y.reshape(tm, batch * two_c, lmax).astype(dot_dt)

        # ---- Legendre synthesis: one m-batched dot, one contiguous block store ----
        o_ref[...] = jnp.einsum("mrl,mlk->mrk", z, wi_ref[...],
                                preferred_element_type=jnp.float32)    # (tm, R, nlat)

    return kernel


# ----------------------------------------------------------------------------------
# Full SpectralAttentionS2 forward
# ----------------------------------------------------------------------------------
def spectral_attention_s2_forward(x, params, sht, nlon):
    w_fwd_T, w_inv = sht["w_fwd_T"], sht["w_inv"]
    lmax, mmax, mp, tm = sht["lmax"], sht["mmax"], sht["mp"], sht["block_m"]

    dtype = x.dtype
    B, C, nlat, _ = x.shape
    residual = x                                      # scale_residual is False here
    x32 = x.astype(jnp.float32)

    # ---- longitude FFT of the forward RealSHT ----
    # TODO(synk): the FFT along longitude has no Pallas primitive; it stays in JAX/XLA.
    # The reference's 2*pi scale is folded into w_fwd_T (no elementwise pass here).
    xf = jnp.fft.rfft(x32, axis=-1, norm="forward")   # (B, C, nlat, mmax) complex64

    # m-major layout with real/imag stacked per batch on the row axis, zero-padded along
    # m to the block multiple so the last grid block never reads undefined data.
    # TODO(synk): this transpose (and the inverse one below) is still one HBM pass in XLA;
    # an m-last BlockSpec + in-VMEM relayout was skipped in favor of ops with guaranteed
    # Mosaic lowering.
    xs = jnp.stack([jnp.real(xf), jnp.imag(xf)], axis=1)             # (B, 2, C, nlat, mmax)
    xm = jnp.transpose(xs, (4, 0, 1, 2, 3)).reshape(mmax, B * 2 * C, nlat)
    xm = jnp.pad(xm, ((0, mp - mmax), (0, 0), (0, 0)))               # (mp, R, nlat) f32

    # Packed block-complex MLP weights (tiny; packed host-side, streamed as bf16).
    wdt = w_fwd_T.dtype
    w_pack = [pack_complex_weight_rhs(wr, wi, wdt)
              for wr, wi in zip(params["w_r"], params["w_i"])]       # (2Cin, 2H) each
    wout_pack = pack_complex_weight_rhs(params["wout_r"], params["wout_i"], wdt)  # (2H, 2C)
    hidden = w_pack[0].shape[1] // 2
    n_layers = len(w_pack)
    R = B * 2 * C

    in_specs = [
        pl.BlockSpec((tm, R, nlat), lambda i: (i, 0, 0)),
        pl.BlockSpec((tm, nlat, lmax), lambda i: (i, 0, 0)),
        pl.BlockSpec((tm, lmax, nlat), lambda i: (i, 0, 0)),
    ]
    args = [xm, w_fwd_T, w_inv]
    for mat in w_pack + [wout_pack]:
        in_specs.append(pl.BlockSpec(mat.shape, lambda i: (0, 0)))   # constant block: stays resident
        args.append(mat)

    # For production nlat/lmax: shrink block_m on v7x (64 MiB VMEM) and raise
    # vmem_limit_bytes in CompilerParams; toy tiles are tiny so defaults suffice.
    out_m = pl.pallas_call(
        make_fused_kernel(tm, B, C, hidden, n_layers, lmax),
        out_shape=jax.ShapeDtypeStruct((mp, R, nlat), jnp.float32),
        grid=(mp // tm,),
        in_specs=in_specs,
        out_specs=pl.BlockSpec((tm, R, nlat), lambda i: (i, 0, 0)),
        compiler_params=pltpu.CompilerParams(dimension_semantics=("parallel",)),
    )(*args)

    # ---- back to (B, C, nlat, mmax) complex, inverse longitude FFT ----
    om = out_m[:mmax].reshape(mmax, B, 2, C, nlat)
    oc = jnp.transpose(om, (2, 1, 3, 4, 0))                           # (2, B, C, nlat, mmax)
    out = jnp.fft.irfft(oc[0] + 1j * oc[1], n=nlon, axis=-1, norm="forward")

    return out.astype(dtype), residual


# ----------------------------------------------------------------------------------
# Deterministic parameter init (operator_type='diagonal', bias=False, 1 spectral layer)
# ----------------------------------------------------------------------------------
def init_params(key, embed_dim, hidden_size_factor=2, spectral_layers=1):
    scale = 1.0 / (embed_dim * embed_dim)
    hidden = int(hidden_size_factor * embed_dim)
    keys = jax.random.split(key, spectral_layers + 1)
    w_r, w_i = [], []
    shape = (embed_dim, hidden, 2)
    for l in range(spectral_layers):
        w = scale * jax.random.normal(keys[l], shape, dtype=jnp.float32)
        w_r.append(w[..., 0])
        w_i.append(w[..., 1])
        shape = (hidden, hidden, 2)
    wout = scale * jax.random.normal(keys[-1], (hidden, embed_dim, 2), dtype=jnp.float32)
    return {"w_r": w_r, "w_i": w_i, "wout_r": wout[..., 0], "wout_i": wout[..., 1]}


if __name__ == "__main__":
    B, C = 2, 16
    nlat, nlon = 16, 32

    key = jax.random.PRNGKey(0)
    kx, kp = jax.random.split(key)
    x = jax.random.normal(kx, (B, C, nlat, nlon), dtype=jnp.float32)

    params = init_params(kp, embed_dim=C, hidden_size_factor=2, spectral_layers=1)
    sht = make_sht_mats(nlat, nlon, block_m=8)

    fwd = jax.jit(lambda inp: spectral_attention_s2_forward(inp, params, sht, nlon))
    out, residual = fwd(x)
    jax.block_until_ready(out)
    jax.block_until_ready(residual)

    assert out.shape == (B, C, nlat, nlon) and out.dtype == x.dtype
    assert residual.shape == x.shape and residual.dtype == x.dtype
    print("KERNEL_OK")
</pallas_src>

<mosaic_0001>
module attributes {stable_mosaic.version = 11 : i64} {
  func.func @kernel(%arg0: i32, %arg1: memref<8x64x16xf32, #tpu.memory_space<vmem>>, %arg2: memref<8x16x16xbf16, #tpu.memory_space<vmem>>, %arg3: memref<8x16x16xbf16, #tpu.memory_space<vmem>>, %arg4: memref<32x64xbf16, #tpu.memory_space<vmem>>, %arg5: memref<64x32xbf16, #tpu.memory_space<vmem>>, %arg6: memref<8x64x16xf32, #tpu.memory_space<vmem>>) attributes {dimension_semantics = [#tpu.dimension_semantics<parallel>], iteration_bounds = array<i64: 3>, scalar_prefetch = 0 : i64, scratch_operands = 0 : i64, tpu.core_type = #tpu.core_type<tc>, window_params = [{transform_indices = @transform_0, window_bounds = array<i64: 8, 64, 16>}, {transform_indices = @transform_1, window_bounds = array<i64: 8, 16, 16>}, {transform_indices = @transform_2, window_bounds = array<i64: 8, 16, 16>}, {pipeline_mode = #tpu.pipeline_mode<synchronous>, transform_indices = @transform_3, window_bounds = array<i64: 32, 64>}, {pipeline_mode = #tpu.pipeline_mode<synchronous>, transform_indices = @transform_4, window_bounds = array<i64: 64, 32>}, {transform_indices = @transform_5, window_bounds = array<i64: 8, 64, 16>}]} {
    %c0 = arith.constant 0 : index
    %c0_0 = arith.constant 0 : index
    %c0_1 = arith.constant 0 : index
    %0 = vector.load %arg1[%c0, %c0_0, %c0_1] : memref<8x64x16xf32, #tpu.memory_space<vmem>>, vector<8x64x16xf32>
    %1 = arith.truncf %0 : vector<8x64x16xf32> to vector<8x64x16xbf16>
    %c0_2 = arith.constant 0 : index
    %c0_3 = arith.constant 0 : index
    %c0_4 = arith.constant 0 : index
    %2 = vector.load %arg2[%c0_2, %c0_3, %c0_4] : memref<8x16x16xbf16, #tpu.memory_space<vmem>>, vector<8x16x16xbf16>
    "tpu.trace_start"() <{level = 10 : i32, message = "mrk,mkl->mrl"}> : () -> ()
    %cst = arith.constant dense<0.000000e+00> : vector<8x64x16xf32>
    %3 = tpu.matmul %1, %2, %cst {dimension_numbers = #tpu.dot_dimension_numbers<[2], [1], [1], [2], [0, 0, 0, 1, 1, 2], [0], [0]>} : vector<8x64x16xbf16>, vector<8x16x16xbf16>, vector<8x64x16xf32> -> vector<8x64x16xf32>
    "tpu.trace_stop"() : () -> ()
    %4 = vector.shape_cast %3 : vector<8x64x16xf32> to vector<8x2x32x16xf32>
    %5 = tpu.transpose %4, [0, 1, 3, 2] : vector<8x2x32x16xf32> -> vector<8x2x16x32xf32>
    %6 = vector.shape_cast %5 : vector<8x2x16x32xf32> to vector<256x32xf32>
    %7 = tpu.iota {dimensions = array<i32: 1>} : vector<1x64xi32>
    %c32_i32 = arith.constant 32 : i32
    %8 = vector.broadcast %c32_i32 : i32 to vector<1x64xi32>
    %9 = arith.cmpi slt, %7, %8 : vector<1x64xi32>
    %10 = arith.truncf %6 : vector<256x32xf32> to vector<256x32xbf16>
    %c0_5 = arith.constant 0 : index
    %c0_6 = arith.constant 0 : index
    %11 = vector.load %arg4[%c0_5, %c0_6] : memref<32x64xbf16, #tpu.memory_space<vmem>>, vector<32x64xbf16>
    %cst_7 = arith.constant dense<0.000000e+00> : vector<256x64xf32>
    %12 = tpu.matmul %10, %11, %cst_7 {dimension_numbers = #tpu.dot_dimension_numbers<[1], [0], [0], [1], [0, 0, 1, 1], [], []>} : vector<256x32xbf16>, vector<32x64xbf16>, vector<256x64xf32> -> vector<256x64xf32>
    %cst_8 = arith.constant 0.000000e+00 : f32
    %13 = vector.broadcast %cst_8 : f32 to vector<256x64xf32>
    %14 = arith.maximumf %12, %13 : vector<256x64xf32>
    %15 = vector.shape_cast %9 : vector<1x64xi1> to vector<1x64xi1>
    %16 = vector.broadcast %15 : vector<1x64xi1> to vector<256x64xi1>
    %17 = arith.select %16, %14, %12 : vector<256x64xi1>, vector<256x64xf32>
    %18 = arith.truncf %17 : vector<256x64xf32> to vector<256x64xbf16>
    %c0_9 = arith.constant 0 : index
    %c0_10 = arith.constant 0 : index
    %19 = vector.load %arg5[%c0_9, %c0_10] : memref<64x32xbf16, #tpu.memory_space<vmem>>, vector<64x32xbf16>
    %cst_11 = arith.constant dense<0.000000e+00> : vector<256x32xf32>
    %20 = tpu.matmul %18, %19, %cst_11 {dimension_numbers = #tpu.dot_dimension_numbers<[1], [0], [0], [1], [0, 0, 1, 1], [], []>} : vector<256x64xbf16>, vector<64x32xbf16>, vector<256x32xf32> -> vector<256x32xf32>
    %21 = vector.shape_cast %20 : vector<256x32xf32> to vector<8x2x16x32xf32>
    %22 = tpu.transpose %21, [0, 1, 3, 2] : vector<8x2x16x32xf32> -> vector<8x2x32x16xf32>
    %23 = vector.shape_cast %22 : vector<8x2x32x16xf32> to vector<8x64x16xf32>
    %24 = arith.truncf %23 : vector<8x64x16xf32> to vector<8x64x16xbf16>
    %c0_12 = arith.constant 0 : index
    %c0_13 = arith.constant 0 : index
    %c0_14 = arith.constant 0 : index
    %25 = vector.load %arg3[%c0_12, %c0_13, %c0_14] : memref<8x16x16xbf16, #tpu.memory_space<vmem>>, vector<8x16x16xbf16>
    "tpu.trace_start"() <{level = 10 : i32, message = "mrl,mlk->mrk"}> : () -> ()
    %cst_15 = arith.constant dense<0.000000e+00> : vector<8x64x16xf32>
    %26 = tpu.matmul %24, %25, %cst_15 {dimension_numbers = #tpu.dot_dimension_numbers<[2], [1], [1], [2], [0, 0, 0, 1, 1, 2], [0], [0]>} : vector<8x64x16xbf16>, vector<8x16x16xbf16>, vector<8x64x16xf32> -> vector<8x64x16xf32>
    "tpu.trace_stop"() : () -> ()
    %c0_16 = arith.constant 0 : index
    %c0_17 = arith.constant 0 : index
    %c0_18 = arith.constant 0 : index
    %27 = vector.load %arg6[%c0_16, %c0_17, %c0_18] : memref<8x64x16xf32, #tpu.memory_space<vmem>>, vector<8x64x16xf32>
    tpu.vector_store %arg6[%c0_16, %c0_17, %c0_18], %26 {strides = array<i32>} : memref<8x64x16xf32, #tpu.memory_space<vmem>>, vector<8x64x16xf32>,
    return
  }
  func.func @transform_0(%arg0: i32) -> (i32, i32, i32) {
    %c0_i32 = arith.constant 0 : i32
    %c0_i32_0 = arith.constant 0 : i32
    %c0_i32_1 = arith.constant 0 : i32
    return %arg0, %c0_i32, %c0_i32_0 : i32, i32, i32
  }
  func.func @transform_1(%arg0: i32) -> (i32, i32, i32) {
    %c0_i32 = arith.constant 0 : i32
    %c0_i32_0 = arith.constant 0 : i32
    %c0_i32_1 = arith.constant 0 : i32
    return %arg0, %c0_i32, %c0_i32_0 : i32, i32, i32
  }
  func.func @transform_2(%arg0: i32) -> (i32, i32, i32) {
    %c0_i32 = arith.constant 0 : i32
    %c0_i32_0 = arith.constant 0 : i32
    %c0_i32_1 = arith.constant 0 : i32
    return %arg0, %c0_i32, %c0_i32_0 : i32, i32, i32
  }
  func.func @transform_3(%arg0: i32) -> (i32, i32) {
    %c0_i32 = arith.constant 0 : i32
    %c0_i32_0 = arith.constant 0 : i32
    %c0_i32_1 = arith.constant 0 : i32
    return %c0_i32, %c0_i32_0 : i32, i32
  }
  func.func @transform_4(%arg0: i32) -> (i32, i32) {
    %c0_i32 = arith.constant 0 : i32
    %c0_i32_0 = arith.constant 0 : i32
    %c0_i32_1 = arith.constant 0 : i32
    return %c0_i32, %c0_i32_0 : i32, i32
  }
  func.func @transform_5(%arg0: i32) -> (i32, i32, i32) {
    %c0_i32 = arith.constant 0 : i32
    %c0_i32_0 = arith.constant 0 : i32
    %c0_i32_1 = arith.constant 0 : i32
    return %arg0, %c0_i32, %c0_i32_0 : i32, i32, i32
  }
}

</mosaic_0001>

<llo_original>
// kernel: reverse.0
$region0: #{reverse.0}
  %s0 = inlined_call_operand.vmem [shape: f32[2,16,16,15], index: 0, kind: input, shape index: {}]
  %s1 = inlined_call_operand.vmem [shape: f32[2,16,16,15], index: 1, kind: output, shape index: {}]
  %v2 = vlaneseq
  %v3 = vsub.s32 14, %v2
  %4 = vset.pattern.permute.xlu0 %v3
  $region1: #{reverse.0} parent=0
    #allocation0 [shape = 'u8[262144]{0}', space=vmem, size = 0x40000, scoped, tag = 'operand span for operand 0']
    #allocation1 [shape = 'u8[262144]{0}', space=vmem, size = 0x40000, scoped, tag = 'operand span for operand 1']
    // Predicated region
    $region2: #{reverse.0} parent=1 // pred_check
      _
    $region3: #{reverse.0} parent=1 // pred_check_branch
      %6 = sbr.rel (0) target = $region5
    $region4: #{reverse.0} parent=1 // pred_region
      // Predicated region
      $region6: #{reverse.0} parent=4 // pred_check
        _
      $region7: #{reverse.0} parent=4 // pred_check_branch
        %8 = sbr.rel (0) target = $region9
      $region8: #{reverse.0} parent=4 // pred_region
        // Predicated region
        $region21: #{reverse.0} parent=8 // pred_check
          _
        $region22: #{reverse.0} parent=8 // pred_check_branch
          %149 = sbr.rel (0) target = $region24
        $region23: #{reverse.0} parent=8 // pred_region
          loop: start=0, step=1, limit=1
          $region25: #{reverse.0} parent=23 // loop_pre_header
            _
          $region26: #{reverse.0} parent=23 // loop_header
            %s151 = sphi 0, %s155
            %p152 = scmp.ge.s32.totalorder %s151, 1
            %s156 = sphi %s0, %s0
            %s157 = sphi [#allocation0], [#allocation0]
          $region27: #{reverse.0} parent=23 // loop_header_branch
            %154 = sbr.rel (%p152) target = $region31
          $region28: #{reverse.0} parent=23 // loop_body
            %v158 = vld [vmem:[%s156] sm:$0xff]
            %159 = vst [vmem:[%s157] sm:$0xff] %v158
            %v160 = vld [vmem:[%s156 + $0x8] sm:$0xff]
            %161 = vst [vmem:[%s157 + $0x8] sm:$0xff] %v160
            %v162 = vld [vmem:[%s156 + $0x10] sm:$0xff]
            %163 = vst [vmem:[%s157 + $0x10] sm:$0xff] %v162
            %v164 = vld [vmem:[%s156 + $0x18] sm:$0xff]
            %165 = vst [vmem:[%s157 + $0x18] sm:$0xff] %v164
            %v166 = vld [vmem:[%s156 + $0x20] sm:$0xff]
            %167 = vst [vmem:[%s157 + $0x20] sm:$0xff] %v166
            %v168 = vld [vmem:[%s156 + $0x28] sm:$0xff]
            %169 = vst [vmem:[%s157 + $0x28] sm:$0xff] %v168
            %v170 = vld [vmem:[%s156 + $0x30] sm:$0xff]
            %171 = vst [vmem:[%s157 + $0x30] sm:$0xff] %v170
            %v172 = vld [vmem:[%s156 + $0x38] sm:$0xff]
            %173 = vst [vmem:[%s157 + $0x38] sm:$0xff] %v172
            %v174 = vld [vmem:[%s156 + $0x40] sm:$0xff]
            %175 = vst [vmem:[%s157 + $0x40] sm:$0xff] %v174
            %v176 = vld [vmem:[%s156 + $0x48] sm:$0xff]
            %177 = vst [vmem:[%s157 + $0x48] sm:$0xff] %v176
            %v178 = vld [vmem:[%s156 + $0x50] sm:$0xff]
            %179 = vst [vmem:[%s157 + $0x50] sm:$0xff] %v178
            %v180 = vld [vmem:[%s156 + $0x58] sm:$0xff]
            %181 = vst [vmem:[%s157 + $0x58] sm:$0xff] %v180
            %v182 = vld [vmem:[%s156 + $0x60] sm:$0xff]
            %183 = vst [vmem:[%s157 + $0x60] sm:$0xff] %v182
            %v184 = vld [vmem:[%s156 + $0x68] sm:$0xff]
            %185 = vst [vmem:[%s157 + $0x68] sm:$0xff] %v184
            %v186 = vld [vmem:[%s156 + $0x70] sm:$0xff]
            %187 = vst [vmem:[%s157 + $0x70] sm:$0xff] %v186
            %v188 = vld [vmem:[%s156 + $0x78] sm:$0xff]
            %189 = vst [vmem:[%s157 + $0x78] sm:$0xff] %v188
            %v190 = vld [vmem:[%s156 + $0x80] sm:$0xff]
            %191 = vst [vmem:[%s157 + $0x80] sm:$0xff] %v190
            %v192 = vld [vmem:[%s156 + $0x88] sm:$0xff]
            %193 = vst [vmem:[%s157 + $0x88] sm:$0xff] %v192
            %v194 = vld [vmem:[%s156 + $0x90] sm:$0xff]
            %195 = vst [vmem:[%s157 + $0x90] sm:$0xff] %v194
            %v196 = vld [vmem:[%s156 + $0x98] sm:$0xff]
            %197 = vst [vmem:[%s157 + $0x98] sm:$0xff] %v196
            %v198 = vld [vmem:[%s156 + $0xa0] sm:$0xff]
            %199 = vst [vmem:[%s157 + $0xa0] sm:$0xff] %v198
            %v200 = vld [vmem:[%s156 + $0xa8] sm:$0xff]
            %201 = vst [vmem:[%s157 + $0xa8] sm:$0xff] %v200
            %v202 = vld [vmem:[%s156 + $0xb0] sm:$0xff]
            %203 = vst [vmem:[%s157 + $0xb0] sm:$0xff] %v202
            %v204 = vld [vmem:[%s156 + $0xb8] sm:$0xff]
            %205 = vst [vmem:[%s157 + $0xb8] sm:$0xff] %v204
            %v206 = vld [vmem:[%s156 + $0xc0] sm:$0xff]
            %207 = vst [vmem:[%s157 + $0xc0] sm:$0xff] %v206
            %v208 = vld [vmem:[%s156 + $0xc8] sm:$0xff]
            %209 = vst [vmem:[%s157 + $0xc8] sm:$0xff] %v208
            %v210 = vld [vmem:[%s156 + $0xd0] sm:$0xff]
            %211 = vst [vmem:[%s157 + $0xd0] sm:$0xff] %v210
            %v212 = vld [vmem:[%s156 + $0xd8] sm:$0xff]
            %213 = vst [vmem:[%s157 + $0xd8] sm:$0xff] %v212
            %v214 = vld [vmem:[%s156 + $0xe0] sm:$0xff]
            %215 = vst [vmem:[%s157 + $0xe0] sm:$0xff] %v214
            %v216 = vld [vmem:[%s156 + $0xe8] sm:$0xff]
            %217 = vst [vmem:[%s157 + $0xe8] sm:$0xff] %v216
            %v218 = vld [vmem:[%s156 + $0xf0] sm:$0xff]
            %219 = vst [vmem:[%s157 + $0xf0] sm:$0xff] %v218
            %v220 = vld [vmem:[%s156 + $0xf8] sm:$0xff]
            %221 = vst [vmem:[%s157 + $0xf8] sm:$0xff] %v220
            %v222 = vld [vmem:[%s156 + $0x100] sm:$0xff]
            %223 = vst [vmem:[%s157 + $0x100] sm:$0xff] %v222
            %v224 = vld [vmem:[%s156 + $0x108] sm:$0xff]
            %225 = vst [vmem:[%s157 + $0x108] sm:$0xff] %v224
            %v226 = vld [vmem:[%s156 + $0x110] sm:$0xff]
            %227 = vst [vmem:[%s157 + $0x110] sm:$0xff] %v226
            %v228 = vld [vmem:[%s156 + $0x118] sm:$0xff]
            %229 = vst [vmem:[%s157 + $0x118] sm:$0xff] %v228
            %v230 = vld [vmem:[%s156 + $0x120] sm:$0xff]
            %231 = vst [vmem:[%s157 + $0x120] sm:$0xff] %v230
            %v232 = vld [vmem:[%s156 + $0x128] sm:$0xff]
            %233 = vst [vmem:[%s157 + $0x128] sm:$0xff] %v232
            %v234 = vld [vmem:[%s156 + $0x130] sm:$0xff]
            %235 = vst [vmem:[%s157 + $0x130] sm:$0xff] %v234
            %v236 = vld [vmem:[%s156 + $0x138] sm:$0xff]
            %237 = vst [vmem:[%s157 + $0x138] sm:$0xff] %v236
            %v238 = vld [vmem:[%s156 + $0x140] sm:$0xff]
            %239 = vst [vmem:[%s157 + $0x140] sm:$0xff] %v238
            %v240 = vld [vmem:[%s156 + $0x148] sm:$0xff]
            %241 = vst [vmem:[%s157 + $0x148] sm:$0xff] %v240
            %v242 = vld [vmem:[%s156 + $0x150] sm:$0xff]
            %243 = vst [vmem:[%s157 + $0x150] sm:$0xff] %v242
            %v244 = vld [vmem:[%s156 + $0x158] sm:$0xff]
            %245 = vst [vmem:[%s157 + $0x158] sm:$0xff] %v244
            %v246 = vld [vmem:[%s156 + $0x160] sm:$0xff]
            %247 = vst [vmem:[%s157 + $0x160] sm:$0xff] %v246
            %v248 = vld [vmem:[%s156 + $0x168] sm:$0xff]
            %249 = vst [vmem:[%s157 + $0x168] sm:$0xff] %v248
            %v250 = vld [vmem:[%s156 + $0x170] sm:$0xff]
            %251 = vst [vmem:[%s157 + $0x170] sm:$0xff] %v250
            %v252 = vld [vmem:[%s156 + $0x178] sm:$0xff]
            %253 = vst [vmem:[%s157 + $0x178] sm:$0xff] %v252
            %v254 = vld [vmem:[%s156 + $0x180] sm:$0xff]
            %255 = vst [vmem:[%s157 + $0x180] sm:$0xff] %v254
            %v256 = vld [vmem:[%s156 + $0x188] sm:$0xff]
            %257 = vst [vmem:[%s157 + $0x188] sm:$0xff] %v256
            %v258 = vld [vmem:[%s156 + $0x190] sm:$0xff]
            %259 = vst [vmem:[%s157 + $0x190] sm:$0xff] %v258
            %v260 = vld [vmem:[%s156 + $0x198] sm:$0xff]
            %261 = vst [vmem:[%s157 + $0x198] sm:$0xff] %v260
            %v262 = vld [vmem:[%s156 + $0x1a0] sm:$0xff]
            %263 = vst [vmem:[%s157 + $0x1a0] sm:$0xff] %v262
            %v264 = vld [vmem:[%s156 + $0x1a8] sm:$0xff]
            %265 = vst [vmem:[%s157 + $0x1a8] sm:$0xff] %v264
            %v266 = vld [vmem:[%s156 + $0x1b0] sm:$0xff]
            %267 = vst [vmem:[%s157 + $0x1b0] sm:$0xff] %v266
            %v268 = vld [vmem:[%s156 + $0x1b8] sm:$0xff]
            %269 = vst [vmem:[%s157 + $0x1b8] sm:$0xff] %v268
            %v270 = vld [vmem:[%s156 + $0x1c0] sm:$0xff]
            %271 = vst [vmem:[%s157 + $0x1c0] sm:$0xff] %v270
            %v272 = vld [vmem:[%s156 + $0x1c8] sm:$0xff]
            %273 = vst [vmem:[%s157 + $0x1c8] sm:$0xff] %v272
            %v274 = vld [vmem:[%s156 + $0x1d0] sm:$0xff]
            %275 = vst [vmem:[%s157 + $0x1d0] sm:$0xff] %v274
            %v276 = vld [vmem:[%s156 + $0x1d8] sm:$0xff]
            %277 = vst [vmem:[%s157 + $0x1d8] sm:$0xff] %v276
            %v278 = vld [vmem:[%s156 + $0x1e0] sm:$0xff]
            %279 = vst [vmem:[%s157 + $0x1e0] sm:$0xff] %v278
            %v280 = vld [vmem:[%s156 + $0x1e8] sm:$0xff]
            %281 = vst [vmem:[%s157 + $0x1e8] sm:$0xff] %v280
            %v282 = vld [vmem:[%s156 + $0x1f0] sm:$0xff]
            %283 = vst [vmem:[%s157 + $0x1f0] sm:$0xff] %v282
            %v284 = vld [vmem:[%s156 + $0x1f8] sm:$0xff]
            %285 = vst [vmem:[%s157 + $0x1f8] sm:$0xff] %v284
          $region29: #{reverse.0} parent=23 // loop_footer
            %s155 = sadd.s32 1, %s151
          $region30: #{reverse.0} parent=23 // loop_footer_branch
            %150 = sbr.rel target = $region26
          $region31: #{reverse.0} parent=23 // loop_exit
            _
        $region24: #{reverse.0} parent=8 // pred_fallthru
          _
        // Predicated region
        $region32: #{reverse.0} parent=8 // pred_check
          _
        $region33: #{reverse.0} parent=8 // pred_check_branch
          %287 = sbr.rel target = $region35
        $region34: #{reverse.0} parent=8 // pred_region
          _
        $region35: #{reverse.0} parent=8 // pred_fallthru
          _
      $region9: #{reverse.0} parent=4 // pred_fallthru
        _
      // Predicated region
      $region10: #{reverse.0} parent=4 // pred_check
        _
      $region11: #{reverse.0} parent=4 // pred_check_branch
        %10 = sbr.rel target = $region13
      $region12: #{reverse.0} parent=4 // pred_region
        loop: start=0, step=1, limit=1
        $region14: #{reverse.0} parent=12 // loop_pre_header
          _
        $region15: #{reverse.0} parent=12 // loop_header
          %s13 = sphi 0, %s17
          %p14 = scmp.ge.s32.totalorder %s13, 1
          %s18 = sphi %s0, %s0
          %s19 = sphi [#allocation0], [#allocation0]
        $region16: #{reverse.0} parent=12 // loop_header_branch
          %16 = sbr.rel (%p14) target = $region20
        $region17: #{reverse.0} parent=12 // loop_body
          %v20 = vld [vmem:[%s18] sm:$0xff]
          %21 = vst [vmem:[%s19] sm:$0xff] %v20
          %v22 = vld [vmem:[%s18 + $0x8] sm:$0xff]
          %23 = vst [vmem:[%s19 + $0x8] sm:$0xff] %v22
          %v24 = vld [vmem:[%s18 + $0x10] sm:$0xff]
          %25 = vst [vmem:[%s19 + $0x10] sm:$0xff] %v24
          %v26 = vld [vmem:[%s18 + $0x18] sm:$0xff]
          %27 = vst [vmem:[%s19 + $0x18] sm:$0xff] %v26
          %v28 = vld [vmem:[%s18 + $0x20] sm:$0xff]
          %29 = vst [vmem:[%s19 + $0x20] sm:$0xff] %v28
          %v30 = vld [vmem:[%s18 + $0x28] sm:$0xff]
          %31 = vst [vmem:[%s19 + $0x28] sm:$0xff] %v30
          %v32 = vld [vmem:[%s18 + $0x30] sm:$0xff]
          %33 = vst [vmem:[%s19 + $0x30] sm:$0xff] %v32
          %v34 = vld [vmem:[%s18 + $0x38] sm:$0xff]
          %35 = vst [vmem:[%s19 + $0x38] sm:$0xff] %v34
          %v36 = vld [vmem:[%s18 + $0x40] sm:$0xff]
          %37 = vst [vmem:[%s19 + $0x40] sm:$0xff] %v36
          %v38 = vld [vmem:[%s18 + $0x48] sm:$0xff]
          %39 = vst [vmem:[%s19 + $0x48] sm:$0xff] %v38
          %v40 = vld [vmem:[%s18 + $0x50] sm:$0xff]
          %41 = vst [vmem:[%s19 + $0x50] sm:$0xff] %v40
          %v42 = vld [vmem:[%s18 + $0x58] sm:$0xff]
          %43 = vst [vmem:[%s19 + $0x58] sm:$0xff] %v42
          %v44 = vld [vmem:[%s18 + $0x60] sm:$0xff]
          %45 = vst [vmem:[%s19 + $0x60] sm:$0xff] %v44
          %v46 = vld [vmem:[%s18 + $0x68] sm:$0xff]
          %47 = vst [vmem:[%s19 + $0x68] sm:$0xff] %v46
          %v48 = vld [vmem:[%s18 + $0x70] sm:$0xff]
          %49 = vst [vmem:[%s19 + $0x70] sm:$0xff] %v48
          %v50 = vld [vmem:[%s18 + $0x78] sm:$0xff]
          %51 = vst [vmem:[%s19 + $0x78] sm:$0xff] %v50
          %v52 = vld [vmem:[%s18 + $0x80] sm:$0xff]
          %53 = vst [vmem:[%s19 + $0x80] sm:$0xff] %v52
          %v54 = vld [vmem:[%s18 + $0x88] sm:$0xff]
          %55 = vst [vmem:[%s19 + $0x88] sm:$0xff] %v54
          %v56 = vld [vmem:[%s18 + $0x90] sm:$0xff]
          %57 = vst [vmem:[%s19 + $0x90] sm:$0xff] %v56
          %v58 = vld [vmem:[%s18 + $0x98] sm:$0xff]
          %59 = vst [vmem:[%s19 + $0x98] sm:$0xff] %v58
          %v60 = vld [vmem:[%s18 + $0xa0] sm:$0xff]
          %61 = vst [vmem:[%s19 + $0xa0] sm:$0xff] %v60
          %v62 = vld [vmem:[%s18 + $0xa8] sm:$0xff]
          %63 = vst [vmem:[%s19 + $0xa8] sm:$0xff] %v62
          %v64 = vld [vmem:[%s18 + $0xb0] sm:$0xff]
          %65 = vst [vmem:[%s19 + $0xb0] sm:$0xff] %v64
          %v66 = vld [vmem:[%s18 + $0xb8] sm:$0xff]
          %67 = vst [vmem:[%s19 + $0xb8] sm:$0xff] %v66
          %v68 = vld [vmem:[%s18 + $0xc0] sm:$0xff]
          %69 = vst [vmem:[%s19 + $0xc0] sm:$0xff] %v68
          %v70 = vld [vmem:[%s18 + $0xc8] sm:$0xff]
          %71 = vst [vmem:[%s19 + $0xc8] sm:$0xff] %v70
          %v72 = vld [vmem:[%s18 + $0xd0] sm:$0xff]
          %73 = vst [vmem:[%s19 + $0xd0] sm:$0xff] %v72
          %v74 = vld [vmem:[%s18 + $0xd8] sm:$0xff]
          %75 = vst [vmem:[%s19 + $0xd8] sm:$0xff] %v74
          %v76 = vld [vmem:[%s18 + $0xe0] sm:$0xff]
          %77 = vst [vmem:[%s19 + $0xe0] sm:$0xff] %v76
          %v78 = vld [vmem:[%s18 + $0xe8] sm:$0xff]
          %79 = vst [vmem:[%s19 + $0xe8] sm:$0xff] %v78
          %v80 = vld [vmem:[%s18 + $0xf0] sm:$0xff]
          %81 = vst [vmem:[%s19 + $0xf0] sm:$0xff] %v80
          %v82 = vld [vmem:[%s18 + $0xf8] sm:$0xff]
          %83 = vst [vmem:[%s19 + $0xf8] sm:$0xff] %v82
          %v84 = vld [vmem:[%s18 + $0x100] sm:$0xff]
          %85 = vst [vmem:[%s19 + $0x100] sm:$0xff] %v84
          %v86 = vld [vmem:[%s18 + $0x108] sm:$0xff]
          %87 = vst [vmem:[%s19 + $0x108] sm:$0xff] %v86
          %v88 = vld [vmem:[%s18 + $0x110] sm:$0xff]
          %89 = vst [vmem:[%s19 + $0x110] sm:$0xff] %v88
          %v90 = vld [vmem:[%s18 + $0x118] sm:$0xff]
          %91 = vst [vmem:[%s19 + $0x118] sm:$0xff] %v90
          %v92 = vld [vmem:[%s18 + $0x120] sm:$0xff]
          %93 = vst [vmem:[%s19 + $0x120] sm:$0xff] %v92
          %v94 = vld [vmem:[%s18 + $0x128] sm:$0xff]
          %95 = vst [vmem:[%s19 + $0x128] sm:$0xff] %v94
          %v96 = vld [vmem:[%s18 + $0x130] sm:$0xff]
          %97 = vst [vmem:[%s19 + $0x130] sm:$0xff] %v96
          %v98 = vld [vmem:[%s18 + $0x138] sm:$0xff]
          %99 = vst [vmem:[%s19 + $0x138] sm:$0xff] %v98
          %v100 = vld [vmem:[%s18 + $0x140] sm:$0xff]
          %101 = vst [vmem:[%s19 + $0x140] sm:$0xff] %v100
          %v102 = vld [vmem:[%s18 + $0x148] sm:$0xff]
          %103 = vst [vmem:[%s19 + $0x148] sm:$0xff] %v102
          %v104 = vld [vmem:[%s18 + $0x150] sm:$0xff]
          %105 = vst [vmem:[%s19 + $0x150] sm:$0xff] %v104
          %v106 = vld [vmem:[%s18 + $0x158] sm:$0xff]
          %107 = vst [vmem:[%s19 + $0x158] sm:$0xff] %v106
          %v108 = vld [vmem:[%s18 + $0x160] sm:$0xff]
          %109 = vst [vmem:[%s19 + $0x160] sm:$0xff] %v108
          %v110 = vld [vmem:[%s18 + $0x168] sm:$0xff]
          %111 = vst [vmem:[%s19 + $0x168] sm:$0xff] %v110
          %v112 = vld [vmem:[%s18 + $0x170] sm:$0xff]
          %113 = vst [vmem:[%s19 + $0x170] sm:$0xff] %v112
          %v114 = vld [vmem:[%s18 + $0x178] sm:$0xff]
          %115 = vst [vmem:[%s19 + $0x178] sm:$0xff] %v114
          %v116 = vld [vmem:[%s18 + $0x180] sm:$0xff]
          %117 = vst [vmem:[%s19 + $0x180] sm:$0xff] %v116
          %v118 = vld [vmem:[%s18 + $0x188] sm:$0xff]
          %119 = vst [vmem:[%s19 + $0x188] sm:$0xff] %v118
          %v120 = vld [vmem:[%s18 + $0x190] sm:$0xff]
          %121 = vst [vmem:[%s19 + $0x190] sm:$0xff] %v120
          %v122 = vld [vmem:[%s18 + $0x198] sm:$0xff]
          %123 = vst [vmem:[%s19 + $0x198] sm:$0xff] %v122
          %v124 = vld [vmem:[%s18 + $0x1a0] sm:$0xff]
          %125 = vst [vmem:[%s19 + $0x1a0] sm:$0xff] %v124
          %v126 = vld [vmem:[%s18 + $0x1a8] sm:$0xff]
          %127 = vst [vmem:[%s19 + $0x1a8] sm:$0xff] %v126
          %v128 = vld [vmem:[%s18 + $0x1b0] sm:$0xff]
          %129 = vst [vmem:[%s19 + $0x1b0] sm:$0xff] %v128
          %v130 = vld [vmem:[%s18 + $0x1b8] sm:$0xff]
          %131 = vst [vmem:[%s19 + $0x1b8] sm:$0xff] %v130
          %v132 = vld [vmem:[%s18 + $0x1c0] sm:$0xff]
          %133 = vst [vmem:[%s19 + $0x1c0] sm:$0xff] %v132
          %v134 = vld [vmem:[%s18 + $0x1c8] sm:$0xff]
          %135 = vst [vmem:[%s19 + $0x1c8] sm:$0xff] %v134
          %v136 = vld [vmem:[%s18 + $0x1d0] sm:$0xff]
          %137 = vst [vmem:[%s19 + $0x1d0] sm:$0xff] %v136
          %v138 = vld [vmem:[%s18 + $0x1d8] sm:$0xff]
          %139 = vst [vmem:[%s19 + $0x1d8] sm:$0xff] %v138
          %v140 = vld [vmem:[%s18 + $0x1e0] sm:$0xff]
          %141 = vst [vmem:[%s19 + $0x1e0] sm:$0xff] %v140
          %v142 = vld [vmem:[%s18 + $0x1e8] sm:$0xff]
          %143 = vst [vmem:[%s19 + $0x1e8] sm:$0xff] %v142
          %v144 = vld [vmem:[%s18 + $0x1f0] sm:$0xff]
          %145 = vst [vmem:[%s19 + $0x1f0] sm:$0xff] %v144
          %v146 = vld [vmem:[%s18 + $0x1f8] sm:$0xff]
          %147 = vst [vmem:[%s19 + $0x1f8] sm:$0xff] %v146
        $region18: #{reverse.0} parent=12 // loop_footer
          %s17 = sadd.s32 1, %s13
        $region19: #{reverse.0} parent=12 // loop_footer_branch
          %12 = sbr.rel target = $region15
        $region20: #{reverse.0} parent=12 // loop_exit
          _
      $region13: #{reverse.0} parent=4 // pred_fallthru
        _
    $region5: #{reverse.0} parent=1 // pred_fallthru
      _
    %288 = vnop
    %v289 = vld [vmem:[#allocation0] sm:$0xff]
    %290 = vperm.xlu0 %4, %v289
    %v291 = vpop.permute.xlu0 %290
    %292 = vst [vmem:[#allocation1] sm:$0xff] %v291
    %s293 = scalar_lea.vmem [#allocation1], 8
    %s294 = scalar_lea.vmem [#allocation0], 8
    %v295 = vld [vmem:[%s294] sm:$0xff]
    %296 = vperm.xlu0 %4, %v295
    %v297 = vpop.permute.xlu0 %296
    %298 = vst [vmem:[%s293] sm:$0xff] %v297
    %s299 = scalar_lea.vmem [#allocation1], 16
    %s300 = scalar_lea.vmem [#allocation0], 16
    %v301 = vld [vmem:[%s300] sm:$0xff]
    %302 = vperm.xlu0 %4, %v301
    %v303 = vpop.permute.xlu0 %302
    %304 = vst [vmem:[%s299] sm:$0xff] %v303
    %s305 = scalar_lea.vmem %s299, 8 [#allocation1]
    %s306 = scalar_lea.vmem %s300, 8 [#allocation0]
    %v307 = vld [vmem:[%s306] sm:$0xff]
    %308 = vperm.xlu0 %4, %v307
    %v309 = vpop.permute.xlu0 %308
    %310 = vst [vmem:[%s305] sm:$0xff] %v309
    %s311 = scalar_lea.vmem [#allocation1], 32
    %s312 = scalar_lea.vmem [#allocation0], 32
    %v313 = vld [vmem:[%s312] sm:$0xff]
    %314 = vperm.xlu0 %4, %v313
    %v315 = vpop.permute.xlu0 %314
    %316 = vst [vmem:[%s311] sm:$0xff] %v315
    %s317 = scalar_lea.vmem %s311, 8 [#allocation1]
    %s318 = scalar_lea.vmem %s312, 8 [#allocation0]
    %v319 = vld [vmem:[%s318] sm:$0xff]
    %320 = vperm.xlu0 %4, %v319
    %v321 = vpop.permute.xlu0 %320
    %322 = vst [vmem:[%s317] sm:$0xff] %v321
    %s323 = scalar_lea.vmem [#allocation1], 48
    %s324 = scalar_lea.vmem [#allocation0], 48
    %v325 = vld [vmem:[%s324] sm:$0xff]
    %326 = vperm.xlu0 %4, %v325
    %v327 = vpop.permute.xlu0 %326
    %328 = vst [vmem:[%s323] sm:$0xff] %v327
    %s329 = scalar_lea.vmem %s323, 8 [#allocation1]
    %s330 = scalar_lea.vmem %s324, 8 [#allocation0]
    %v331 = vld [vmem:[%s330] sm:$0xff]
    %332 = vperm.xlu0 %4, %v331
    %v333 = vpop.permute.xlu0 %332
    %334 = vst [vmem:[%s329] sm:$0xff] %v333
    %s335 = scalar_lea.vmem [#allocation1], 64
    %s336 = scalar_lea.vmem [#allocation0], 64
    %v337 = vld [vmem:[%s336] sm:$0xff]
    %338 = vperm.xlu0 %4, %v337
    %v339 = vpop.permute.xlu0 %338
    %340 = vst [vmem:[%s335] sm:$0xff] %v339
    %s341 = scalar_lea.vmem %s335, 8 [#allocation1]
    %s342 = scalar_lea.vmem %s336, 8 [#allocation0]
    %v343 = vld [vmem:[%s342] sm:$0xff]
    %344 = vperm.xlu0 %4, %v343
    %v345 = vpop.permute.xlu0 %344
    %346 = vst [vmem:[%s341] sm:$0xff] %v345
    %s347 = scalar_lea.vmem [#allocation1], 80
    %s348 = scalar_lea.vmem [#allocation0], 80
    %v349 = vld [vmem:[%s348] sm:$0xff]
    %350 = vperm.xlu0 %4, %v349
    %v351 = vpop.permute.xlu0 %350
    %352 = vst [vmem:[%s347] sm:$0xff] %v351
    %s353 = scalar_lea.vmem %s347, 8 [#allocation1]
    %s354 = scalar_lea.vmem %s348, 8 [#allocation0]
    %v355 = vld [vmem:[%s354] sm:$0xff]
    %356 = vperm.xlu0 %4, %v355
    %v357 = vpop.permute.xlu0 %356
    %358 = vst [vmem:[%s353] sm:$0xff] %v357
    %s359 = scalar_lea.vmem [#allocation1], 96
    %s360 = scalar_lea.vmem [#allocation0], 96
    %v361 = vld [vmem:[%s360] sm:$0xff]
    %362 = vperm.xlu0 %4, %v361
    %v363 = vpop.permute.xlu0 %362
    %364 = vst [vmem:[%s359] sm:$0xff] %v363
    %s365 = scalar_lea.vmem %s359, 8 [#allocation1]
    %s366 = scalar_lea.vmem %s360, 8 [#allocation0]
    %v367 = vld [vmem:[%s366] sm:$0xff]
    %368 = vperm.xlu0 %4, %v367
    %v369 = vpop.permute.xlu0 %368
    %370 = vst [vmem:[%s365] sm:$0xff] %v369
    %s371 = scalar_lea.vmem [#allocation1], 112
    %s372 = scalar_lea.vmem [#allocation0], 112
    %v373 = vld [vmem:[%s372] sm:$0xff]
    %374 = vperm.xlu0 %4, %v373
    %v375 = vpop.permute.xlu0 %374
    %376 = vst [vmem:[%s371] sm:$0xff] %v375
    %s377 = scalar_lea.vmem %s371, 8 [#allocation1]
    %s378 = scalar_lea.vmem %s372, 8 [#allocation0]
    %v379 = vld [vmem:[%s378] sm:$0xff]
    %380 = vperm.xlu0 %4, %v379
    %v381 = vpop.permute.xlu0 %380
    %382 = vst [vmem:[%s377] sm:$0xff] %v381
    %s383 = scalar_lea.vmem [#allocation1], 128
    %s384 = scalar_lea.vmem [#allocation0], 128
    %v385 = vld [vmem:[%s384] sm:$0xff]
    %386 = vperm.xlu0 %4, %v385
    %v387 = vpop.permute.xlu0 %386
    %388 = vst [vmem:[%s383] sm:$0xff] %v387
    %s389 = scalar_lea.vmem %s383, 8 [#allocation1]
    %s390 = scalar_lea.vmem %s384, 8 [#allocation0]
    %v391 = vld [vmem:[%s390] sm:$0xff]
    %392 = vperm.xlu0 %4, %v391
    %v393 = vpop.permute.xlu0 %392
    %394 = vst [vmem:[%s389] sm:$0xff] %v393
    %s395 = scalar_lea.vmem [#allocation1], 144
    %s396 = scalar_lea.vmem [#allocation0], 144
    %v397 = vld [vmem:[%s396] sm:$0xff]
    %398 = vperm.xlu0 %4, %v397
    %v399 = vpop.permute.xlu0 %398
    %400 = vst [vmem:[%s395] sm:$0xff] %v399
    %s401 = scalar_lea.vmem %s395, 8 [#allocation1]
    %s402 = scalar_lea.vmem %s396, 8 [#allocation0]
    %v403 = vld [vmem:[%s402] sm:$0xff]
    %404 = vperm.xlu0 %4, %v403
    %v405 = vpop.permute.xlu0 %404
    %406 = vst [vmem:[%s401] sm:$0xff] %v405
    %s407 = scalar_lea.vmem [#allocation1], 160
    %s408 = scalar_lea.vmem [#allocation0], 160
    %v409 = vld [vmem:[%s408] sm:$0xff]
    %410 = vperm.xlu0 %4, %v409
    %v411 = vpop.permute.xlu0 %410
    %412 = vst [vmem:[%s407] sm:$0xff] %v411
    %s413 = scalar_lea.vmem %s407, 8 [#allocation1]
    %s414 = scalar_lea.vmem %s408, 8 [#allocation0]
    %v415 = vld [vmem:[%s414] sm:$0xff]
    %416 = vperm.xlu0 %4, %v415
    %v417 = vpop.permute.xlu0 %416
    %418 = vst [vmem:[%s413] sm:$0xff] %v417
    %s419 = scalar_lea.vmem [#allocation1], 176
    %s420 = scalar_lea.vmem [#allocation0], 176
    %v421 = vld [vmem:[%s420] sm:$0xff]
    %422 = vperm.xlu0 %4, %v421
    %v423 = vpop.permute.xlu0 %422
    %424 = vst [vmem:[%s419] sm:$0xff] %v423
    %s425 = scalar_lea.vmem %s419, 8 [#allocation1]
    %s426 = scalar_lea.vmem %s420, 8 [#allocation0]
    %v427 = vld [vmem:[%s426] sm:$0xff]
    %428 = vperm.xlu0 %4, %v427
    %v429 = vpop.permute.xlu0 %428
    %430 = vst [vmem:[%s425] sm:$0xff] %v429
    %s431 = scalar_lea.vmem [#allocation1], 192
    %s432 = scalar_lea.vmem [#allocation0], 192
    %v433 = vld [vmem:[%s432] sm:$0xff]
    %434 = vperm.xlu0 %4, %v433
    %v435 = vpop.permute.xlu0 %434
    %436 = vst [vmem:[%s431] sm:$0xff] %v435
    %s437 = scalar_lea.vmem %s431, 8 [#allocation1]
    %s438 = scalar_lea.vmem %s432, 8 [#allocation0]
    %v439 = vld [vmem:[%s438] sm:$0xff]
    %440 = vperm.xlu0 %4, %v439
    %v441 = vpop.permute.xlu0 %440
    %442 = vst [vmem:[%s437] sm:$0xff] %v441
    %s443 = scalar_lea.vmem [#allocation1], 208
    %s444 = scalar_lea.vmem [#allocation0], 208
    %v445 = vld [vmem:[%s444] sm:$0xff]
    %446 = vperm.xlu0 %4, %v445
    %v447 = vpop.permute.xlu0 %446
    %448 = vst [vmem:[%s443] sm:$0xff] %v447
    %s449 = scalar_lea.vmem %s443, 8 [#allocation1]
    %s450 = scalar_lea.vmem %s444, 8 [#allocation0]
    %v451 = vld [vmem:[%s450] sm:$0xff]
    %452 = vperm.xlu0 %4, %v451
    %v453 = vpop.permute.xlu0 %452
    %454 = vst [vmem:[%s449] sm:$0xff] %v453
    %s455 = scalar_lea.vmem [#allocation1], 224
    %s456 = scalar_lea.vmem [#allocation0], 224
    %v457 = vld [vmem:[%s456] sm:$0xff]
    %458 = vperm.xlu0 %4, %v457
    %v459 = vpop.permute.xlu0 %458
    %460 = vst [vmem:[%s455] sm:$0xff] %v459
    %s461 = scalar_lea.vmem %s455, 8 [#allocation1]
    %s462 = scalar_lea.vmem %s456, 8 [#allocation0]
    %v463 = vld [vmem:[%s462] sm:$0xff]
    %464 = vperm.xlu0 %4, %v463
    %v465 = vpop.permute.xlu0 %464
    %466 = vst [vmem:[%s461] sm:$0xff] %v465
    %s467 = scalar_lea.vmem [#allocation1], 240
    %s468 = scalar_lea.vmem [#allocation0], 240
    %v469 = vld [vmem:[%s468] sm:$0xff]
    %470 = vperm.xlu0 %4, %v469
    %v471 = vpop.permute.xlu0 %470
    %472 = vst [vmem:[%s467] sm:$0xff] %v471
    %s473 = scalar_lea.vmem %s467, 8 [#allocation1]
    %s474 = scalar_lea.vmem %s468, 8 [#allocation0]
    %v475 = vld [vmem:[%s474] sm:$0xff]
    %476 = vperm.xlu0 %4, %v475
    %v477 = vpop.permute.xlu0 %476
    %478 = vst [vmem:[%s473] sm:$0xff] %v477
    %s479 = scalar_lea.vmem [#allocation1], 256
    %s480 = scalar_lea.vmem [#allocation0], 256
    %v481 = vld [vmem:[%s480] sm:$0xff]
    %482 = vperm.xlu0 %4, %v481
    %v483 = vpop.permute.xlu0 %482
    %484 = vst [vmem:[%s479] sm:$0xff] %v483
    %s485 = scalar_lea.vmem %s479, 8 [#allocation1]
    %s486 = scalar_lea.vmem %s480, 8 [#allocation0]
    %v487 = vld [vmem:[%s486] sm:$0xff]
    %488 = vperm.xlu0 %4, %v487
    %v489 = vpop.permute.xlu0 %488
    %490 = vst [vmem:[%s485] sm:$0xff] %v489
    %s491 = scalar_lea.vmem [#allocation1], 272
    %s492 = scalar_lea.vmem [#allocation0], 272
    %v493 = vld [vmem:[%s492] sm:$0xff]
    %494 = vperm.xlu0 %4, %v493
    %v495 = vpop.permute.xlu0 %494
    %496 = vst [vmem:[%s491] sm:$0xff] %v495
    %s497 = scalar_lea.vmem %s491, 8 [#allocation1]
    %s498 = scalar_lea.vmem %s492, 8 [#allocation0]
    %v499 = vld [vmem:[%s498] sm:$0xff]
    %500 = vperm.xlu0 %4, %v499
    %v501 = vpop.permute.xlu0 %500
    %502 = vst [vmem:[%s497] sm:$0xff] %v501
    %s503 = scalar_lea.vmem [#allocation1], 288
    %s504 = scalar_lea.vmem [#allocation0], 288
    %v505 = vld [vmem:[%s504] sm:$0xff]
    %506 = vperm.xlu0 %4, %v505
    %v507 = vpop.permute.xlu0 %506
    %508 = vst [vmem:[%s503] sm:$0xff] %v507
    %s509 = scalar_lea.vmem %s503, 8 [#allocation1]
    %s510 = scalar_lea.vmem %s504, 8 [#allocation0]
    %v511 = vld [vmem:[%s510] sm:$0xff]
    %512 = vperm.xlu0 %4, %v511
    %v513 = vpop.permute.xlu0 %512
    %514 = vst [vmem:[%s509] sm:$0xff] %v513
    %s515 = scalar_lea.vmem [#allocation1], 304
    %s516 = scalar_lea.vmem [#allocation0], 304
    %v517 = vld [vmem:[%s516] sm:$0xff]
    %518 = vperm.xlu0 %4, %v517
    %v519 = vpop.permute.xlu0 %518
    %520 = vst [vmem:[%s515] sm:$0xff] %v519
    %s521 = scalar_lea.vmem %s515, 8 [#allocation1]
    %s522 = scalar_lea.vmem %s516, 8 [#allocation0]
    %v523 = vld [vmem:[%s522] sm:$0xff]
    %524 = vperm.xlu0 %4, %v523
    %v525 = vpop.permute.xlu0 %524
    %526 = vst [vmem:[%s521] sm:$0xff] %v525
    %s527 = scalar_lea.vmem [#allocation1], 320
    %s528 = scalar_lea.vmem [#allocation0], 320
    %v529 = vld [vmem:[%s528] sm:$0xff]
    %530 = vperm.xlu0 %4, %v529
    %v531 = vpop.permute.xlu0 %530
    %532 = vst [vmem:[%s527] sm:$0xff] %v531
    %s533 = scalar_lea.vmem %s527, 8 [#allocation1]
    %s534 = scalar_lea.vmem %s528, 8 [#allocation0]
    %v535 = vld [vmem:[%s534] sm:$0xff]
    %536 = vperm.xlu0 %4, %v535
    %v537 = vpop.permute.xlu0 %536
    %538 = vst [vmem:[%s533] sm:$0xff] %v537
    %s539 = scalar_lea.vmem [#allocation1], 336
    %s540 = scalar_lea.vmem [#allocation0], 336
    %v541 = vld [vmem:[%s540] sm:$0xff]
    %542 = vperm.xlu0 %4, %v541
    %v543 = vpop.permute.xlu0 %542
    %544 = vst [vmem:[%s539] sm:$0xff] %v543
    %s545 = scalar_lea.vmem %s539, 8 [#allocation1]
    %s546 = scalar_lea.vmem %s540, 8 [#allocation0]
    %v547 = vld [vmem:[%s546] sm:$0xff]
    %548 = vperm.xlu0 %4, %v547
    %v549 = vpop.permute.xlu0 %548
    %550 = vst [vmem:[%s545] sm:$0xff] %v549
    %s551 = scalar_lea.vmem [#allocation1], 352
    %s552 = scalar_lea.vmem [#allocation0], 352
    %v553 = vld [vmem:[%s552] sm:$0xff]
    %554 = vperm.xlu0 %4, %v553
    %v555 = vpop.permute.xlu0 %554
    %556 = vst [vmem:[%s551] sm:$0xff] %v555
    %s557 = scalar_lea.vmem %s551, 8 [#allocation1]
    %s558 = scalar_lea.vmem %s552, 8 [#allocation0]
    %v559 = vld [vmem:[%s558] sm:$0xff]
    %560 = vperm.xlu0 %4, %v559
    %v561 = vpop.permute.xlu0 %560
    %562 = vst [vmem:[%s557] sm:$0xff] %v561
    %s563 = scalar_lea.vmem [#allocation1], 368
    %s564 = scalar_lea.vmem [#allocation0], 368
    %v565 = vld [vmem:[%s564] sm:$0xff]
    %566 = vperm.xlu0 %4, %v565
    %v567 = vpop.permute.xlu0 %566
    %568 = vst [vmem:[%s563] sm:$0xff] %v567
    %s569 = scalar_lea.vmem %s563, 8 [#allocation1]
    %s570 = scalar_lea.vmem %s564, 8 [#allocation0]
    %v571 = vld [vmem:[%s570] sm:$0xff]
    %572 = vperm.xlu0 %4, %v571
    %v573 = vpop.permute.xlu0 %572
    %574 = vst [vmem:[%s569] sm:$0xff] %v573
    %s575 = scalar_lea.vmem [#allocation1], 384
    %s576 = scalar_lea.vmem [#allocation0], 384
    %v577 = vld [vmem:[%s576] sm:$0xff]
    %578 = vperm.xlu0 %4, %v577
    %v579 = vpop.permute.xlu0 %578
    %580 = vst [vmem:[%s575] sm:$0xff] %v579
    %s581 = scalar_lea.vmem %s575, 8 [#allocation1]
    %s582 = scalar_lea.vmem %s576, 8 [#allocation0]
    %v583 = vld [vmem:[%s582] sm:$0xff]
    %584 = vperm.xlu0 %4, %v583
    %v585 = vpop.permute.xlu0 %584
    %586 = vst [vmem:[%s581] sm:$0xff] %v585
    %s587 = scalar_lea.vmem [#allocation1], 400
    %s588 = scalar_lea.vmem [#allocation0], 400
    %v589 = vld [vmem:[%s588] sm:$0xff]
    %590 = vperm.xlu0 %4, %v589
    %v591 = vpop.permute.xlu0 %590
    %592 = vst [vmem:[%s587] sm:$0xff] %v591
    %s593 = scalar_lea.vmem %s587, 8 [#allocation1]
    %s594 = scalar_lea.vmem %s588, 8 [#allocation0]
    %v595 = vld [vmem:[%s594] sm:$0xff]
    %596 = vperm.xlu0 %4, %v595
    %v597 = vpop.permute.xlu0 %596
    %598 = vst [vmem:[%s593] sm:$0xff] %v597
    %s599 = scalar_lea.vmem [#allocation1], 416
    %s600 = scalar_lea.vmem [#allocation0], 416
    %v601 = vld [vmem:[%s600] sm:$0xff]
    %602 = vperm.xlu0 %4, %v601
    %v603 = vpop.permute.xlu0 %602
    %604 = vst [vmem:[%s599] sm:$0xff] %v603
    %s605 = scalar_lea.vmem %s599, 8 [#allocation1]
    %s606 = scalar_lea.vmem %s600, 8 [#allocation0]
    %v607 = vld [vmem:[%s606] sm:$0xff]
    %608 = vperm.xlu0 %4, %v607
    %v609 = vpop.permute.xlu0 %608
    %610 = vst [vmem:[%s605] sm:$0xff] %v609
    %s611 = scalar_lea.vmem [#allocation1], 432
    %s612 = scalar_lea.vmem [#allocation0], 432
    %v613 = vld [vmem:[%s612] sm:$0xff]
    %614 = vperm.xlu0 %4, %v613
    %v615 = vpop.permute.xlu0 %614
    %616 = vst [vmem:[%s611] sm:$0xff] %v615
    %s617 = scalar_lea.vmem %s611, 8 [#allocation1]
    %s618 = scalar_lea.vmem %s612, 8 [#allocation0]
    %v619 = vld [vmem:[%s618] sm:$0xff]
    %620 = vperm.xlu0 %4, %v619
    %v621 = vpop.permute.xlu0 %620
    %622 = vst [vmem:[%s617] sm:$0xff] %v621
    %s623 = scalar_lea.vmem [#allocation1], 448
    %s624 = scalar_lea.vmem [#allocation0], 448
    %v625 = vld [vmem:[%s624] sm:$0xff]
    %626 = vperm.xlu0 %4, %v625
    %v627 = vpop.permute.xlu0 %626
    %628 = vst [vmem:[%s623] sm:$0xff] %v627
    %s629 = scalar_lea.vmem %s623, 8 [#allocation1]
    %s630 = scalar_lea.vmem %s624, 8 [#allocation0]
    %v631 = vld [vmem:[%s630] sm:$0xff]
    %632 = vperm.xlu0 %4, %v631
    %v633 = vpop.permute.xlu0 %632
    %634 = vst [vmem:[%s629] sm:$0xff] %v633
    %s635 = scalar_lea.vmem [#allocation1], 464
    %s636 = scalar_lea.vmem [#allocation0], 464
    %v637 = vld [vmem:[%s636] sm:$0xff]
    %638 = vperm.xlu0 %4, %v637
    %v639 = vpop.permute.xlu0 %638
    %640 = vst [vmem:[%s635] sm:$0xff] %v639
    %s641 = scalar_lea.vmem %s635, 8 [#allocation1]
    %s642 = scalar_lea.vmem %s636, 8 [#allocation0]
    %v643 = vld [vmem:[%s642] sm:$0xff]
    %644 = vperm.xlu0 %4, %v643
    %v645 = vpop.permute.xlu0 %644
    %646 = vst [vmem:[%s641] sm:$0xff] %v645
    %s647 = scalar_lea.vmem [#allocation1], 480
    %s648 = scalar_lea.vmem [#allocation0], 480
    %v649 = vld [vmem:[%s648] sm:$0xff]
    %650 = vperm.xlu0 %4, %v649
    %v651 = vpop.permute.xlu0 %650
    %652 = vst [vmem:[%s647] sm:$0xff] %v651
    %s653 = scalar_lea.vmem %s647, 8 [#allocation1]
    %s654 = scalar_lea.vmem %s648, 8 [#allocation0]
    %v655 = vld [vmem:[%s654] sm:$0xff]
    %656 = vperm.xlu0 %4, %v655
    %v657 = vpop.permute.xlu0 %656
    %658 = vst [vmem:[%s653] sm:$0xff] %v657
    %s659 = scalar_lea.vmem [#allocation1], 496
    %s660 = scalar_lea.vmem [#allocation0], 496
    %v661 = vld [vmem:[%s660] sm:$0xff]
    %662 = vperm.xlu0 %4, %v661
    %v663 = vpop.permute.xlu0 %662
    %664 = vst [vmem:[%s659] sm:$0xff] %v663
    %s665 = scalar_lea.vmem %s659, 8 [#allocation1]
    %s666 = scalar_lea.vmem %s660, 8 [#allocation0]
    %v667 = vld [vmem:[%s666] sm:$0xff]
    %668 = vperm.xlu0 %4, %v667
    %v669 = vpop.permute.xlu0 %668
    %670 = vst [vmem:[%s665] sm:$0xff] %v669
    // Predicated region
    $region36: #{reverse.0} parent=1 // pred_check
      _
    $region37: #{reverse.0} parent=1 // pred_check_branch
      %672 = sbr.rel (0) target = $region39
    $region38: #{reverse.0} parent=1 // pred_region
      // Predicated region
      $region40: #{reverse.0} parent=38 // pred_check
        _
      $region41: #{reverse.0} parent=38 // pred_check_branch
        %674 = sbr.rel (0) target = $region43
      $region42: #{reverse.0} parent=38 // pred_region
        // Predicated region
        $region55: #{reverse.0} parent=42 // pred_check
          _
        $region56: #{reverse.0} parent=42 // pred_check_branch
          %815 = sbr.rel (0) target = $region58
        $region57: #{reverse.0} parent=42 // pred_region
          loop: start=0, step=1, limit=1
          $region59: #{reverse.0} parent=57 // loop_pre_header
            _
          $region60: #{reverse.0} parent=57 // loop_header
            %s817 = sphi 0, %s821
            %p818 = scmp.ge.s32.totalorder %s817, 1
            %s822 = sphi [#allocation1], [#allocation1]
            %s823 = sphi %s1, %s1
          $region61: #{reverse.0} parent=57 // loop_header_branch
            %820 = sbr.rel (%p818) target = $region65
          $region62: #{reverse.0} parent=57 // loop_body
            %v824 = vld [vmem:[%s822] sm:$0xff]
            %825 = vst [vmem:[%s823] sm:$0xff] %v824
            %v826 = vld [vmem:[%s822 + $0x8] sm:$0xff]
            %827 = vst [vmem:[%s823 + $0x8] sm:$0xff] %v826
            %v828 = vld [vmem:[%s822 + $0x10] sm:$0xff]
            %829 = vst [vmem:[%s823 + $0x10] sm:$0xff] %v828
            %v830 = vld [vmem:[%s822 + $0x18] sm:$0xff]
            %831 = vst [vmem:[%s823 + $0x18] sm:$0xff] %v830
            %v832 = vld [vmem:[%s822 + $0x20] sm:$0xff]
            %833 = vst [vmem:[%s823 + $0x20] sm:$0xff] %v832
            %v834 = vld [vmem:[%s822 + $0x28] sm:$0xff]
            %835 = vst [vmem:[%s823 + $0x28] sm:$0xff] %v834
            %v836 = vld [vmem:[%s822 + $0x30] sm:$0xff]
            %837 = vst [vmem:[%s823 + $0x30] sm:$0xff] %v836
            %v838 = vld [vmem:[%s822 + $0x38] sm:$0xff]
            %839 = vst [vmem:[%s823 + $0x38] sm:$0xff] %v838
            %v840 = vld [vmem:[%s822 + $0x40] sm:$0xff]
            %841 = vst [vmem:[%s823 + $0x40] sm:$0xff] %v840
            %v842 = vld [vmem:[%s822 + $0x48] sm:$0xff]
            %843 = vst [vmem:[%s823 + $0x48] sm:$0xff] %v842
            %v844 = vld [vmem:[%s822 + $0x50] sm:$0xff]
            %845 = vst [vmem:[%s823 + $0x50] sm:$0xff] %v844
            %v846 = vld [vmem:[%s822 + $0x58] sm:$0xff]
            %847 = vst [vmem:[%s823 + $0x58] sm:$0xff] %v846
            %v848 = vld [vmem:[%s822 + $0x60] sm:$0xff]
            %849 = vst [vmem:[%s823 + $0x60] sm:$0xff] %v848
            %v850 = vld [vmem:[%s822 + $0x68] sm:$0xff]
            %851 = vst [vmem:[%s823 + $0x68] sm:$0xff] %v850
            %v852 = vld [vmem:[%s822 + $0x70] sm:$0xff]
            %853 = vst [vmem:[%s823 + $0x70] sm:$0xff] %v852
            %v854 = vld [vmem:[%s822 + $0x78] sm:$0xff]
            %855 = vst [vmem:[%s823 + $0x78] sm:$0xff] %v854
            %v856 = vld [vmem:[%s822 + $0x80] sm:$0xff]
            %857 = vst [vmem:[%s823 + $0x80] sm:$0xff] %v856
            %v858 = vld [vmem:[%s822 + $0x88] sm:$0xff]
            %859 = vst [vmem:[%s823 + $0x88] sm:$0xff] %v858
            %v860 = vld [vmem:[%s822 + $0x90] sm:$0xff]
            %861 = vst [vmem:[%s823 + $0x90] sm:$0xff] %v860
            %v862 = vld [vmem:[%s822 + $0x98] sm:$0xff]
            %863 = vst [vmem:[%s823 + $0x98] sm:$0xff] %v862
            %v864 = vld [vmem:[%s822 + $0xa0] sm:$0xff]
            %865 = vst [vmem:[%s823 + $0xa0] sm:$0xff] %v864
            %v866 = vld [vmem:[%s822 + $0xa8] sm:$0xff]
            %867 = vst [vmem:[%s823 + $0xa8] sm:$0xff] %v866
            %v868 = vld [vmem:[%s822 + $0xb0] sm:$0xff]
            %869 = vst [vmem:[%s823 + $0xb0] sm:$0xff] %v868
            %v870 = vld [vmem:[%s822 + $0xb8] sm:$0xff]
            %871 = vst [vmem:[%s823 + $0xb8] sm:$0xff] %v870
            %v872 = vld [vmem:[%s822 + $0xc0] sm:$0xff]
            %873 = vst [vmem:[%s823 + $0xc0] sm:$0xff] %v872
            %v874 = vld [vmem:[%s822 + $0xc8] sm:$0xff]
            %875 = vst [vmem:[%s823 + $0xc8] sm:$0xff] %v874
            %v876 = vld [vmem:[%s822 + $0xd0] sm:$0xff]
            %877 = vst [vmem:[%s823 + $0xd0] sm:$0xff] %v876
            %v878 = vld [vmem:[%s822 + $0xd8] sm:$0xff]
            %879 = vst [vmem:[%s823 + $0xd8] sm:$0xff] %v878
            %v880 = vld [vmem:[%s822 + $0xe0] sm:$0xff]
            %881 = vst [vmem:[%s823 + $0xe0] sm:$0xff] %v880
            %v882 = vld [vmem:[%s822 + $0xe8] sm:$0xff]
            %883 = vst [vmem:[%s823 + $0xe8] sm:$0xff] %v882
            %v884 = vld [vmem:[%s822 + $0xf0] sm:$0xff]
            %885 = vst [vmem:[%s823 + $0xf0] sm:$0xff] %v884
            %v886 = vld [vmem:[%s822 + $0xf8] sm:$0xff]
            %887 = vst [vmem:[%s823 + $0xf8] sm:$0xff] %v886
            %v888 = vld [vmem:[%s822 + $0x100] sm:$0xff]
            %889 = vst [vmem:[%s823 + $0x100] sm:$0xff] %v888
            %v890 = vld [vmem:[%s822 + $0x108] sm:$0xff]
            %891 = vst [vmem:[%s823 + $0x108] sm:$0xff] %v890
            %v892 = vld [vmem:[%s822 + $0x110] sm:$0xff]
            %893 = vst [vmem:[%s823 + $0x110] sm:$0xff] %v892
            %v894 = vld [vmem:[%s822 + $0x118] sm:$0xff]
            %895 = vst [vmem:[%s823 + $0x118] sm:$0xff] %v894
            %v896 = vld [vmem:[%s822 + $0x120] sm:$0xff]
            %897 = vst [vmem:[%s823 + $0x120] sm:$0xff] %v896
            %v898 = vld [vmem:[%s822 + $0x128] sm:$0xff]
            %899 = vst [vmem:[%s823 + $0x128] sm:$0xff] %v898
            %v900 = vld [vmem:[%s822 + $0x130] sm:$0xff]
            %901 = vst [vmem:[%s823 + $0x130] sm:$0xff] %v900
            %v902 = vld [vmem:[%s822 + $0x138] sm:$0xff]
            %903 = vst [vmem:[%s823 + $0x138] sm:$0xff] %v902
            %v904 = vld [vmem:[%s822 + $0x140] sm:$0xff]
            %905 = vst [vmem:[%s823 + $0x140] sm:$0xff] %v904
            %v906 = vld [vmem:[%s822 + $0x148] sm:$0xff]
            %907 = vst [vmem:[%s823 + $0x148] sm:$0xff] %v906
            %v908 = vld [vmem:[%s822 + $0x150] sm:$0xff]
            %909 = vst [vmem:[%s823 + $0x150] sm:$0xff] %v908
            %v910 = vld [vmem:[%s822 + $0x158] sm:$0xff]
            %911 = vst [vmem:[%s823 + $0x158] sm:$0xff] %v910
            %v912 = vld [vmem:[%s822 + $0x160] sm:$0xff]
            %913 = vst [vmem:[%s823 + $0x160] sm:$0xff] %v912
            %v914 = vld [vmem:[%s822 + $0x168] sm:$0xff]
            %915 = vst [vmem:[%s823 + $0x168] sm:$0xff] %v914
            %v916 = vld [vmem:[%s822 + $0x170] sm:$0xff]
            %917 = vst [vmem:[%s823 + $0x170] sm:$0xff] %v916
            %v918 = vld [vmem:[%s822 + $0x178] sm:$0xff]
            %919 = vst [vmem:[%s823 + $0x178] sm:$0xff] %v918
            %v920 = vld [vmem:[%s822 + $0x180] sm:$0xff]
            %921 = vst [vmem:[%s823 + $0x180] sm:$0xff] %v920
            %v922 = vld [vmem:[%s822 + $0x188] sm:$0xff]
            %923 = vst [vmem:[%s823 + $0x188] sm:$0xff] %v922
            %v924 = vld [vmem:[%s822 + $0x190] sm:$0xff]
            %925 = vst [vmem:[%s823 + $0x190] sm:$0xff] %v924
            %v926 = vld [vmem:[%s822 + $0x198] sm:$0xff]
            %927 = vst [vmem:[%s823 + $0x198] sm:$0xff] %v926
            %v928 = vld [vmem:[%s822 + $0x1a0] sm:$0xff]
            %929 = vst [vmem:[%s823 + $0x1a0] sm:$0xff] %v928
            %v930 = vld [vmem:[%s822 + $0x1a8] sm:$0xff]
            %931 = vst [vmem:[%s823 + $0x1a8] sm:$0xff] %v930
            %v932 = vld [vmem:[%s822 + $0x1b0] sm:$0xff]
            %933 = vst [vmem:[%s823 + $0x1b0] sm:$0xff] %v932
            %v934 = vld [vmem:[%s822 + $0x1b8] sm:$0xff]
            %935 = vst [vmem:[%s823 + $0x1b8] sm:$0xff] %v934
            %v936 = vld [vmem:[%s822 + $0x1c0] sm:$0xff]
            %937 = vst [vmem:[%s823 + $0x1c0] sm:$0xff] %v936
            %v938 = vld [vmem:[%s822 + $0x1c8] sm:$0xff]
            %939 = vst [vmem:[%s823 + $0x1c8] sm:$0xff] %v938
            %v940 = vld [vmem:[%s822 + $0x1d0] sm:$0xff]
            %941 = vst [vmem:[%s823 + $0x1d0] sm:$0xff] %v940
            %v942 = vld [vmem:[%s822 + $0x1d8] sm:$0xff]
            %943 = vst [vmem:[%s823 + $0x1d8] sm:$0xff] %v942
            %v944 = vld [vmem:[%s822 + $0x1e0] sm:$0xff]
            %945 = vst [vmem:[%s823 + $0x1e0] sm:$0xff] %v944
            %v946 = vld [vmem:[%s822 + $0x1e8] sm:$0xff]
            %947 = vst [vmem:[%s823 + $0x1e8] sm:$0xff] %v946
            %v948 = vld [vmem:[%s822 + $0x1f0] sm:$0xff]
            %949 = vst [vmem:[%s823 + $0x1f0] sm:$0xff] %v948
            %v950 = vld [vmem:[%s822 + $0x1f8] sm:$0xff]
            %951 = vst [vmem:[%s823 + $0x1f8] sm:$0xff] %v950
          $region63: #{reverse.0} parent=57 // loop_footer
            %s821 = sadd.s32 1, %s817
          $region64: #{reverse.0} parent=57 // loop_footer_branch
            %816 = sbr.rel target = $region60
          $region65: #{reverse.0} parent=57 // loop_exit
            _
        $region58: #{reverse.0} parent=42 // pred_fallthru
          _
        // Predicated region
        $region66: #{reverse.0} parent=42 // pred_check
          _
        $region67: #{reverse.0} parent=42 // pred_check_branch
          %953 = sbr.rel target = $region69
        $region68: #{reverse.0} parent=42 // pred_region
          _
        $region69: #{reverse.0} parent=42 // pred_fallthru
          _
      $region43: #{reverse.0} parent=38 // pred_fallthru
        _
      // Predicated region
      $region44: #{reverse.0} parent=38 // pred_check
        _
      $region45: #{reverse.0} parent=38 // pred_check_branch
        %676 = sbr.rel target = $region47
      $region46: #{reverse.0} parent=38 // pred_region
        loop: start=0, step=1, limit=1
        $region48: #{reverse.0} parent=46 // loop_pre_header
          _
        $region49: #{reverse.0} parent=46 // loop_header
          %s679 = sphi 0, %s683
          %p680 = scmp.ge.s32.totalorder %s679, 1
          %s684 = sphi [#allocation1], [#allocation1]
          %s685 = sphi %s1, %s1
        $region50: #{reverse.0} parent=46 // loop_header_branch
          %682 = sbr.rel (%p680) target = $region54
        $region51: #{reverse.0} parent=46 // loop_body
          %v686 = vld [vmem:[%s684] sm:$0xff]
          %687 = vst [vmem:[%s685] sm:$0xff] %v686
          %v688 = vld [vmem:[%s684 + $0x8] sm:$0xff]
          %689 = vst [vmem:[%s685 + $0x8] sm:$0xff] %v688
          %v690 = vld [vmem:[%s684 + $0x10] sm:$0xff]
          %691 = vst [vmem:[%s685 + $0x10] sm:$0xff] %v690
          %v692 = vld [vmem:[%s684 + $0x18] sm:$0xff]
          %693 = vst [vmem:[%s685 + $0x18] sm:$0xff] %v692
          %v694 = vld [vmem:[%s684 + $0x20] sm:$0xff]
          %695 = vst [vmem:[%s685 + $0x20] sm:$0xff] %v694
          %v696 = vld [vmem:[%s684 + $0x28] sm:$0xff]
          %697 = vst [vmem:[%s685 + $0x28] sm:$0xff] %v696
          %v698 = vld [vmem:[%s684 + $0x30] sm:$0xff]
          %699 = vst [vmem:[%s685 + $0x30] sm:$0xff] %v698
          %v700 = vld [vmem:[%s684 + $0x38] sm:$0xff]
          %701 = vst [vmem:[%s685 + $0x38] sm:$0xff] %v700
          %v702 = vld [vmem:[%s684 + $0x40] sm:$0xff]
          %703 = vst [vmem:[%s685 + $0x40] sm:$0xff] %v702
          %v704 = vld [vmem:[%s684 + $0x48] sm:$0xff]
          %705 = vst [vmem:[%s685 + $0x48] sm:$0xff] %v704
          %v706 = vld [vmem:[%s684 + $0x50] sm:$0xff]
          %707 = vst [vmem:[%s685 + $0x50] sm:$0xff] %v706
          %v708 = vld [vmem:[%s684 + $0x58] sm:$0xff]
          %709 = vst [vmem:[%s685 + $0x58] sm:$0xff] %v708
          %v710 = vld [vmem:[%s684 + $0x60] sm:$0xff]
          %711 = vst [vmem:[%s685 + $0x60] sm:$0xff] %v710
          %v712 = vld [vmem:[%s684 + $0x68] sm:$0xff]
          %713 = vst [vmem:[%s685 + $0x68] sm:$0xff] %v712
          %v714 = vld [vmem:[%s684 + $0x70] sm:$0xff]
          %715 = vst [vmem:[%s685 + $0x70] sm:$0xff] %v714
          %v716 = vld [vmem:[%s684 + $0x78] sm:$0xff]
          %717 = vst [vmem:[%s685 + $0x78] sm:$0xff] %v716
          %v718 = vld [vmem:[%s684 + $0x80] sm:$0xff]
          %719 = vst [vmem:[%s685 + $0x80] sm:$0xff] %v718
          %v720 = vld [vmem:[%s684 + $0x88] sm:$0xff]
          %721 = vst [vmem:[%s685 + $0x88] sm:$0xff] %v720
          %v722 = vld [vmem:[%s684 + $0x90] sm:$0xff]
          %723 = vst [vmem:[%s685 + $0x90] sm:$0xff] %v722
          %v724 = vld [vmem:[%s684 + $0x98] sm:$0xff]
          %725 = vst [vmem:[%s685 + $0x98] sm:$0xff] %v724
          %v726 = vld [vmem:[%s684 + $0xa0] sm:$0xff]
          %727 = vst [vmem:[%s685 + $0xa0] sm:$0xff] %v726
          %v728 = vld [vmem:[%s684 + $0xa8] sm:$0xff]
          %729 = vst [vmem:[%s685 + $0xa8] sm:$0xff] %v728
          %v730 = vld [vmem:[%s684 + $0xb0] sm:$0xff]
          %731 = vst [vmem:[%s685 + $0xb0] sm:$0xff] %v730
          %v732 = vld [vmem:[%s684 + $0xb8] sm:$0xff]
          %733 = vst [vmem:[%s685 + $0xb8] sm:$0xff] %v732
          %v734 = vld [vmem:[%s684 + $0xc0] sm:$0xff]
          %735 = vst [vmem:[%s685 + $0xc0] sm:$0xff] %v734
          %v736 = vld [vmem:[%s684 + $0xc8] sm:$0xff]
          %737 = vst [vmem:[%s685 + $0xc8] sm:$0xff] %v736
          %v738 = vld [vmem:[%s684 + $0xd0] sm:$0xff]
          %739 = vst [vmem:[%s685 + $0xd0] sm:$0xff] %v738
          %v740 = vld [vmem:[%s684 + $0xd8] sm:$0xff]
          %741 = vst [vmem:[%s685 + $0xd8] sm:$0xff] %v740
          %v742 = vld [vmem:[%s684 + $0xe0] sm:$0xff]
          %743 = vst [vmem:[%s685 + $0xe0] sm:$0xff] %v742
          %v744 = vld [vmem:[%s684 + $0xe8] sm:$0xff]
          %745 = vst [vmem:[%s685 + $0xe8] sm:$0xff] %v744
          %v746 = vld [vmem:[%s684 + $0xf0] sm:$0xff]
          %747 = vst [vmem:[%s685 + $0xf0] sm:$0xff] %v746
          %v748 = vld [vmem:[%s684 + $0xf8] sm:$0xff]
          %749 = vst [vmem:[%s685 + $0xf8] sm:$0xff] %v748
          %v750 = vld [vmem:[%s684 + $0x100] sm:$0xff]
          %751 = vst [vmem:[%s685 + $0x100] sm:$0xff] %v750
          %v752 = vld [vmem:[%s684 + $0x108] sm:$0xff]
          %753 = vst [vmem:[%s685 + $0x108] sm:$0xff] %v752
          %v754 = vld [vmem:[%s684 + $0x110] sm:$0xff]
          %755 = vst [vmem:[%s685 + $0x110] sm:$0xff] %v754
          %v756 = vld [vmem:[%s684 + $0x118] sm:$0xff]
          %757 = vst [vmem:[%s685 + $0x118] sm:$0xff] %v756
          %v758 = vld [vmem:[%s684 + $0x120] sm:$0xff]
          %759 = vst [vmem:[%s685 + $0x120] sm:$0xff] %v758
          %v760 = vld [vmem:[%s684 + $0x128] sm:$0xff]
          %761 = vst [vmem:[%s685 + $0x128] sm:$0xff] %v760
          %v762 = vld [vmem:[%s684 + $0x130] sm:$0xff]
          %763 = vst [vmem:[%s685 + $0x130] sm:$0xff] %v762
          %v764 = vld [vmem:[%s684 + $0x138] sm:$0xff]
          %765 = vst [vmem:[%s685 + $0x138] sm:$0xff] %v764
          %v766 = vld [vmem:[%s684 + $0x140] sm:$0xff]
          %767 = vst [vmem:[%s685 + $0x140] sm:$0xff] %v766
          %v768 = vld [vmem:[%s684 + $0x148] sm:$0xff]
          %769 = vst [vmem:[%s685 + $0x148] sm:$0xff] %v768
          %v770 = vld [vmem:[%s684 + $0x150] sm:$0xff]
          %771 = vst [vmem:[%s685 + $0x150] sm:$0xff] %v770
          %v772 = vld [vmem:[%s684 + $0x158] sm:$0xff]
          %773 = vst [vmem:[%s685 + $0x158] sm:$0xff] %v772
          %v774 = vld [vmem:[%s684 + $0x160] sm:$0xff]
          %775 = vst [vmem:[%s685 + $0x160] sm:$0xff] %v774
          %v776 = vld [vmem:[%s684 + $0x168] sm:$0xff]
          %777 = vst [vmem:[%s685 + $0x168] sm:$0xff] %v776
          %v778 = vld [vmem:[%s684 + $0x170] sm:$0xff]
          %779 = vst [vmem:[%s685 + $0x170] sm:$0xff] %v778
          %v780 = vld [vmem:[%s684 + $0x178] sm:$0xff]
          %781 = vst [vmem:[%s685 + $0x178] sm:$0xff] %v780
          %v782 = vld [vmem:[%s684 + $0x180] sm:$0xff]
          %783 = vst [vmem:[%s685 + $0x180] sm:$0xff] %v782
          %v784 = vld [vmem:[%s684 + $0x188] sm:$0xff]
          %785 = vst [vmem:[%s685 + $0x188] sm:$0xff] %v784
          %v786 = vld [vmem:[%s684 + $0x190] sm:$0xff]
          %787 = vst [vmem:[%s685 + $0x190] sm:$0xff] %v786
          %v788 = vld [vmem:[%s684 + $0x198] sm:$0xff]
          %789 = vst [vmem:[%s685 + $0x198] sm:$0xff] %v788
          %v790 = vld [vmem:[%s684 + $0x1a0] sm:$0xff]
          %791 = vst [vmem:[%s685 + $0x1a0] sm:$0xff] %v790
          %v792 = vld [vmem:[%s684 + $0x1a8] sm:$0xff]
          %793 = vst [vmem:[%s685 + $0x1a8] sm:$0xff] %v792
          %v794 = vld [vmem:[%s684 + $0x1b0] sm:$0xff]
          %795 = vst [vmem:[%s685 + $0x1b0] sm:$0xff] %v794
          %v796 = vld [vmem:[%s684 + $0x1b8] sm:$0xff]
          %797 = vst [vmem:[%s685 + $0x1b8] sm:$0xff] %v796
          %v798 = vld [vmem:[%s684 + $0x1c0] sm:$0xff]
          %799 = vst [vmem:[%s685 + $0x1c0] sm:$0xff] %v798
          %v800 = vld [vmem:[%s684 + $0x1c8] sm:$0xff]
          %801 = vst [vmem:[%s685 + $0x1c8] sm:$0xff] %v800
          %v802 = vld [vmem:[%s684 + $0x1d0] sm:$0xff]
          %803 = vst [vmem:[%s685 + $0x1d0] sm:$0xff] %v802
          %v804 = vld [vmem:[%s684 + $0x1d8] sm:$0xff]
          %805 = vst [vmem:[%s685 + $0x1d8] sm:$0xff] %v804
          %v806 = vld [vmem:[%s684 + $0x1e0] sm:$0xff]
          %807 = vst [vmem:[%s685 + $0x1e0] sm:$0xff] %v806
          %v808 = vld [vmem:[%s684 + $0x1e8] sm:$0xff]
          %809 = vst [vmem:[%s685 + $0x1e8] sm:$0xff] %v808
          %v810 = vld [vmem:[%s684 + $0x1f0] sm:$0xff]
          %811 = vst [vmem:[%s685 + $0x1f0] sm:$0xff] %v810
          %v812 = vld [vmem:[%s684 + $0x1f8] sm:$0xff]
          %813 = vst [vmem:[%s685 + $0x1f8] sm:$0xff] %v812
        $region52: #{reverse.0} parent=46 // loop_footer
          %s683 = sadd.s32 1, %s679
        $region53: #{reverse.0} parent=46 // loop_footer_branch
          %678 = sbr.rel target = $region49
        $region54: #{reverse.0} parent=46 // loop_exit
          _
      $region47: #{reverse.0} parent=38 // pred_fallthru
        _
    $region39: #{reverse.0} parent=1 // pred_fallthru
      _
    %954 = vnop

// kernel: _lambda_.1
$region0: #{_lambda_.1}
  #allocation0 [shape = 'u32[]', space=smem, size = 0x4, offset = 0x4, fixed_abs, tag = 'smem constant byte address 0x4 - core index']
  #allocation1 [shape = 'u32[144,128]{1,0:T(1,128)}', space=vmem, size = 0x12000, scoped, tag = 'internal scratch']
  %s0 = inlined_call_operand.vmem [shape: f32[24,64,16], index: 0, kind: input, shape index: {}]
  %s1 = inlined_call_operand.vmem [shape: bf16[24,16,16], index: 1, kind: input, shape index: {}]
  %s2 = inlined_call_operand.vmem [shape: bf16[24,16,16], index: 2, kind: input, shape index: {}]
  %s3 = inlined_call_operand.vmem [shape: bf16[32,64], index: 3, kind: input, shape index: {}]
  %s4 = inlined_call_operand.vmem [shape: bf16[64,32], index: 4, kind: input, shape index: {}]
  %s5 = inlined_call_operand.vmem [shape: f32[24,64,16], index: 5, kind: output, shape index: {}]
  %s6 = sld [smem:[#allocation0]]
  $region53: #{_lambda_.1} parent=0
    _
  %s8 = ssub.s32 1, %s6
  %s9 = scalar_select 0, %s8, %s6
  loop: start=0, step=1, limit=5
  $region2: #{_lambda_.1} parent=0 // loop_pre_header
    _
  $region3: #{_lambda_.1} parent=0 // loop_header
    %s11 = sphi 0, %s15
    %p12 = scmp.ge.s32.totalorder %s11, 5
    %s21 = sphi 0, %s23
    %s24 = sphi 0, %s21
    %s25 = sphi 0, %s24
    %s41 = sphi 0, %s25
    %s47 = sphi 0, %s49
    %s50 = sphi 0, %s47
    %s51 = sphi 0, %s50
    %s67 = sphi 0, %s51
    %s73 = sphi 0, %s75
    %s76 = sphi 0, %s73
    %s77 = sphi 0, %s76
    %s93 = sphi 0, %s77
    %s97 = sphi 0, %s97
    %s99 = sphi 0, %s97
    %s100 = sphi 0, %s99
    %s114 = sphi 0, %s100
    %s118 = sphi 0, %s118
    %s120 = sphi 0, %s118
    %s121 = sphi 0, %s120
    %s135 = sphi 0, %s121
    %s141 = sphi 0, %s143
    %s144 = sphi 0, %s141
    %s145 = sphi 0, %s144
    %s161 = sphi 0, %s145
  $region4: #{_lambda_.1} parent=0 // loop_header_branch
    %14 = sbr.rel (%p12) target = $region8
  $region5: #{_lambda_.1} parent=0 // loop_body
    %s16 = ssub.s32 %s11, 1
    %s17 = ssub.s32 %s11, 2
    %s18 = sadd.s32 %s11, 1
    %s19 = ssub.s32 %s11, %s18
    %p20 = scmp.eq.s32.totalorder %s19, 0
    %s22 = sadd.s32 %s21, 1
    %s23 = scalar_select %p20, %s21, %s22
    %p26 = pneg %p20
    %p27 = scmp.eq.s32.totalorder %s11, 2
    %p28 = por %p26, %p27
    %p29 = scmp.ne.s32.totalorder %s21, %s24
    %p30 = scmp.eq.s32.totalorder %s11, 0
    %p31 = por %p29, %p30
    %p32 = scmp.ne.s32.totalorder %s21, %s24
    %p33 = scmp.eq.s32.totalorder %s16, 2
    %p34 = por %p32, %p33
    %p35 = scmp.ne.s32.totalorder %s24, %s25
    %p36 = scmp.eq.s32.totalorder %s16, 0
    %p37 = por %p35, %p36
    %p38 = scmp.ne.s32.totalorder %s24, %s25
    %p39 = scmp.eq.s32.totalorder %s17, 2
    %p40 = por %p38, %p39
    %p42 = scmp.ne.s32.totalorder %s25, %s41
    %p43 = scmp.eq.s32.totalorder %s17, 0
    %p44 = por %p42, %p43
    %s45 = ssub.s32 %s11, %s18
    %p46 = scmp.eq.s32.totalorder %s45, 0
    %s48 = sadd.s32 %s47, 1
    %s49 = scalar_select %p46, %s47, %s48
    %p52 = pneg %p46
    %p53 = scmp.eq.s32.totalorder %s11, 2
    %p54 = por %p52, %p53
    %p55 = scmp.ne.s32.totalorder %s47, %s50
    %p56 = scmp.eq.s32.totalorder %s11, 0
    %p57 = por %p55, %p56
    %p58 = scmp.ne.s32.totalorder %s47, %s50
    %p59 = scmp.eq.s32.totalorder %s16, 2
    %p60 = por %p58, %p59
    %p61 = scmp.ne.s32.totalorder %s50, %s51
    %p62 = scmp.eq.s32.totalorder %s16, 0
    %p63 = por %p61, %p62
    %p64 = scmp.ne.s32.totalorder %s50, %s51
    %p65 = scmp.eq.s32.totalorder %s17, 2
    %p66 = por %p64, %p65
    %p68 = scmp.ne.s32.totalorder %s51, %s67
    %p69 = scmp.eq.s32.totalorder %s17, 0
    %p70 = por %p68, %p69
    %s71 = ssub.s32 %s11, %s18
    %p72 = scmp.eq.s32.totalorder %s71, 0
    %s74 = sadd.s32 %s73, 1
    %s75 = scalar_select %p72, %s73, %s74
    %p78 = pneg %p72
    %p79 = scmp.eq.s32.totalorder %s11, 2
    %p80 = por %p78, %p79
    %p81 = scmp.ne.s32.totalorder %s73, %s76
    %p82 = scmp.eq.s32.totalorder %s11, 0
    %p83 = por %p81, %p82
    %p84 = scmp.ne.s32.totalorder %s73, %s76
    %p85 = scmp.eq.s32.totalorder %s16, 2
    %p86 = por %p84, %p85
    %p87 = scmp.ne.s32.totalorder %s76, %s77
    %p88 = scmp.eq.s32.totalorder %s16, 0
    %p89 = por %p87, %p88
    %p90 = scmp.ne.s32.totalorder %s76, %s77
    %p91 = scmp.eq.s32.totalorder %s17, 2
    %p92 = por %p90, %p91
    %p94 = scmp.ne.s32.totalorder %s77, %s93
    %p95 = scmp.eq.s32.totalorder %s17, 0
    %p96 = por %p94, %p95
    %s98 = sadd.s32 %s97, 1
    %p101 = scmp.eq.s32.totalorder %s11, 2
    %p102 = scmp.ne.s32.totalorder %s97, %s99
    %p103 = scmp.eq.s32.totalorder %s11, 0
    %p104 = por %p102, %p103
    %p105 = scmp.ne.s32.totalorder %s97, %s99
    %p106 = scmp.eq.s32.totalorder %s16, 2
    %p107 = por %p105, %p106
    %p108 = scmp.ne.s32.totalorder %s99, %s100
    %p109 = scmp.eq.s32.totalorder %s16, 0
    %p110 = por %p108, %p109
    %p111 = scmp.ne.s32.totalorder %s99, %s100
    %p112 = scmp.eq.s32.totalorder %s17, 2
    %p113 = por %p111, %p112
    %p115 = scmp.ne.s32.totalorder %s100, %s114
    %p116 = scmp.eq.s32.totalorder %s17, 0
    %p117 = por %p115, %p116
    %s119 = sadd.s32 %s118, 1
    %p122 = scmp.eq.s32.totalorder %s11, 2
    %p123 = scmp.ne.s32.totalorder %s118, %s120
    %p124 = scmp.eq.s32.totalorder %s11, 0
    %p125 = por %p123, %p124
    %p126 = scmp.ne.s32.totalorder %s118, %s120
    %p127 = scmp.eq.s32.totalorder %s16, 2
    %p128 = por %p126, %p127
    %p129 = scmp.ne.s32.totalorder %s120, %s121
    %p130 = scmp.eq.s32.totalorder %s16, 0
    %p131 = por %p129, %p130
    %p132 = scmp.ne.s32.totalorder %s120, %s121
    %p133 = scmp.eq.s32.totalorder %s17, 2
    %p134 = por %p132, %p133
    %p136 = scmp.ne.s32.totalorder %s121, %s135
    %p137 = scmp.eq.s32.totalorder %s17, 0
    %p138 = por %p136, %p137
    %s139 = ssub.s32 %s11, %s18
    %p140 = scmp.eq.s32.totalorder %s139, 0
    %s142 = sadd.s32 %s141, 1
    %s143 = scalar_select %p140, %s141, %s142
    %p146 = pneg %p140
    %p147 = scmp.eq.s32.totalorder %s11, 2
    %p148 = por %p146, %p147
    %p149 = scmp.ne.s32.totalorder %s141, %s144
    %p150 = scmp.eq.s32.totalorder %s11, 0
    %p151 = por %p149, %p150
    %p152 = scmp.ne.s32.totalorder %s141, %s144
    %p153 = scmp.eq.s32.totalorder %s16, 2
    %p154 = por %p152, %p153
    %p155 = scmp.ne.s32.totalorder %s144, %s145
    %p156 = scmp.eq.s32.totalorder %s16, 0
    %p157 = por %p155, %p156
    %p158 = scmp.ne.s32.totalorder %s144, %s145
    %p159 = scmp.eq.s32.totalorder %s17, 2
    %p160 = por %p158, %p159
    %p162 = scmp.ne.s32.totalorder %s145, %s161
    %p163 = scmp.eq.s32.totalorder %s17, 0
    %p164 = por %p162, %p163
    %p165 = scmp.le.s32.totalorder 1, %s11
    %p166 = scmp.lt.s32.totalorder %s11, 4
    %p167 = pnand %p165, %p166
    %p168 = pneg %p167
    // Predicated region
    $region9: #{_lambda_.1} parent=5 // pred_check
      _
    $region10: #{_lambda_.1} parent=5 // pred_check_branch
      %170 = sbr.rel (%p167) target = $region12
    $region11: #{_lambda_.1} parent=5 // pred_region
      %s171 = ssub.s32 %s11, 1
      // Predicated region
      $region13: #{_lambda_.1} parent=11 // pred_check
        %p172 = pneg %p110
      $region14: #{_lambda_.1} parent=11 // pred_check_branch
        %174 = sbr.rel (%p172) target = $region16
      $region15: #{_lambda_.1} parent=11 // pred_region
        _
      $region16: #{_lambda_.1} parent=11 // pred_fallthru
        _
      // Predicated region
      $region17: #{_lambda_.1} parent=11 // pred_check
        %p175 = pneg %p131
      $region18: #{_lambda_.1} parent=11 // pred_check_branch
        %177 = sbr.rel (%p175) target = $region20
      $region19: #{_lambda_.1} parent=11 // pred_region
        _
      $region20: #{_lambda_.1} parent=11 // pred_fallthru
        _
    $region12: #{_lambda_.1} parent=5 // pred_fallthru
      _
    %p178 = scmp.lt.s32.totalorder %s11, 3
    // Predicated region
    $region21: #{_lambda_.1} parent=5 // pred_check
      %p179 = pneg %p178
    $region22: #{_lambda_.1} parent=5 // pred_check_branch
      %181 = sbr.rel (%p179) target = $region24
    $region23: #{_lambda_.1} parent=5 // pred_region
      // Predicated region
      $region25: #{_lambda_.1} parent=23 // pred_check
        %p182 = pneg %p31
      $region26: #{_lambda_.1} parent=23 // pred_check_branch
        %184 = sbr.rel (%p182) target = $region28
      $region27: #{_lambda_.1} parent=23 // pred_region
        %s185 = smul.u32 8, %s11
        %p186 = scmp.lt.s32.totalorder %s185, 23
        %s187 = scalar_select %p186, %s185, 23
        %s188 = smul.addr %s187, 8
        %s189 = smul.addr %s188, 8
        %s190 = scalar_lea.vmem %s0, %s189
        %s191 = smul.u32 8, %s11
      $region28: #{_lambda_.1} parent=23 // pred_fallthru
        _
      // Predicated region
      $region29: #{_lambda_.1} parent=23 // pred_check
        %p192 = pneg %p57
      $region30: #{_lambda_.1} parent=23 // pred_check_branch
        %194 = sbr.rel (%p192) target = $region32
      $region31: #{_lambda_.1} parent=23 // pred_region
        %s195 = smul.u32 8, %s11
        %p196 = scmp.lt.s32.totalorder %s195, 23
        %s197 = scalar_select %p196, %s195, 23
        %s198 = smul.addr %s197, 2
        %s199 = smul.addr %s198, 4
        %s200 = scalar_lea.vmem %s1, %s199
        %s201 = smul.u32 8, %s11
      $region32: #{_lambda_.1} parent=23 // pred_fallthru
        _
      // Predicated region
      $region33: #{_lambda_.1} parent=23 // pred_check
        %p202 = pneg %p83
      $region34: #{_lambda_.1} parent=23 // pred_check_branch
        %204 = sbr.rel (%p202) target = $region36
      $region35: #{_lambda_.1} parent=23 // pred_region
        %s205 = smul.u32 8, %s11
        %p206 = scmp.lt.s32.totalorder %s205, 23
        %s207 = scalar_select %p206, %s205, 23
        %s208 = smul.addr %s207, 2
        %s209 = smul.addr %s208, 4
        %s210 = scalar_lea.vmem %s2, %s209
        %s211 = smul.u32 8, %s11
      $region36: #{_lambda_.1} parent=23 // pred_fallthru
        _
    $region24: #{_lambda_.1} parent=5 // pred_fallthru
      _
    %p212 = scmp.le.s32.totalorder 1, %s11
    %p213 = scmp.lt.s32.totalorder %s11, 4
    %p214 = pnand %p212, %p213
    %p215 = pneg %p214
    // Predicated region
    $region37: #{_lambda_.1} parent=5 // pred_check
      _
    $region38: #{_lambda_.1} parent=5 // pred_check_branch
      %217 = sbr.rel (%p214) target = $region40
    $region39: #{_lambda_.1} parent=5 // pred_region
      %s218 = ssub.s32 %s11, 1
      %s219 = smul.u32 8, %s16
      %p220 = scmp.lt.s32.totalorder %s219, 23
      %s221 = scalar_select %p220, %s219, 23
      %s222 = smul.addr %s221, 8
      %s223 = smul.addr %s222, 8
      %s224 = scalar_lea.vmem %s0, %s223
      %p225 = pneg %p37
      %p226 = pneg %p34
      %s227 = smul.u32 8, %s16
      %p228 = scmp.lt.s32.totalorder %s227, 23
      %s229 = scalar_select %p228, %s227, 23
      %s230 = smul.addr %s229, 2
      %s231 = smul.addr %s230, 4
      %s232 = scalar_lea.vmem %s1, %s231
      %p233 = pneg %p63
      %p234 = pneg %p60
      %s235 = smul.u32 8, %s16
      %p236 = scmp.lt.s32.totalorder %s235, 23
      %s237 = scalar_select %p236, %s235, 23
      %s238 = smul.addr %s237, 2
      %s239 = smul.addr %s238, 4
      %s240 = scalar_lea.vmem %s2, %s239
      %p241 = pneg %p89
      %p242 = pneg %p86
      %p243 = pneg %p110
      %p244 = pneg %p107
      %p245 = pneg %p131
      %p246 = pneg %p128
      %p247 = pneg %p157
      %p248 = pneg %p154
      %s249 = smul.u32 8, %s16
      %p250 = scmp.lt.s32.totalorder %s249, 23
      %s251 = scalar_select %p250, %s249, 23
      %s252 = smul.addr %s251, 8
      %s253 = smul.addr %s252, 8
      %s254 = scalar_lea.vmem %s5, %s253
      %s255 = smul.u32 8, %s16
      %p256 = scmp.lt.s32.totalorder %s255, 23
      %s257 = scalar_select %p256, %s255, 23
      %s258 = smul.addr %s257, 8
      %s259 = smul.addr %s258, 8
      %s260 = scalar_lea.vmem %s0, %s259
      %s261 = smul.u32 8, %s16
      %s262 = smul.u32 8, %s16
      %p263 = scmp.lt.s32.totalorder %s262, 23
      %s264 = scalar_select %p263, %s262, 23
      %s265 = smul.addr %s264, 2
      %s266 = smul.addr %s265, 4
      %s267 = scalar_lea.vmem %s1, %s266
      %s268 = smul.u32 8, %s16
      %s269 = smul.u32 8, %s16
      %p270 = scmp.lt.s32.totalorder %s269, 23
      %s271 = scalar_select %p270, %s269, 23
      %s272 = smul.addr %s271, 2
      %s273 = smul.addr %s272, 4
      %s274 = scalar_lea.vmem %s2, %s273
      %s275 = smul.u32 8, %s16
      %s276 = smul.u32 8, %s16
      %p277 = scmp.lt.s32.totalorder %s276, 23
      %s278 = scalar_select %p277, %s276, 23
      %s279 = smul.addr %s278, 8
      %s280 = smul.addr %s279, 8
      %s281 = scalar_lea.vmem %s5, %s280
      %s282 = smul.u32 8, %s16
      %v284 = vld [vmem:[%s260] sm:$0xff]
      %v285 = vld [vmem:[%s260 + $0x8] sm:$0xff]
      %v286 = vld [vmem:[%s260 + $0x10] sm:$0xff]
      %v287 = vld [vmem:[%s260 + $0x18] sm:$0xff]
      %v288 = vld [vmem:[%s260 + $0x20] sm:$0xff]
      %v289 = vld [vmem:[%s260 + $0x28] sm:$0xff]
      %v290 = vld [vmem:[%s260 + $0x30] sm:$0xff]
      %v291 = vld [vmem:[%s260 + $0x38] sm:$0xff]
      %v292 = vld [vmem:[%s260 + $0x40] sm:$0xff]
      %v293 = vld [vmem:[%s260 + $0x48] sm:$0xff]
      %v294 = vld [vmem:[%s260 + $0x50] sm:$0xff]
      %v295 = vld [vmem:[%s260 + $0x58] sm:$0xff]
      %v296 = vld [vmem:[%s260 + $0x60] sm:$0xff]
      %v297 = vld [vmem:[%s260 + $0x68] sm:$0xff]
      %v298 = vld [vmem:[%s260 + $0x70] sm:$0xff]
      %v299 = vld [vmem:[%s260 + $0x78] sm:$0xff]
      %v300 = vld [vmem:[%s260 + $0x80] sm:$0xff]
      %v301 = vld [vmem:[%s260 + $0x88] sm:$0xff]
      %v302 = vld [vmem:[%s260 + $0x90] sm:$0xff]
      %v303 = vld [vmem:[%s260 + $0x98] sm:$0xff]
      %v304 = vld [vmem:[%s260 + $0xa0] sm:$0xff]
      %v305 = vld [vmem:[%s260 + $0xa8] sm:$0xff]
      %v306 = vld [vmem:[%s260 + $0xb0] sm:$0xff]
      %v307 = vld [vmem:[%s260 + $0xb8] sm:$0xff]
      %v308 = vld [vmem:[%s260 + $0xc0] sm:$0xff]
      %v309 = vld [vmem:[%s260 + $0xc8] sm:$0xff]
      %v310 = vld [vmem:[%s260 + $0xd0] sm:$0xff]
      %v311 = vld [vmem:[%s260 + $0xd8] sm:$0xff]
      %v312 = vld [vmem:[%s260 + $0xe0] sm:$0xff]
      %v313 = vld [vmem:[%s260 + $0xe8] sm:$0xff]
      %v314 = vld [vmem:[%s260 + $0xf0] sm:$0xff]
      %v315 = vld [vmem:[%s260 + $0xf8] sm:$0xff]
      %v316 = vld [vmem:[%s260 + $0x100] sm:$0xff]
      %v317 = vld [vmem:[%s260 + $0x108] sm:$0xff]
      %v318 = vld [vmem:[%s260 + $0x110] sm:$0xff]
      %v319 = vld [vmem:[%s260 + $0x118] sm:$0xff]
      %v320 = vld [vmem:[%s260 + $0x120] sm:$0xff]
      %v321 = vld [vmem:[%s260 + $0x128] sm:$0xff]
      %v322 = vld [vmem:[%s260 + $0x130] sm:$0xff]
      %v323 = vld [vmem:[%s260 + $0x138] sm:$0xff]
      %v324 = vld [vmem:[%s260 + $0x140] sm:$0xff]
      %v325 = vld [vmem:[%s260 + $0x148] sm:$0xff]
      %v326 = vld [vmem:[%s260 + $0x150] sm:$0xff]
      %v327 = vld [vmem:[%s260 + $0x158] sm:$0xff]
      %v328 = vld [vmem:[%s260 + $0x160] sm:$0xff]
      %v329 = vld [vmem:[%s260 + $0x168] sm:$0xff]
      %v330 = vld [vmem:[%s260 + $0x170] sm:$0xff]
      %v331 = vld [vmem:[%s260 + $0x178] sm:$0xff]
      %v332 = vld [vmem:[%s260 + $0x180] sm:$0xff]
      %v333 = vld [vmem:[%s260 + $0x188] sm:$0xff]
      %v334 = vld [vmem:[%s260 + $0x190] sm:$0xff]
      %v335 = vld [vmem:[%s260 + $0x198] sm:$0xff]
      %v336 = vld [vmem:[%s260 + $0x1a0] sm:$0xff]
      %v337 = vld [vmem:[%s260 + $0x1a8] sm:$0xff]
      %v338 = vld [vmem:[%s260 + $0x1b0] sm:$0xff]
      %v339 = vld [vmem:[%s260 + $0x1b8] sm:$0xff]
      %v340 = vld [vmem:[%s260 + $0x1c0] sm:$0xff]
      %v341 = vld [vmem:[%s260 + $0x1c8] sm:$0xff]
      %v342 = vld [vmem:[%s260 + $0x1d0] sm:$0xff]
      %v343 = vld [vmem:[%s260 + $0x1d8] sm:$0xff]
      %v344 = vld [vmem:[%s260 + $0x1e0] sm:$0xff]
      %v345 = vld [vmem:[%s260 + $0x1e8] sm:$0xff]
      %v346 = vld [vmem:[%s260 + $0x1f0] sm:$0xff]
      %v347 = vld [vmem:[%s260 + $0x1f8] sm:$0xff]
      %v348 = vpack.c.bf16 %v285, %v284
      %v349 = vpack.c.bf16 %v287, %v286
      %v350 = vpack.c.bf16 %v289, %v288
      %v351 = vpack.c.bf16 %v291, %v290
      %v352 = vpack.c.bf16 %v293, %v292
      %v353 = vpack.c.bf16 %v295, %v294
      %v354 = vpack.c.bf16 %v297, %v296
      %v355 = vpack.c.bf16 %v299, %v298
      %v356 = vpack.c.bf16 %v301, %v300
      %v357 = vpack.c.bf16 %v303, %v302
      %v358 = vpack.c.bf16 %v305, %v304
      %v359 = vpack.c.bf16 %v307, %v306
      %v360 = vpack.c.bf16 %v309, %v308
      %v361 = vpack.c.bf16 %v311, %v310
      %v362 = vpack.c.bf16 %v313, %v312
      %v363 = vpack.c.bf16 %v315, %v314
      %v364 = vpack.c.bf16 %v317, %v316
      %v365 = vpack.c.bf16 %v319, %v318
      %v366 = vpack.c.bf16 %v321, %v320
      %v367 = vpack.c.bf16 %v323, %v322
      %v368 = vpack.c.bf16 %v325, %v324
      %v369 = vpack.c.bf16 %v327, %v326
      %v370 = vpack.c.bf16 %v329, %v328
      %v371 = vpack.c.bf16 %v331, %v330
      %v372 = vpack.c.bf16 %v333, %v332
      %v373 = vpack.c.bf16 %v335, %v334
      %v374 = vpack.c.bf16 %v337, %v336
      %v375 = vpack.c.bf16 %v339, %v338
      %v376 = vpack.c.bf16 %v341, %v340
      %v377 = vpack.c.bf16 %v343, %v342
      %v378 = vpack.c.bf16 %v345, %v344
      %v379 = vpack.c.bf16 %v347, %v346
      %v380 = vld [vmem:[%s267] sm:$0xf]
      %v381 = vld [vmem:[%s267 + $0x4] sm:$0xf]
      %v382 = vld [vmem:[%s267 + $0x8] sm:$0xf]
      %v383 = vld [vmem:[%s267 + $0xc] sm:$0xf]
      %v384 = vld [vmem:[%s267 + $0x10] sm:$0xf]
      %v385 = vld [vmem:[%s267 + $0x14] sm:$0xf]
      %v386 = vld [vmem:[%s267 + $0x18] sm:$0xf]
      %v387 = vld [vmem:[%s267 + $0x1c] sm:$0xf]
      %v388 = vld [vmem:[%s267 + $0x20] sm:$0xf]
      %v389 = vld [vmem:[%s267 + $0x24] sm:$0xf]
      %v390 = vld [vmem:[%s267 + $0x28] sm:$0xf]
      %v391 = vld [vmem:[%s267 + $0x2c] sm:$0xf]
      %v392 = vld [vmem:[%s267 + $0x30] sm:$0xf]
      %v393 = vld [vmem:[%s267 + $0x34] sm:$0xf]
      %v394 = vld [vmem:[%s267 + $0x38] sm:$0xf]
      %v395 = vld [vmem:[%s267 + $0x3c] sm:$0xf]
      %v398 = vunpack.c.l.b16 %v380
      %v399 = vunpack.c.l.b16 %v381
      %v400 = vpack.c.b16 %v399, %v398
      %vm402 = vcmask 130048
      %v404 = vsel %vm402, %v348, 0
      %v407 = vsel %vm402, %v349, 0
      %v410 = vsel %vm402, %v350, 0
      %v413 = vsel %vm402, %v351, 0
      %415 = vmatprep.subr.bf16.mxu0 0
      %416 = vmatpush1.bf16.msra.mxu0 %v400
      %417 = vmatprep.subr.bf16.mxu0 0
      %418 = vmatpush1.bf16.msra.mxu0 0
      %419 = vmatprep.subr.bf16.mxu0 0
      %420 = vmatpush1.bf16.msra.mxu0 0
      %421 = vmatprep.subr.bf16.mxu0 0
      %422 = vmatpush1.bf16.msra.mxu0 0
      %423 = vmatprep.subr.bf16.mxu0 0
      %424 = vmatpush1.bf16.msra.mxu0 0
      %425 = vmatprep.subr.bf16.mxu0 0
      %426 = vmatpush1.bf16.msra.mxu0 0
      %427 = vmatprep.subr.bf16.mxu0 0
      %428 = vmatpush1.bf16.msra.mxu0 0
      %429 = vmatprep.subr.bf16.mxu0 0
      %430 = vmatpush1.bf16.msra.mxu0 0
      %431 = vmatprep.subr.bf16.mxu0 0
      %432 = vmatpush1.bf16.msra.mxu0 0
      %433 = vmatprep.subr.bf16.mxu0 0
      %434 = vmatpush1.bf16.msra.mxu0 0
      %435 = vmatprep.subr.bf16.mxu0 0
      %436 = vmatpush1.bf16.msra.mxu0 0
      %437 = vmatprep.subr.bf16.mxu0 0
      %438 = vmatpush1.bf16.msra.mxu0 0
      %439 = vmatprep.subr.bf16.mxu0 0
      %440 = vmatpush1.bf16.msra.mxu0 0
      %441 = vmatprep.subr.bf16.mxu0 0
      %442 = vmatpush1.bf16.msra.mxu0 0
      %443 = vmatprep.subr.bf16.mxu0 0
      %444 = vmatpush1.bf16.msra.mxu0 0
      %445 = vmatprep.subr.bf16.mxu0 0
      %446 = vmatpush1.bf16.msra.mxu0 0
      %447 = vmatprep.mubr.bf16.mxu0 0
      %448 = vmatmul.mubr.bf16.gmra.mrb[0].mxu0 %v404
      %v449 = vpop.f32.mrb[0].mxu0
      %v450 = vadd.f32 0.0, %v449
      %v451 = vpop.f32.mrb[0].mxu0
      %v452 = vpop.f32.mrb[0].mxu0
      %v453 = vadd.f32 0.0, %v452
      %v454 = vpop.f32.mrb[0].mxu0
      %455 = vmatprep.mubr.bf16.mxu0 0
      %456 = vmatmul.mubr.bf16.gmra.mrb[0].mxu0 %v407
      %v457 = vpop.f32.mrb[0].mxu0
      %v458 = vadd.f32 0.0, %v457
      %v459 = vpop.f32.mrb[0].mxu0
      %v460 = vpop.f32.mrb[0].mxu0
      %v461 = vadd.f32 0.0, %v460
      %v462 = vpop.f32.mrb[0].mxu0
      %463 = vmatprep.mubr.bf16.mxu0 0
      %464 = vmatmul.mubr.bf16.gmra.mrb[0].mxu0 %v410
      %v465 = vpop.f32.mrb[0].mxu0
      %v466 = vadd.f32 0.0, %v465
      %v467 = vpop.f32.mrb[0].mxu0
      %v468 = vpop.f32.mrb[0].mxu0
      %v469 = vadd.f32 0.0, %v468
      %v470 = vpop.f32.mrb[0].mxu0
      %471 = vmatprep.mubr.bf16.mxu0 0
      %472 = vmatmul.mubr.bf16.gmra.mrb[0].mxu0 %v413
      %v473 = vpop.f32.mrb[0].mxu0
      %v474 = vadd.f32 0.0, %v473
      %v475 = vpop.f32.mrb[0].mxu0
      %v476 = vpop.f32.mrb[0].mxu0
      %v477 = vadd.f32 0.0, %v476
      %v478 = vpop.f32.mrb[0].mxu0
      %479 = vdwg.mxu0
      %v482 = vunpack.c.l.b16 %v382
      %v483 = vunpack.c.l.b16 %v383
      %v484 = vpack.c.b16 %v483, %v482
      %v487 = vsel %vm402, %v352, 0
      %v490 = vsel %vm402, %v353, 0
      %v493 = vsel %vm402, %v354, 0
      %v496 = vsel %vm402, %v355, 0
      %498 = vmatprep.subr.bf16.mxu0 0
      %499 = vmatpush1.bf16.msra.mxu0 %v484
      %500 = vmatprep.subr.bf16.mxu0 0
      %501 = vmatpush1.bf16.msra.mxu0 0
      %502 = vmatprep.subr.bf16.mxu0 0
      %503 = vmatpush1.bf16.msra.mxu0 0
      %504 = vmatprep.subr.bf16.mxu0 0
      %505 = vmatpush1.bf16.msra.mxu0 0
      %506 = vmatprep.subr.bf16.mxu0 0
      %507 = vmatpush1.bf16.msra.mxu0 0
      %508 = vmatprep.subr.bf16.mxu0 0
      %509 = vmatpush1.bf16.msra.mxu0 0
      %510 = vmatprep.subr.bf16.mxu0 0
      %511 = vmatpush1.bf16.msra.mxu0 0
      %512 = vmatprep.subr.bf16.mxu0 0
      %513 = vmatpush1.bf16.msra.mxu0 0
      %514 = vmatprep.subr.bf16.mxu0 0
      %515 = vmatpush1.bf16.msra.mxu0 0
      %516 = vmatprep.subr.bf16.mxu0 0
      %517 = vmatpush1.bf16.msra.mxu0 0
      %518 = vmatprep.subr.bf16.mxu0 0
      %519 = vmatpush1.bf16.msra.mxu0 0
      %520 = vmatprep.subr.bf16.mxu0 0
      %521 = vmatpush1.bf16.msra.mxu0 0
      %522 = vmatprep.subr.bf16.mxu0 0
      %523 = vmatpush1.bf16.msra.mxu0 0
      %524 = vmatprep.subr.bf16.mxu0 0
      %525 = vmatpush1.bf16.msra.mxu0 0
      %526 = vmatprep.subr.bf16.mxu0 0
      %527 = vmatpush1.bf16.msra.mxu0 0
      %528 = vmatprep.subr.bf16.mxu0 0
      %529 = vmatpush1.bf16.msra.mxu0 0
      %530 = vmatprep.mubr.bf16.mxu0 0
      %531 = vmatmul.mubr.bf16.gmra.mrb[0].mxu0 %v487
      %v532 = vpop.f32.mrb[0].mxu0
      %v533 = vadd.f32 0.0, %v532
      %v534 = vpop.f32.mrb[0].mxu0
      %v535 = vpop.f32.mrb[0].mxu0
      %v536 = vadd.f32 0.0, %v535
      %v537 = vpop.f32.mrb[0].mxu0
      %538 = vmatprep.mubr.bf16.mxu0 0
      %539 = vmatmul.mubr.bf16.gmra.mrb[0].mxu0 %v490
      %v540 = vpop.f32.mrb[0].mxu0
      %v541 = vadd.f32 0.0, %v540
      %v542 = vpop.f32.mrb[0].mxu0
      %v543 = vpop.f32.mrb[0].mxu0
      %v544 = vadd.f32 0.0, %v543
      %v545 = vpop.f32.mrb[0].mxu0
      %546 = vmatprep.mubr.bf16.mxu0 0
      %547 = vmatmul.mubr.bf16.gmra.mrb[0].mxu0 %v493
      %v548 = vpop.f32.mrb[0].mxu0
      %v549 = vadd.f32 0.0, %v548
      %v550 = vpop.f32.mrb[0].mxu0
      %v551 = vpop.f32.mrb[0].mxu0
      %v552 = vadd.f32 0.0, %v551
      %v553 = vpop.f32.mrb[0].mxu0
      %554 = vmatprep.mubr.bf16.mxu0 0
      %555 = vmatmul.mubr.bf16.gmra.mrb[0].mxu0 %v496
      %v556 = vpop.f32.mrb[0].mxu0
      %v557 = vadd.f32 0.0, %v556
      %v558 = vpop.f32.mrb[0].mxu0
      %v559 = vpop.f32.mrb[0].mxu0
      %v560 = vadd.f32 0.0, %v559
      %v561 = vpop.f32.mrb[0].mxu0
      %562 = vdwg.mxu0
      %v565 = vunpack.c.l.b16 %v384
      %v566 = vunpack.c.l.b16 %v385
      %v567 = vpack.c.b16 %v566, %v565
      %v570 = vsel %vm402, %v356, 0
      %v573 = vsel %vm402, %v357, 0
      %v576 = vsel %vm402, %v358, 0
      %v579 = vsel %vm402, %v359, 0
      %581 = vmatprep.subr.bf16.mxu0 0
      %582 = vmatpush1.bf16.msra.mxu0 %v567
      %583 = vmatprep.subr.bf16.mxu0 0
      %584 = vmatpush1.bf16.msra.mxu0 0
      %585 = vmatprep.subr.bf16.mxu0 0
      %586 = vmatpush1.bf16.msra.mxu0 0
      %587 = vmatprep.subr.bf16.mxu0 0
      %588 = vmatpush1.bf16.msra.mxu0 0
      %589 = vmatprep.subr.bf16.mxu0 0
      %590 = vmatpush1.bf16.msra.mxu0 0
      %591 = vmatprep.subr.bf16.mxu0 0
      %592 = vmatpush1.bf16.msra.mxu0 0
      %593 = vmatprep.subr.bf16.mxu0 0
      %594 = vmatpush1.bf16.msra.mxu0 0
      %595 = vmatprep.subr.bf16.mxu0 0
      %596 = vmatpush1.bf16.msra.mxu0 0
      %597 = vmatprep.subr.bf16.mxu0 0
      %598 = vmatpush1.bf16.msra.mxu0 0
      %599 = vmatprep.subr.bf16.mxu0 0
      %600 = vmatpush1.bf16.msra.mxu0 0
      %601 = vmatprep.subr.bf16.mxu0 0
      %602 = vmatpush1.bf16.msra.mxu0 0
      %603 = vmatprep.subr.bf16.mxu0 0
      %604 = vmatpush1.bf16.msra.mxu0 0
      %605 = vmatprep.subr.bf16.mxu0 0
      %606 = vmatpush1.bf16.msra.mxu0 0
      %607 = vmatprep.subr.bf16.mxu0 0
      %608 = vmatpush1.bf16.msra.mxu0 0
      %609 = vmatprep.subr.bf16.mxu0 0
      %610 = vmatpush1.bf16.msra.mxu0 0
      %611 = vmatprep.subr.bf16.mxu0 0
      %612 = vmatpush1.bf16.msra.mxu0 0
      %613 = vmatprep.mubr.bf16.mxu0 0
      %614 = vmatmul.mubr.bf16.gmra.mrb[0].mxu0 %v570
      %v615 = vpop.f32.mrb[0].mxu0
      %v616 = vadd.f32 0.0, %v615
      %v617 = vpop.f32.mrb[0].mxu0
      %v618 = vpop.f32.mrb[0].mxu0
      %v619 = vadd.f32 0.0, %v618
      %v620 = vpop.f32.mrb[0].mxu0
      %621 = vmatprep.mubr.bf16.mxu0 0
      %622 = vmatmul.mubr.bf16.gmra.mrb[0].mxu0 %v573
      %v623 = vpop.f32.mrb[0].mxu0
      %v624 = vadd.f32 0.0, %v623
      %v625 = vpop.f32.mrb[0].mxu0
      %v626 = vpop.f32.mrb[0].mxu0
      %v627 = vadd.f32 0.0, %v626
      %v628 = vpop.f32.mrb[0].mxu0
      %629 = vmatprep.mubr.bf16.mxu0 0
      %630 = vmatmul.mubr.bf16.gmra.mrb[0].mxu0 %v576
      %v631 = vpop.f32.mrb[0].mxu0
      %v632 = vadd.f32 0.0, %v631
      %v633 = vpop.f32.mrb[0].mxu0
      %v634 = vpop.f32.mrb[0].mxu0
      %v635 = vadd.f32 0.0, %v634
      %v636 = vpop.f32.mrb[0].mxu0
      %637 = vmatprep.mubr.bf16.mxu0 0
      %638 = vmatmul.mubr.bf16.gmra.mrb[0].mxu0 %v579
      %v639 = vpop.f32.mrb[0].mxu0
      %v640 = vadd.f32 0.0, %v639
      %v641 = vpop.f32.mrb[0].mxu0
      %v642 = vpop.f32.mrb[0].mxu0
      %v643 = vadd.f32 0.0, %v642
      %v644 = vpop.f32.mrb[0].mxu0
      %645 = vdwg.mxu0
      %v648 = vunpack.c.l.b16 %v386
      %v649 = vunpack.c.l.b16 %v387
      %v650 = vpack.c.b16 %v649, %v648
      %v653 = vsel %vm402, %v360, 0
      %v656 = vsel %vm402, %v361, 0
      %v659 = vsel %vm402, %v362, 0
      %v662 = vsel %vm402, %v363, 0
      %664 = vmatprep.subr.bf16.mxu0 0
      %665 = vmatpush1.bf16.msra.mxu0 %v650
      %666 = vmatprep.subr.bf16.mxu0 0
      %667 = vmatpush1.bf16.msra.mxu0 0
      %668 = vmatprep.subr.bf16.mxu0 0
      %669 = vmatpush1.bf16.msra.mxu0 0
      %670 = vmatprep.subr.bf16.mxu0 0
      %671 = vmatpush1.bf16.msra.mxu0 0
      %672 = vmatprep.subr.bf16.mxu0 0
      %673 = vmatpush1.bf16.msra.mxu0 0
      %674 = vmatprep.subr.bf16.mxu0 0
      %675 = vmatpush1.bf16.msra.mxu0 0
      %676 = vmatprep.subr.bf16.mxu0 0
      %677 = vmatpush1.bf16.msra.mxu0 0
      %678 = vmatprep.subr.bf16.mxu0 0
      %679 = vmatpush1.bf16.msra.mxu0 0
      %680 = vmatprep.subr.bf16.mxu0 0
      %681 = vmatpush1.bf16.msra.mxu0 0
      %682 = vmatprep.subr.bf16.mxu0 0
      %683 = vmatpush1.bf16.msra.mxu0 0
      %684 = vmatprep.subr.bf16.mxu0 0
      %685 = vmatpush1.bf16.msra.mxu0 0
      %686 = vmatprep.subr.bf16.mxu0 0
      %687 = vmatpush1.bf16.msra.mxu0 0
      %688 = vmatprep.subr.bf16.mxu0 0
      %689 = vmatpush1.bf16.msra.mxu0 0
      %690 = vmatprep.subr.bf16.mxu0 0
      %691 = vmatpush1.bf16.msra.mxu0 0
      %692 = vmatprep.subr.bf16.mxu0 0
      %693 = vmatpush1.bf16.msra.mxu0 0
      %694 = vmatprep.subr.bf16.mxu0 0
      %695 = vmatpush1.bf16.msra.mxu0 0
      %696 = vmatprep.mubr.bf16.mxu0 0
      %697 = vmatmul.mubr.bf16.gmra.mrb[0].mxu0 %v653
      %v698 = vpop.f32.mrb[0].mxu0
      %v699 = vadd.f32 0.0, %v698
      %v700 = vpop.f32.mrb[0].mxu0
      %v701 = vpop.f32.mrb[0].mxu0
      %v702 = vadd.f32 0.0, %v701
      %v703 = vpop.f32.mrb[0].mxu0
      %704 = vmatprep.mubr.bf16.mxu0 0
      %705 = vmatmul.mubr.bf16.gmra.mrb[0].mxu0 %v656
      %v706 = vpop.f32.mrb[0].mxu0
      %v707 = vadd.f32 0.0, %v706
      %v708 = vpop.f32.mrb[0].mxu0
      %v709 = vpop.f32.mrb[0].mxu0
      %v710 = vadd.f32 0.0, %v709
      %v711 = vpop.f32.mrb[0].mxu0
      %712 = vmatprep.mubr.bf16.mxu0 0
      %713 = vmatmul.mubr.bf16.gmra.mrb[0].mxu0 %v659
      %v714 = vpop.f32.mrb[0].mxu0
      %v715 = vadd.f32 0.0, %v714
      %v716 = vpop.f32.mrb[0].mxu0
      %v717 = vpop.f32.mrb[0].mxu0
      %v718 = vadd.f32 0.0, %v717
      %v719 = vpop.f32.mrb[0].mxu0
      %720 = vmatprep.mubr.bf16.mxu0 0
      %721 = vmatmul.mubr.bf16.gmra.mrb[0].mxu0 %v662
      %v722 = vpop.f32.mrb[0].mxu0
      %v723 = vadd.f32 0.0, %v722
      %v724 = vpop.f32.mrb[0].mxu0
      %v725 = vpop.f32.mrb[0].mxu0
      %v726 = vadd.f32 0.0, %v725
      %v727 = vpop.f32.mrb[0].mxu0
      %728 = vdwg.mxu0
      %v731 = vunpack.c.l.b16 %v388
      %v732 = vunpack.c.l.b16 %v389
      %v733 = vpack.c.b16 %v732, %v731
      %v736 = vsel %vm402, %v364, 0
      %v739 = vsel %vm402, %v365, 0
      %v742 = vsel %vm402, %v366, 0
      %v745 = vsel %vm402, %v367, 0
      %747 = vmatprep.subr.bf16.mxu0 0
      %748 = vmatpush1.bf16.msra.mxu0 %v733
      %749 = vmatprep.subr.bf16.mxu0 0
      %750 = vmatpush1.bf16.msra.mxu0 0
      %751 = vmatprep.subr.bf16.mxu0 0
      %752 = vmatpush1.bf16.msra.mxu0 0
      %753 = vmatprep.subr.bf16.mxu0 0
      %754 = vmatpush1.bf16.msra.mxu0 0
      %755 = vmatprep.subr.bf16.mxu0 0
      %756 = vmatpush1.bf16.msra.mxu0 0
      %757 = vmatprep.subr.bf16.mxu0 0
      %758 = vmatpush1.bf16.msra.mxu0 0
      %759 = vmatprep.subr.bf16.mxu0 0
      %760 = vmatpush1.bf16.msra.mxu0 0
      %761 = vmatprep.subr.bf16.mxu0 0
      %762 = vmatpush1.bf16.msra.mxu0 0
      %763 = vmatprep.subr.bf16.mxu0 0
      %764 = vmatpush1.bf16.msra.mxu0 0
      %765 = vmatprep.subr.bf16.mxu0 0
      %766 = vmatpush1.bf16.msra.mxu0 0
      %767 = vmatprep.subr.bf16.mxu0 0
      %768 = vmatpush1.bf16.msra.mxu0 0
      %769 = vmatprep.subr.bf16.mxu0 0
      %770 = vmatpush1.bf16.msra.mxu0 0
      %771 = vmatprep.subr.bf16.mxu0 0
      %772 = vmatpush1.bf16.msra.mxu0 0
      %773 = vmatprep.subr.bf16.mxu0 0
      %774 = vmatpush1.bf16.msra.mxu0 0
      %775 = vmatprep.subr.bf16.mxu0 0
      %776 = vmatpush1.bf16.msra.mxu0 0
      %777 = vmatprep.subr.bf16.mxu0 0
      %778 = vmatpush1.bf16.msra.mxu0 0
      %779 = vmatprep.mubr.bf16.mxu0 0
      %780 = vmatmul.mubr.bf16.gmra.mrb[0].mxu0 %v736
      %v781 = vpop.f32.mrb[0].mxu0
      %v782 = vadd.f32 0.0, %v781
      %v783 = vpop.f32.mrb[0].mxu0
      %v784 = vpop.f32.mrb[0].mxu0
      %v785 = vadd.f32 0.0, %v784
      %v786 = vpop.f32.mrb[0].mxu0
      %787 = vmatprep.mubr.bf16.mxu0 0
      %788 = vmatmul.mubr.bf16.gmra.mrb[0].mxu0 %v739
      %v789 = vpop.f32.mrb[0].mxu0
      %v790 = vadd.f32 0.0, %v789
      %v791 = vpop.f32.mrb[0].mxu0
      %v792 = vpop.f32.mrb[0].mxu0
      %v793 = vadd.f32 0.0, %v792
      %v794 = vpop.f32.mrb[0].mxu0
      %795 = vmatprep.mubr.bf16.mxu0 0
      %796 = vmatmul.mubr.bf16.gmra.mrb[0].mxu0 %v742
      %v797 = vpop.f32.mrb[0].mxu0
      %v798 = vadd.f32 0.0, %v797
      %v799 = vpop.f32.mrb[0].mxu0
      %v800 = vpop.f32.mrb[0].mxu0
      %v801 = vadd.f32 0.0, %v800
      %v802 = vpop.f32.mrb[0].mxu0
      %803 = vmatprep.mubr.bf16.mxu0 0
      %804 = vmatmul.mubr.bf16.gmra.mrb[0].mxu0 %v745
      %v805 = vpop.f32.mrb[0].mxu0
      %v806 = vadd.f32 0.0, %v805
      %v807 = vpop.f32.mrb[0].mxu0
      %v808 = vpop.f32.mrb[0].mxu0
      %v809 = vadd.f32 0.0, %v808
      %v810 = vpop.f32.mrb[0].mxu0
      %811 = vdwg.mxu0
      %v814 = vunpack.c.l.b16 %v390
      %v815 = vunpack.c.l.b16 %v391
      %v816 = vpack.c.b16 %v815, %v814
      %v819 = vsel %vm402, %v368, 0
      %v822 = vsel %vm402, %v369, 0
      %v825 = vsel %vm402, %v370, 0
      %v828 = vsel %vm402, %v371, 0
      %830 = vmatprep.subr.bf16.mxu0 0
      %831 = vmatpush1.bf16.msra.mxu0 %v816
      %832 = vmatprep.subr.bf16.mxu0 0
      %833 = vmatpush1.bf16.msra.mxu0 0
      %834 = vmatprep.subr.bf16.mxu0 0
      %835 = vmatpush1.bf16.msra.mxu0 0
      %836 = vmatprep.subr.bf16.mxu0 0
      %837 = vmatpush1.bf16.msra.mxu0 0
      %838 = vmatprep.subr.bf16.mxu0 0
      %839 = vmatpush1.bf16.msra.mxu0 0
      %840 = vmatprep.subr.bf16.mxu0 0
      %841 = vmatpush1.bf16.msra.mxu0 0
      %842 = vmatprep.subr.bf16.mxu0 0
      %843 = vmatpush1.bf16.msra.mxu0 0
      %844 = vmatprep.subr.bf16.mxu0 0
      %845 = vmatpush1.bf16.msra.mxu0 0
      %846 = vmatprep.subr.bf16.mxu0 0
      %847 = vmatpush1.bf16.msra.mxu0 0
      %848 = vmatprep.subr.bf16.mxu0 0
      %849 = vmatpush1.bf16.msra.mxu0 0
      %850 = vmatprep.subr.bf16.mxu0 0
      %851 = vmatpush1.bf16.msra.mxu0 0
      %852 = vmatprep.subr.bf16.mxu0 0
      %853 = vmatpush1.bf16.msra.mxu0 0
      %854 = vmatprep.subr.bf16.mxu0 0
      %855 = vmatpush1.bf16.msra.mxu0 0
      %856 = vmatprep.subr.bf16.mxu0 0
      %857 = vmatpush1.bf16.msra.mxu0 0
      %858 = vmatprep.subr.bf16.mxu0 0
      %859 = vmatpush1.bf16.msra.mxu0 0
      %860 = vmatprep.subr.bf16.mxu0 0
      %861 = vmatpush1.bf16.msra.mxu0 0
      %862 = vmatprep.mubr.bf16.mxu0 0
      %863 = vmatmul.mubr.bf16.gmra.mrb[0].mxu0 %v819
      %v864 = vpop.f32.mrb[0].mxu0
      %v865 = vadd.f32 0.0, %v864
      %v866 = vpop.f32.mrb[0].mxu0
      %v867 = vpop.f32.mrb[0].mxu0
      %v868 = vadd.f32 0.0, %v867
      %v869 = vpop.f32.mrb[0].mxu0
      %870 = vmatprep.mubr.bf16.mxu0 0
      %871 = vmatmul.mubr.bf16.gmra.mrb[0].mxu0 %v822
      %v872 = vpop.f32.mrb[0].mxu0
      %v873 = vadd.f32 0.0, %v872
      %v874 = vpop.f32.mrb[0].mxu0
      %v875 = vpop.f32.mrb[0].mxu0
      %v876 = vadd.f32 0.0, %v875
      %v877 = vpop.f32.mrb[0].mxu0
      %878 = vmatprep.mubr.bf16.mxu0 0
      %879 = vmatmul.mubr.bf16.gmra.mrb[0].mxu0 %v825
      %v880 = vpop.f32.mrb[0].mxu0
      %v881 = vadd.f32 0.0, %v880
      %v882 = vpop.f32.mrb[0].mxu0
      %v883 = vpop.f32.mrb[0].mxu0
      %v884 = vadd.f32 0.0, %v883
      %v885 = vpop.f32.mrb[0].mxu0
      %886 = vmatprep.mubr.bf16.mxu0 0
      %887 = vmatmul.mubr.bf16.gmra.mrb[0].mxu0 %v828
      %v888 = vpop.f32.mrb[0].mxu0
      %v889 = vadd.f32 0.0, %v888
      %v890 = vpop.f32.mrb[0].mxu0
      %v891 = vpop.f32.mrb[0].mxu0
      %v892 = vadd.f32 0.0, %v891
      %v893 = vpop.f32.mrb[0].mxu0
      %894 = vdwg.mxu0
      %v897 = vunpack.c.l.b16 %v392
      %v898 = vunpack.c.l.b16 %v393
      %v899 = vpack.c.b16 %v898, %v897
      %v902 = vsel %vm402, %v372, 0
      %v905 = vsel %vm402, %v373, 0
      %v908 = vsel %vm402, %v374, 0
      %v911 = vsel %vm402, %v375, 0
      %913 = vmatprep.subr.bf16.mxu0 0
      %914 = vmatpush1.bf16.msra.mxu0 %v899
      %915 = vmatprep.subr.bf16.mxu0 0
      %916 = vmatpush1.bf16.msra.mxu0 0
      %917 = vmatprep.subr.bf16.mxu0 0
      %918 = vmatpush1.bf16.msra.mxu0 0
      %919 = vmatprep.subr.bf16.mxu0 0
      %920 = vmatpush1.bf16.msra.mxu0 0
      %921 = vmatprep.subr.bf16.mxu0 0
      %922 = vmatpush1.bf16.msra.mxu0 0
      %923 = vmatprep.subr.bf16.mxu0 0
      %924 = vmatpush1.bf16.msra.mxu0 0
      %925 = vmatprep.subr.bf16.mxu0 0
      %926 = vmatpush1.bf16.msra.mxu0 0
      %927 = vmatprep.subr.bf16.mxu0 0
      %928 = vmatpush1.bf16.msra.mxu0 0
      %929 = vmatprep.subr.bf16.mxu0 0
      %930 = vmatpush1.bf16.msra.mxu0 0
      %931 = vmatprep.subr.bf16.mxu0 0
      %932 = vmatpush1.bf16.msra.mxu0 0
      %933 = vmatprep.subr.bf16.mxu0 0
      %934 = vmatpush1.bf16.msra.mxu0 0
      %935 = vmatprep.subr.bf16.mxu0 0
      %936 = vmatpush1.bf16.msra.mxu0 0
      %937 = vmatprep.subr.bf16.mxu0 0
      %938 = vmatpush1.bf16.msra.mxu0 0
      %939 = vmatprep.subr.bf16.mxu0 0
      %940 = vmatpush1.bf16.msra.mxu0 0
      %941 = vmatprep.subr.bf16.mxu0 0
      %942 = vmatpush1.bf16.msra.mxu0 0
      %943 = vmatprep.subr.bf16.mxu0 0
      %944 = vmatpush1.bf16.msra.mxu0 0
      %945 = vmatprep.mubr.bf16.mxu0 0
      %946 = vmatmul.mubr.bf16.gmra.mrb[0].mxu0 %v902
      %v947 = vpop.f32.mrb[0].mxu0
      %v948 = vadd.f32 0.0, %v947
      %v949 = vpop.f32.mrb[0].mxu0
      %v950 = vpop.f32.mrb[0].mxu0
      %v951 = vadd.f32 0.0, %v950
      %v952 = vpop.f32.mrb[0].mxu0
      %953 = vmatprep.mubr.bf16.mxu0 0
      %954 = vmatmul.mubr.bf16.gmra.mrb[0].mxu0 %v905
      %v955 = vpop.f32.mrb[0].mxu0
      %v956 = vadd.f32 0.0, %v955
      %v957 = vpop.f32.mrb[0].mxu0
      %v958 = vpop.f32.mrb[0].mxu0
      %v959 = vadd.f32 0.0, %v958
      %v960 = vpop.f32.mrb[0].mxu0
      %961 = vmatprep.mubr.bf16.mxu0 0
      %962 = vmatmul.mubr.bf16.gmra.mrb[0].mxu0 %v908
      %v963 = vpop.f32.mrb[0].mxu0
      %v964 = vadd.f32 0.0, %v963
      %v965 = vpop.f32.mrb[0].mxu0
      %v966 = vpop.f32.mrb[0].mxu0
      %v967 = vadd.f32 0.0, %v966
      %v968 = vpop.f32.mrb[0].mxu0
      %969 = vmatprep.mubr.bf16.mxu0 0
      %970 = vmatmul.mubr.bf16.gmra.mrb[0].mxu0 %v911
      %v971 = vpop.f32.mrb[0].mxu0
      %v972 = vadd.f32 0.0, %v971
      %v973 = vpop.f32.mrb[0].mxu0
      %v974 = vpop.f32.mrb[0].mxu0
      %v975 = vadd.f32 0.0, %v974
      %v976 = vpop.f32.mrb[0].mxu0
      %977 = vdwg.mxu0
      %v980 = vunpack.c.l.b16 %v394
      %v981 = vunpack.c.l.b16 %v395
      %v982 = vpack.c.b16 %v981, %v980
      %v985 = vsel %vm402, %v376, 0
      %v988 = vsel %vm402, %v377, 0
      %v991 = vsel %vm402, %v378, 0
      %v994 = vsel %vm402, %v379, 0
      %996 = vmatprep.subr.bf16.mxu0 0
      %997 = vmatpush1.bf16.msra.mxu0 %v982
      %998 = vmatprep.subr.bf16.mxu0 0
      %999 = vmatpush1.bf16.msra.mxu0 0
      %1000 = vmatprep.subr.bf16.mxu0 0
      %1001 = vmatpush1.bf16.msra.mxu0 0
      %1002 = vmatprep.subr.bf16.mxu0 0
      %1003 = vmatpush1.bf16.msra.mxu0 0
      %1004 = vmatprep.subr.bf16.mxu0 0
      %1005 = vmatpush1.bf16.msra.mxu0 0
      %1006 = vmatprep.subr.bf16.mxu0 0
      %1007 = vmatpush1.bf16.msra.mxu0 0
      %1008 = vmatprep.subr.bf16.mxu0 0
      %1009 = vmatpush1.bf16.msra.mxu0 0
      %1010 = vmatprep.subr.bf16.mxu0 0
      %1011 = vmatpush1.bf16.msra.mxu0 0
      %1012 = vmatprep.subr.bf16.mxu0 0
      %1013 = vmatpush1.bf16.msra.mxu0 0
      %1014 = vmatprep.subr.bf16.mxu0 0
      %1015 = vmatpush1.bf16.msra.mxu0 0
      %1016 = vmatprep.subr.bf16.mxu0 0
      %1017 = vmatpush1.bf16.msra.mxu0 0
      %1018 = vmatprep.subr.bf16.mxu0 0
      %1019 = vmatpush1.bf16.msra.mxu0 0
      %1020 = vmatprep.subr.bf16.mxu0 0
      %1021 = vmatpush1.bf16.msra.mxu0 0
      %1022 = vmatprep.subr.bf16.mxu0 0
      %1023 = vmatpush1.bf16.msra.mxu0 0
      %1024 = vmatprep.subr.bf16.mxu0 0
      %1025 = vmatpush1.bf16.msra.mxu0 0
      %1026 = vmatprep.subr.bf16.mxu0 0
      %1027 = vmatpush1.bf16.msra.mxu0 0
      %1028 = vmatprep.mubr.bf16.mxu0 0
      %1029 = vmatmul.mubr.bf16.gmra.mrb[0].mxu0 %v985
      %v1030 = vpop.f32.mrb[0].mxu0
      %v1031 = vadd.f32 0.0, %v1030
      %v1032 = vpop.f32.mrb[0].mxu0
      %v1033 = vpop.f32.mrb[0].mxu0
      %v1034 = vadd.f32 0.0, %v1033
      %v1035 = vpop.f32.mrb[0].mxu0
      %1036 = vmatprep.mubr.bf16.mxu0 0
      %1037 = vmatmul.mubr.bf16.gmra.mrb[0].mxu0 %v988
      %v1038 = vpop.f32.mrb[0].mxu0
      %v1039 = vadd.f32 0.0, %v1038
      %v1040 = vpop.f32.mrb[0].mxu0
      %v1041 = vpop.f32.mrb[0].mxu0
      %v1042 = vadd.f32 0.0, %v1041
      %v1043 = vpop.f32.mrb[0].mxu0
      %1044 = vmatprep.mubr.bf16.mxu0 0
      %1045 = vmatmul.mubr.bf16.gmra.mrb[0].mxu0 %v991
      %v1046 = vpop.f32.mrb[0].mxu0
      %v1047 = vadd.f32 0.0, %v1046
      %v1048 = vpop.f32.mrb[0].mxu0
      %v1049 = vpop.f32.mrb[0].mxu0
      %v1050 = vadd.f32 0.0, %v1049
      %v1051 = vpop.f32.mrb[0].mxu0
      %1052 = vmatprep.mubr.bf16.mxu0 0
      %1053 = vmatmul.mubr.bf16.gmra.mrb[0].mxu0 %v994
      %v1054 = vpop.f32.mrb[0].mxu0
      %v1055 = vadd.f32 0.0, %v1054
      %v1056 = vpop.f32.mrb[0].mxu0
      %v1057 = vpop.f32.mrb[0].mxu0
      %v1058 = vadd.f32 0.0, %v1057
      %v1059 = vpop.f32.mrb[0].mxu0
      %1060 = vdwg.mxu0
      %1061 = vxpose.xlu0.b32.start [1/16] %v450, 128
      %1062 = vxpose.xlu0.b32.cont [2/16] %v453, 128
      %1063 = vxpose.xlu0.b32.cont [3/16] %v458, 128
      %1064 = vxpose.xlu0.b32.cont [4/16] %v461, 128
      %1065 = vxpose.xlu0.b32.cont [5/16] 0.0, 128
      %1066 = vxpose.xlu0.b32.cont [6/16] 0.0, 128
      %1067 = vxpose.xlu0.b32.cont [7/16] 0.0, 128
      %1068 = vxpose.xlu0.b32.cont [8/16] 0.0, 128
      %1069 = vxpose.xlu0.b32.cont [9/16] 0.0, 128
      %1070 = vxpose.xlu0.b32.cont [10/16] 0.0, 128
      %1071 = vxpose.xlu0.b32.cont [11/16] 0.0, 128
      %1072 = vxpose.xlu0.b32.cont [12/16] 0.0, 128
      %1073 = vxpose.xlu0.b32.cont [13/16] 0.0, 128
      %1074 = vxpose.xlu0.b32.cont [14/16] 0.0, 128
      %1075 = vxpose.xlu0.b32.cont [15/16] 0.0, 128
      %1076 = vxpose.xlu0.b32.end [16/16] 0.0, 128
      %v1077 = vpop.trf.xlu0
      %v1078 = vpop.trf.xlu0
      %v1079 = vpop.trf.xlu0
      %v1080 = vpop.trf.xlu0
      %v1081 = vpop.trf.xlu0
      %v1082 = vpop.trf.xlu0
      %v1083 = vpop.trf.xlu0
      %v1084 = vpop.trf.xlu0
      %v1085 = vpop.trf.xlu0
      %v1086 = vpop.trf.xlu0
      %v1087 = vpop.trf.xlu0
      %v1088 = vpop.trf.xlu0
      %v1089 = vpop.trf.xlu0
      %v1090 = vpop.trf.xlu0
      %v1091 = vpop.trf.xlu0
      %v1092 = vpop.trf.xlu0
      %1093 = vxpose.xlu0.b32.start [1/16] %v466, 128
      %1094 = vxpose.xlu0.b32.cont [2/16] %v469, 128
      %1095 = vxpose.xlu0.b32.cont [3/16] %v474, 128
      %1096 = vxpose.xlu0.b32.cont [4/16] %v477, 128
      %1097 = vxpose.xlu0.b32.cont [5/16] 0.0, 128
      %1098 = vxpose.xlu0.b32.cont [6/16] 0.0, 128
      %1099 = vxpose.xlu0.b32.cont [7/16] 0.0, 128
      %1100 = vxpose.xlu0.b32.cont [8/16] 0.0, 128
      %1101 = vxpose.xlu0.b32.cont [9/16] 0.0, 128
      %1102 = vxpose.xlu0.b32.cont [10/16] 0.0, 128
      %1103 = vxpose.xlu0.b32.cont [11/16] 0.0, 128
      %1104 = vxpose.xlu0.b32.cont [12/16] 0.0, 128
      %1105 = vxpose.xlu0.b32.cont [13/16] 0.0, 128
      %1106 = vxpose.xlu0.b32.cont [14/16] 0.0, 128
      %1107 = vxpose.xlu0.b32.cont [15/16] 0.0, 128
      %1108 = vxpose.xlu0.b32.end [16/16] 0.0, 128
      %v1109 = vpop.trf.xlu0
      %v1110 = vpop.trf.xlu0
      %v1111 = vpop.trf.xlu0
      %v1112 = vpop.trf.xlu0
      %v1113 = vpop.trf.xlu0
      %v1114 = vpop.trf.xlu0
      %v1115 = vpop.trf.xlu0
      %v1116 = vpop.trf.xlu0
      %v1117 = vpop.trf.xlu0
      %v1118 = vpop.trf.xlu0
      %v1119 = vpop.trf.xlu0
      %v1120 = vpop.trf.xlu0
      %v1121 = vpop.trf.xlu0
      %v1122 = vpop.trf.xlu0
      %v1123 = vpop.trf.xlu0
      %v1124 = vpop.trf.xlu0
      %1125 = vxpose.xlu0.b32.start [1/16] %v533, 128
      %1126 = vxpose.xlu0.b32.cont [2/16] %v536, 128
      %1127 = vxpose.xlu0.b32.cont [3/16] %v541, 128
      %1128 = vxpose.xlu0.b32.cont [4/16] %v544, 128
      %1129 = vxpose.xlu0.b32.cont [5/16] 0.0, 128
      %1130 = vxpose.xlu0.b32.cont [6/16] 0.0, 128
      %1131 = vxpose.xlu0.b32.cont [7/16] 0.0, 128
      %1132 = vxpose.xlu0.b32.cont [8/16] 0.0, 128
      %1133 = vxpose.xlu0.b32.cont [9/16] 0.0, 128
      %1134 = vxpose.xlu0.b32.cont [10/16] 0.0, 128
      %1135 = vxpose.xlu0.b32.cont [11/16] 0.0, 128
      %1136 = vxpose.xlu0.b32.cont [12/16] 0.0, 128
      %1137 = vxpose.xlu0.b32.cont [13/16] 0.0, 128
      %1138 = vxpose.xlu0.b32.cont [14/16] 0.0, 128
      %1139 = vxpose.xlu0.b32.cont [15/16] 0.0, 128
      %1140 = vxpose.xlu0.b32.end [16/16] 0.0, 128
      %v1141 = vpop.trf.xlu0
      %v1142 = vpop.trf.xlu0
      %v1143 = vpop.trf.xlu0
      %v1144 = vpop.trf.xlu0
      %v1145 = vpop.trf.xlu0
      %v1146 = vpop.trf.xlu0
      %v1147 = vpop.trf.xlu0
      %v1148 = vpop.trf.xlu0
      %v1149 = vpop.trf.xlu0
      %v1150 = vpop.trf.xlu0
      %v1151 = vpop.trf.xlu0
      %v1152 = vpop.trf.xlu0
      %v1153 = vpop.trf.xlu0
      %v1154 = vpop.trf.xlu0
      %v1155 = vpop.trf.xlu0
      %v1156 = vpop.trf.xlu0
      %1157 = vxpose.xlu0.b32.start [1/16] %v549, 128
      %1158 = vxpose.xlu0.b32.cont [2/16] %v552, 128
      %1159 = vxpose.xlu0.b32.cont [3/16] %v557, 128
      %1160 = vxpose.xlu0.b32.cont [4/16] %v560, 128
      %1161 = vxpose.xlu0.b32.cont [5/16] 0.0, 128
      %1162 = vxpose.xlu0.b32.cont [6/16] 0.0, 128
      %1163 = vxpose.xlu0.b32.cont [7/16] 0.0, 128
      %1164 = vxpose.xlu0.b32.cont [8/16] 0.0, 128
      %1165 = vxpose.xlu0.b32.cont [9/16] 0.0, 128
      %1166 = vxpose.xlu0.b32.cont [10/16] 0.0, 128
      %1167 = vxpose.xlu0.b32.cont [11/16] 0.0, 128
      %1168 = vxpose.xlu0.b32.cont [12/16] 0.0, 128
      %1169 = vxpose.xlu0.b32.cont [13/16] 0.0, 128
      %1170 = vxpose.xlu0.b32.cont [14/16] 0.0, 128
      %1171 = vxpose.xlu0.b32.cont [15/16] 0.0, 128
      %1172 = vxpose.xlu0.b32.end [16/16] 0.0, 128
      %v1173 = vpop.trf.xlu0
      %v1174 = vpop.trf.xlu0
      %v1175 = vpop.trf.xlu0
      %v1176 = vpop.trf.xlu0
      %v1177 = vpop.trf.xlu0
      %v1178 = vpop.trf.xlu0
      %v1179 = vpop.trf.xlu0
      %v1180 = vpop.trf.xlu0
      %v1181 = vpop.trf.xlu0
      %v1182 = vpop.trf.xlu0
      %v1183 = vpop.trf.xlu0
      %v1184 = vpop.trf.xlu0
      %v1185 = vpop.trf.xlu0
      %v1186 = vpop.trf.xlu0
      %v1187 = vpop.trf.xlu0
      %v1188 = vpop.trf.xlu0
      %1189 = vxpose.xlu0.b32.start [1/16] %v616, 128
      %1190 = vxpose.xlu0.b32.cont [2/16] %v619, 128
      %1191 = vxpose.xlu0.b32.cont [3/16] %v624, 128
      %1192 = vxpose.xlu0.b32.cont [4/16] %v627, 128
      %1193 = vxpose.xlu0.b32.cont [5/16] 0.0, 128
      %1194 = vxpose.xlu0.b32.cont [6/16] 0.0, 128
      %1195 = vxpose.xlu0.b32.cont [7/16] 0.0, 128
      %1196 = vxpose.xlu0.b32.cont [8/16] 0.0, 128
      %1197 = vxpose.xlu0.b32.cont [9/16] 0.0, 128
      %1198 = vxpose.xlu0.b32.cont [10/16] 0.0, 128
      %1199 = vxpose.xlu0.b32.cont [11/16] 0.0, 128
      %1200 = vxpose.xlu0.b32.cont [12/16] 0.0, 128
      %1201 = vxpose.xlu0.b32.cont [13/16] 0.0, 128
      %1202 = vxpose.xlu0.b32.cont [14/16] 0.0, 128
      %1203 = vxpose.xlu0.b32.cont [15/16] 0.0, 128
      %1204 = vxpose.xlu0.b32.end [16/16] 0.0, 128
      %v1205 = vpop.trf.xlu0
      %v1206 = vpop.trf.xlu0
      %v1207 = vpop.trf.xlu0
      %v1208 = vpop.trf.xlu0
      %v1209 = vpop.trf.xlu0
      %v1210 = vpop.trf.xlu0
      %v1211 = vpop.trf.xlu0
      %v1212 = vpop.trf.xlu0
      %v1213 = vpop.trf.xlu0
      %v1214 = vpop.trf.xlu0
      %v1215 = vpop.trf.xlu0
      %v1216 = vpop.trf.xlu0
      %v1217 = vpop.trf.xlu0
      %v1218 = vpop.trf.xlu0
      %v1219 = vpop.trf.xlu0
      %v1220 = vpop.trf.xlu0
      %1221 = vxpose.xlu0.b32.start [1/16] %v632, 128
      %1222 = vxpose.xlu0.b32.cont [2/16] %v635, 128
      %1223 = vxpose.xlu0.b32.cont [3/16] %v640, 128
      %1224 = vxpose.xlu0.b32.cont [4/16] %v643, 128
      %1225 = vxpose.xlu0.b32.cont [5/16] 0.0, 128
      %1226 = vxpose.xlu0.b32.cont [6/16] 0.0, 128
      %1227 = vxpose.xlu0.b32.cont [7/16] 0.0, 128
      %1228 = vxpose.xlu0.b32.cont [8/16] 0.0, 128
      %1229 = vxpose.xlu0.b32.cont [9/16] 0.0, 128
      %1230 = vxpose.xlu0.b32.cont [10/16] 0.0, 128
      %1231 = vxpose.xlu0.b32.cont [11/16] 0.0, 128
      %1232 = vxpose.xlu0.b32.cont [12/16] 0.0, 128
      %1233 = vxpose.xlu0.b32.cont [13/16] 0.0, 128
      %1234 = vxpose.xlu0.b32.cont [14/16] 0.0, 128
      %1235 = vxpose.xlu0.b32.cont [15/16] 0.0, 128
      %1236 = vxpose.xlu0.b32.end [16/16] 0.0, 128
      %v1237 = vpop.trf.xlu0
      %v1238 = vpop.trf.xlu0
      %v1239 = vpop.trf.xlu0
      %v1240 = vpop.trf.xlu0
      %v1241 = vpop.trf.xlu0
      %v1242 = vpop.trf.xlu0
      %v1243 = vpop.trf.xlu0
      %v1244 = vpop.trf.xlu0
      %v1245 = vpop.trf.xlu0
      %v1246 = vpop.trf.xlu0
      %v1247 = vpop.trf.xlu0
      %v1248 = vpop.trf.xlu0
      %v1249 = vpop.trf.xlu0
      %v1250 = vpop.trf.xlu0
      %v1251 = vpop.trf.xlu0
      %v1252 = vpop.trf.xlu0
      %1253 = vxpose.xlu0.b32.start [1/16] %v699, 128
      %1254 = vxpose.xlu0.b32.cont [2/16] %v702, 128
      %1255 = vxpose.xlu0.b32.cont [3/16] %v707, 128
      %1256 = vxpose.xlu0.b32.cont [4/16] %v710, 128
      %1257 = vxpose.xlu0.b32.cont [5/16] 0.0, 128
      %1258 = vxpose.xlu0.b32.cont [6/16] 0.0, 128
      %1259 = vxpose.xlu0.b32.cont [7/16] 0.0, 128
      %1260 = vxpose.xlu0.b32.cont [8/16] 0.0, 128
      %1261 = vxpose.xlu0.b32.cont [9/16] 0.0, 128
      %1262 = vxpose.xlu0.b32.cont [10/16] 0.0, 128
      %1263 = vxpose.xlu0.b32.cont [11/16] 0.0, 128
      %1264 = vxpose.xlu0.b32.cont [12/16] 0.0, 128
      %1265 = vxpose.xlu0.b32.cont [13/16] 0.0, 128
      %1266 = vxpose.xlu0.b32.cont [14/16] 0.0, 128
      %1267 = vxpose.xlu0.b32.cont [15/16] 0.0, 128
      %1268 = vxpose.xlu0.b32.end [16/16] 0.0, 128
      %v1269 = vpop.trf.xlu0
      %v1270 = vpop.trf.xlu0
      %v1271 = vpop.trf.xlu0
      %v1272 = vpop.trf.xlu0
      %v1273 = vpop.trf.xlu0
      %v1274 = vpop.trf.xlu0
      %v1275 = vpop.trf.xlu0
      %v1276 = vpop.trf.xlu0
      %v1277 = vpop.trf.xlu0
      %v1278 = vpop.trf.xlu0
      %v1279 = vpop.trf.xlu0
      %v1280 = vpop.trf.xlu0
      %v1281 = vpop.trf.xlu0
      %v1282 = vpop.trf.xlu0
      %v1283 = vpop.trf.xlu0
      %v1284 = vpop.trf.xlu0
      %1285 = vxpose.xlu0.b32.start [1/16] %v715, 128
      %1286 = vxpose.xlu0.b32.cont [2/16] %v718, 128
      %1287 = vxpose.xlu0.b32.cont [3/16] %v723, 128
      %1288 = vxpose.xlu0.b32.cont [4/16] %v726, 128
      %1289 = vxpose.xlu0.b32.cont [5/16] 0.0, 128
      %1290 = vxpose.xlu0.b32.cont [6/16] 0.0, 128
      %1291 = vxpose.xlu0.b32.cont [7/16] 0.0, 128
      %1292 = vxpose.xlu0.b32.cont [8/16] 0.0, 128
      %1293 = vxpose.xlu0.b32.cont [9/16] 0.0, 128
      %1294 = vxpose.xlu0.b32.cont [10/16] 0.0, 128
      %1295 = vxpose.xlu0.b32.cont [11/16] 0.0, 128
      %1296 = vxpose.xlu0.b32.cont [12/16] 0.0, 128
      %1297 = vxpose.xlu0.b32.cont [13/16] 0.0, 128
      %1298 = vxpose.xlu0.b32.cont [14/16] 0.0, 128
      %1299 = vxpose.xlu0.b32.cont [15/16] 0.0, 128
      %1300 = vxpose.xlu0.b32.end [16/16] 0.0, 128
      %v1301 = vpop.trf.xlu0
      %v1302 = vpop.trf.xlu0
      %v1303 = vpop.trf.xlu0
      %v1304 = vpop.trf.xlu0
      %v1305 = vpop.trf.xlu0
      %v1306 = vpop.trf.xlu0
      %v1307 = vpop.trf.xlu0
      %v1308 = vpop.trf.xlu0
      %v1309 = vpop.trf.xlu0
      %v1310 = vpop.trf.xlu0
      %v1311 = vpop.trf.xlu0
      %v1312 = vpop.trf.xlu0
      %v1313 = vpop.trf.xlu0
      %v1314 = vpop.trf.xlu0
      %v1315 = vpop.trf.xlu0
      %v1316 = vpop.trf.xlu0
      %1317 = vxpose.xlu0.b32.start [1/16] %v782, 128
      %1318 = vxpose.xlu0.b32.cont [2/16] %v785, 128
      %1319 = vxpose.xlu0.b32.cont [3/16] %v790, 128
      %1320 = vxpose.xlu0.b32.cont [4/16] %v793, 128
      %1321 = vxpose.xlu0.b32.cont [5/16] 0.0, 128
      %1322 = vxpose.xlu0.b32.cont [6/16] 0.0, 128
      %1323 = vxpose.xlu0.b32.cont [7/16] 0.0, 128
      %1324 = vxpose.xlu0.b32.cont [8/16] 0.0, 128
      %1325 = vxpose.xlu0.b32.cont [9/16] 0.0, 128
      %1326 = vxpose.xlu0.b32.cont [10/16] 0.0, 128
      %1327 = vxpose.xlu0.b32.cont [11/16] 0.0, 128
      %1328 = vxpose.xlu0.b32.cont [12/16] 0.0, 128
      %1329 = vxpose.xlu0.b32.cont [13/16] 0.0, 128
      %1330 = vxpose.xlu0.b32.cont [14/16] 0.0, 128
      %1331 = vxpose.xlu0.b32.cont [15/16] 0.0, 128
      %1332 = vxpose.xlu0.b32.end [16/16] 0.0, 128
      %v1333 = vpop.trf.xlu0
      %v1334 = vpop.trf.xlu0
      %v1335 = vpop.trf.xlu0
      %v1336 = vpop.trf.xlu0
      %v1337 = vpop.trf.xlu0
      %v1338 = vpop.trf.xlu0
      %v1339 = vpop.trf.xlu0
      %v1340 = vpop.trf.xlu0
      %v1341 = vpop.trf.xlu0
      %v1342 = vpop.trf.xlu0
      %v1343 = vpop.trf.xlu0
      %v1344 = vpop.trf.xlu0
      %v1345 = vpop.trf.xlu0
      %v1346 = vpop.trf.xlu0
      %v1347 = vpop.trf.xlu0
      %v1348 = vpop.trf.xlu0
      %1349 = vxpose.xlu0.b32.start [1/16] %v798, 128
      %1350 = vxpose.xlu0.b32.cont [2/16] %v801, 128
      %1351 = vxpose.xlu0.b32.cont [3/16] %v806, 128
      %1352 = vxpose.xlu0.b32.cont [4/16] %v809, 128
      %1353 = vxpose.xlu0.b32.cont [5/16] 0.0, 128
      %1354 = vxpose.xlu0.b32.cont [6/16] 0.0, 128
      %1355 = vxpose.xlu0.b32.cont [7/16] 0.0, 128
      %1356 = vxpose.xlu0.b32.cont [8/16] 0.0, 128
      %1357 = vxpose.xlu0.b32.cont [9/16] 0.0, 128
      %1358 = vxpose.xlu0.b32.cont [10/16] 0.0, 128
      %1359 = vxpose.xlu0.b32.cont [11/16] 0.0, 128
      %1360 = vxpose.xlu0.b32.cont [12/16] 0.0, 128
      %1361 = vxpose.xlu0.b32.cont [13/16] 0.0, 128
      %1362 = vxpose.xlu0.b32.cont [14/16] 0.0, 128
      %1363 = vxpose.xlu0.b32.cont [15/16] 0.0, 128
      %1364 = vxpose.xlu0.b32.end [16/16] 0.0, 128
      %v1365 = vpop.trf.xlu0
      %v1366 = vpop.trf.xlu0
      %v1367 = vpop.trf.xlu0
      %v1368 = vpop.trf.xlu0
      %v1369 = vpop.trf.xlu0
      %v1370 = vpop.trf.xlu0
      %v1371 = vpop.trf.xlu0
      %v1372 = vpop.trf.xlu0
      %v1373 = vpop.trf.xlu0
      %v1374 = vpop.trf.xlu0
      %v1375 = vpop.trf.xlu0
      %v1376 = vpop.trf.xlu0
      %v1377 = vpop.trf.xlu0
      %v1378 = vpop.trf.xlu0
      %v1379 = vpop.trf.xlu0
      %v1380 = vpop.trf.xlu0
      %1381 = vxpose.xlu0.b32.start [1/16] %v865, 128
      %1382 = vxpose.xlu0.b32.cont [2/16] %v868, 128
      %1383 = vxpose.xlu0.b32.cont [3/16] %v873, 128
      %1384 = vxpose.xlu0.b32.cont [4/16] %v876, 128
      %1385 = vxpose.xlu0.b32.cont [5/16] 0.0, 128
      %1386 = vxpose.xlu0.b32.cont [6/16] 0.0, 128
      %1387 = vxpose.xlu0.b32.cont [7/16] 0.0, 128
      %1388 = vxpose.xlu0.b32.cont [8/16] 0.0, 128
      %1389 = vxpose.xlu0.b32.cont [9/16] 0.0, 128
      %1390 = vxpose.xlu0.b32.cont [10/16] 0.0, 128
      %1391 = vxpose.xlu0.b32.cont [11/16] 0.0, 128
      %1392 = vxpose.xlu0.b32.cont [12/16] 0.0, 128
      %1393 = vxpose.xlu0.b32.cont [13/16] 0.0, 128
      %1394 = vxpose.xlu0.b32.cont [14/16] 0.0, 128
      %1395 = vxpose.xlu0.b32.cont [15/16] 0.0, 128
      %1396 = vxpose.xlu0.b32.end [16/16] 0.0, 128
      %v1397 = vpop.trf.xlu0
      %v1398 = vpop.trf.xlu0
      %v1399 = vpop.trf.xlu0
      %v1400 = vpop.trf.xlu0
      %v1401 = vpop.trf.xlu0
      %v1402 = vpop.trf.xlu0
      %v1403 = vpop.trf.xlu0
      %v1404 = vpop.trf.xlu0
      %v1405 = vpop.trf.xlu0
      %v1406 = vpop.trf.xlu0
      %v1407 = vpop.trf.xlu0
      %v1408 = vpop.trf.xlu0
      %v1409 = vpop.trf.xlu0
      %v1410 = vpop.trf.xlu0
      %v1411 = vpop.trf.xlu0
      %v1412 = vpop.trf.xlu0
      %1413 = vxpose.xlu0.b32.start [1/16] %v881, 128
      %1414 = vxpose.xlu0.b32.cont [2/16] %v884, 128
      %1415 = vxpose.xlu0.b32.cont [3/16] %v889, 128
      %1416 = vxpose.xlu0.b32.cont [4/16] %v892, 128
      %1417 = vxpose.xlu0.b32.cont [5/16] 0.0, 128
      %1418 = vxpose.xlu0.b32.cont [6/16] 0.0, 128
      %1419 = vxpose.xlu0.b32.cont [7/16] 0.0, 128
      %1420 = vxpose.xlu0.b32.cont [8/16] 0.0, 128
      %1421 = vxpose.xlu0.b32.cont [9/16] 0.0, 128
      %1422 = vxpose.xlu0.b32.cont [10/16] 0.0, 128
      %1423 = vxpose.xlu0.b32.cont [11/16] 0.0, 128
      %1424 = vxpose.xlu0.b32.cont [12/16] 0.0, 128
      %1425 = vxpose.xlu0.b32.cont [13/16] 0.0, 128
      %1426 = vxpose.xlu0.b32.cont [14/16] 0.0, 128
      %1427 = vxpose.xlu0.b32.cont [15/16] 0.0, 128
      %1428 = vxpose.xlu0.b32.end [16/16] 0.0, 128
      %v1429 = vpop.trf.xlu0
      %v1430 = vpop.trf.xlu0
      %v1431 = vpop.trf.xlu0
      %v1432 = vpop.trf.xlu0
      %v1433 = vpop.trf.xlu0
      %v1434 = vpop.trf.xlu0
      %v1435 = vpop.trf.xlu0
      %v1436 = vpop.trf.xlu0
      %v1437 = vpop.trf.xlu0
      %v1438 = vpop.trf.xlu0
      %v1439 = vpop.trf.xlu0
      %v1440 = vpop.trf.xlu0
      %v1441 = vpop.trf.xlu0
      %v1442 = vpop.trf.xlu0
      %v1443 = vpop.trf.xlu0
      %v1444 = vpop.trf.xlu0
      %1445 = vxpose.xlu0.b32.start [1/16] %v948, 128
      %1446 = vxpose.xlu0.b32.cont [2/16] %v951, 128
      %1447 = vxpose.xlu0.b32.cont [3/16] %v956, 128
      %1448 = vxpose.xlu0.b32.cont [4/16] %v959, 128
      %1449 = vxpose.xlu0.b32.cont [5/16] 0.0, 128
      %1450 = vxpose.xlu0.b32.cont [6/16] 0.0, 128
      %1451 = vxpose.xlu0.b32.cont [7/16] 0.0, 128
      %1452 = vxpose.xlu0.b32.cont [8/16] 0.0, 128
      %1453 = vxpose.xlu0.b32.cont [9/16] 0.0, 128
      %1454 = vxpose.xlu0.b32.cont [10/16] 0.0, 128
      %1455 = vxpose.xlu0.b32.cont [11/16] 0.0, 128
      %1456 = vxpose.xlu0.b32.cont [12/16] 0.0, 128
      %1457 = vxpose.xlu0.b32.cont [13/16] 0.0, 128
      %1458 = vxpose.xlu0.b32.cont [14/16] 0.0, 128
      %1459 = vxpose.xlu0.b32.cont [15/16] 0.0, 128
      %1460 = vxpose.xlu0.b32.end [16/16] 0.0, 128
      %v1461 = vpop.trf.xlu0
      %v1462 = vpop.trf.xlu0
      %v1463 = vpop.trf.xlu0
      %v1464 = vpop.trf.xlu0
      %v1465 = vpop.trf.xlu0
      %v1466 = vpop.trf.xlu0
      %v1467 = vpop.trf.xlu0
      %v1468 = vpop.trf.xlu0
      %v1469 = vpop.trf.xlu0
      %v1470 = vpop.trf.xlu0
      %v1471 = vpop.trf.xlu0
      %v1472 = vpop.trf.xlu0
      %v1473 = vpop.trf.xlu0
      %v1474 = vpop.trf.xlu0
      %v1475 = vpop.trf.xlu0
      %v1476 = vpop.trf.xlu0
      %1477 = vxpose.xlu0.b32.start [1/16] %v964, 128
      %1478 = vxpose.xlu0.b32.cont [2/16] %v967, 128
      %1479 = vxpose.xlu0.b32.cont [3/16] %v972, 128
      %1480 = vxpose.xlu0.b32.cont [4/16] %v975, 128
      %1481 = vxpose.xlu0.b32.cont [5/16] 0.0, 128
      %1482 = vxpose.xlu0.b32.cont [6/16] 0.0, 128
      %1483 = vxpose.xlu0.b32.cont [7/16] 0.0, 128
      %1484 = vxpose.xlu0.b32.cont [8/16] 0.0, 128
      %1485 = vxpose.xlu0.b32.cont [9/16] 0.0, 128
      %1486 = vxpose.xlu0.b32.cont [10/16] 0.0, 128
      %1487 = vxpose.xlu0.b32.cont [11/16] 0.0, 128
      %1488 = vxpose.xlu0.b32.cont [12/16] 0.0, 128
      %1489 = vxpose.xlu0.b32.cont [13/16] 0.0, 128
      %1490 = vxpose.xlu0.b32.cont [14/16] 0.0, 128
      %1491 = vxpose.xlu0.b32.cont [15/16] 0.0, 128
      %1492 = vxpose.xlu0.b32.end [16/16] 0.0, 128
      %v1493 = vpop.trf.xlu0
      %v1494 = vpop.trf.xlu0
      %v1495 = vpop.trf.xlu0
      %v1496 = vpop.trf.xlu0
      %v1497 = vpop.trf.xlu0
      %v1498 = vpop.trf.xlu0
      %v1499 = vpop.trf.xlu0
      %v1500 = vpop.trf.xlu0
      %v1501 = vpop.trf.xlu0
      %v1502 = vpop.trf.xlu0
      %v1503 = vpop.trf.xlu0
      %v1504 = vpop.trf.xlu0
      %v1505 = vpop.trf.xlu0
      %v1506 = vpop.trf.xlu0
      %v1507 = vpop.trf.xlu0
      %v1508 = vpop.trf.xlu0
      %1509 = vxpose.xlu0.b32.start [1/16] %v1031, 128
      %1510 = vxpose.xlu0.b32.cont [2/16] %v1034, 128
      %1511 = vxpose.xlu0.b32.cont [3/16] %v1039, 128
      %1512 = vxpose.xlu0.b32.cont [4/16] %v1042, 128
      %1513 = vxpose.xlu0.b32.cont [5/16] 0.0, 128
      %1514 = vxpose.xlu0.b32.cont [6/16] 0.0, 128
      %1515 = vxpose.xlu0.b32.cont [7/16] 0.0, 128
      %1516 = vxpose.xlu0.b32.cont [8/16] 0.0, 128
      %1517 = vxpose.xlu0.b32.cont [9/16] 0.0, 128
      %1518 = vxpose.xlu0.b32.cont [10/16] 0.0, 128
      %1519 = vxpose.xlu0.b32.cont [11/16] 0.0, 128
      %1520 = vxpose.xlu0.b32.cont [12/16] 0.0, 128
      %1521 = vxpose.xlu0.b32.cont [13/16] 0.0, 128
      %1522 = vxpose.xlu0.b32.cont [14/16] 0.0, 128
      %1523 = vxpose.xlu0.b32.cont [15/16] 0.0, 128
      %1524 = vxpose.xlu0.b32.end [16/16] 0.0, 128
      %v1525 = vpop.trf.xlu0
      %v1526 = vpop.trf.xlu0
      %v1527 = vpop.trf.xlu0
      %v1528 = vpop.trf.xlu0
      %v1529 = vpop.trf.xlu0
      %v1530 = vpop.trf.xlu0
      %v1531 = vpop.trf.xlu0
      %v1532 = vpop.trf.xlu0
      %v1533 = vpop.trf.xlu0
      %v1534 = vpop.trf.xlu0
      %v1535 = vpop.trf.xlu0
      %v1536 = vpop.trf.xlu0
      %v1537 = vpop.trf.xlu0
      %v1538 = vpop.trf.xlu0
      %v1539 = vpop.trf.xlu0
      %v1540 = vpop.trf.xlu0
      %1541 = vxpose.xlu0.b32.start [1/16] %v1047, 128
      %1542 = vxpose.xlu0.b32.cont [2/16] %v1050, 128
      %1543 = vxpose.xlu0.b32.cont [3/16] %v1055, 128
      %1544 = vxpose.xlu0.b32.cont [4/16] %v1058, 128
      %1545 = vxpose.xlu0.b32.cont [5/16] 0.0, 128
      %1546 = vxpose.xlu0.b32.cont [6/16] 0.0, 128
      %1547 = vxpose.xlu0.b32.cont [7/16] 0.0, 128
      %1548 = vxpose.xlu0.b32.cont [8/16] 0.0, 128
      %1549 = vxpose.xlu0.b32.cont [9/16] 0.0, 128
      %1550 = vxpose.xlu0.b32.cont [10/16] 0.0, 128
      %1551 = vxpose.xlu0.b32.cont [11/16] 0.0, 128
      %1552 = vxpose.xlu0.b32.cont [12/16] 0.0, 128
      %1553 = vxpose.xlu0.b32.cont [13/16] 0.0, 128
      %1554 = vxpose.xlu0.b32.cont [14/16] 0.0, 128
      %1555 = vxpose.xlu0.b32.cont [15/16] 0.0, 128
      %1556 = vxpose.xlu0.b32.end [16/16] 0.0, 128
      %v1557 = vpop.trf.xlu0
      %v1558 = vpop.trf.xlu0
      %v1559 = vpop.trf.xlu0
      %v1560 = vpop.trf.xlu0
      %v1561 = vpop.trf.xlu0
      %v1562 = vpop.trf.xlu0
      %v1563 = vpop.trf.xlu0
      %v1564 = vpop.trf.xlu0
      %v1565 = vpop.trf.xlu0
      %v1566 = vpop.trf.xlu0
      %v1567 = vpop.trf.xlu0
      %v1568 = vpop.trf.xlu0
      %v1569 = vpop.trf.xlu0
      %v1570 = vpop.trf.xlu0
      %v1571 = vpop.trf.xlu0
      %v1572 = vpop.trf.xlu0
      %v1573 = vlaneseq
      %v1574 = vand.u32 %v1573, 127
      %vm1575 = vcmp.lt.s32.totalorder %v1574, 32
      %v1576 = vpack.c.bf16 %v1078, %v1077
      %v1577 = vpack.c.bf16 %v1110, %v1109
      %v1578 = vpack.c.bf16 %v1142, %v1141
      %v1579 = vpack.c.bf16 %v1174, %v1173
      %v1580 = vpack.c.bf16 %v1206, %v1205
      %v1581 = vpack.c.bf16 %v1238, %v1237
      %v1582 = vpack.c.bf16 %v1270, %v1269
      %v1583 = vpack.c.bf16 %v1302, %v1301
      %v1584 = vpack.c.bf16 %v1334, %v1333
      %v1585 = vpack.c.bf16 %v1366, %v1365
      %v1586 = vpack.c.bf16 %v1398, %v1397
      %v1587 = vpack.c.bf16 %v1430, %v1429
      %v1588 = vpack.c.bf16 %v1462, %v1461
      %v1589 = vpack.c.bf16 %v1494, %v1493
      %v1590 = vpack.c.bf16 %v1526, %v1525
      %v1591 = vpack.c.bf16 %v1558, %v1557
      %v1592 = vld [vmem:[%s3] sm:$0xf]
      %v1593 = vld [vmem:[%s3 + $0x4] sm:$0xf]
      %v1594 = vld [vmem:[%s3 + $0x8] sm:$0xf]
      %v1595 = vld [vmem:[%s3 + $0xc] sm:$0xf]
      %v1600 = vunpack.c.l.b16 %v1592
      %v1601 = vunpack.c.l.b16 %v1593
      %v1602 = vunpack.c.l.b16 %v1594
      %v1603 = vunpack.c.l.b16 %v1595
      %v1604 = vpack.c.b16 %v1601, %v1600
      %v1605 = vpack.c.b16 %v1603, %v1602
      %vm1608 = vcmask 261120
      %v1610 = vsel %vm1608, %v1576, 0
      %v1613 = vsel %vm1608, %v1577, 0
      %v1616 = vsel %vm1608, %v1578, 0
      %v1619 = vsel %vm1608, %v1579, 0
      %v1622 = vsel %vm1608, %v1580, 0
      %v1625 = vsel %vm1608, %v1581, 0
      %v1628 = vsel %vm1608, %v1582, 0
      %v1631 = vsel %vm1608, %v1583, 0
      %v1634 = vsel %vm1608, %v1584, 0
      %v1637 = vsel %vm1608, %v1585, 0
      %v1640 = vsel %vm1608, %v1586, 0
      %v1643 = vsel %vm1608, %v1587, 0
      %v1646 = vsel %vm1608, %v1588, 0
      %v1649 = vsel %vm1608, %v1589, 0
      %v1652 = vsel %vm1608, %v1590, 0
      %v1655 = vsel %vm1608, %v1591, 0
      %1657 = vmatprep.subr.bf16.mxu0 0
      %1658 = vmatpush1.bf16.msra.mxu0 %v1604
      %1659 = vmatprep.subr.bf16.mxu0 0
      %1660 = vmatpush1.bf16.msra.mxu0 %v1605
      %1661 = vmatprep.subr.bf16.mxu0 0
      %1662 = vmatpush1.bf16.msra.mxu0 0
      %1663 = vmatprep.subr.bf16.mxu0 0
      %1664 = vmatpush1.bf16.msra.mxu0 0
      %1665 = vmatprep.subr.bf16.mxu0 0
      %1666 = vmatpush1.bf16.msra.mxu0 0
      %1667 = vmatprep.subr.bf16.mxu0 0
      %1668 = vmatpush1.bf16.msra.mxu0 0
      %1669 = vmatprep.subr.bf16.mxu0 0
      %1670 = vmatpush1.bf16.msra.mxu0 0
      %1671 = vmatprep.subr.bf16.mxu0 0
      %1672 = vmatpush1.bf16.msra.mxu0 0
      %1673 = vmatprep.subr.bf16.mxu0 0
      %1674 = vmatpush1.bf16.msra.mxu0 0
      %1675 = vmatprep.subr.bf16.mxu0 0
      %1676 = vmatpush1.bf16.msra.mxu0 0
      %1677 = vmatprep.subr.bf16.mxu0 0
      %1678 = vmatpush1.bf16.msra.mxu0 0
      %1679 = vmatprep.subr.bf16.mxu0 0
      %1680 = vmatpush1.bf16.msra.mxu0 0
      %1681 = vmatprep.subr.bf16.mxu0 0
      %1682 = vmatpush1.bf16.msra.mxu0 0
      %1683 = vmatprep.subr.bf16.mxu0 0
      %1684 = vmatpush1.bf16.msra.mxu0 0
      %1685 = vmatprep.subr.bf16.mxu0 0
      %1686 = vmatpush1.bf16.msra.mxu0 0
      %1687 = vmatprep.subr.bf16.mxu0 0
      %1688 = vmatpush1.bf16.msra.mxu0 0
      %1689 = vmatprep.mubr.bf16.mxu0 0
      %1690 = vmatmul.mubr.bf16.gmra.mrb[0].mxu0 %v1610
      %v1691 = vpop.f32.mrb[0].mxu0
      %v1692 = vadd.f32 0.0, %v1691
      %v1693 = vpop.f32.mrb[0].mxu0
      %v1694 = vpop.f32.mrb[0].mxu0
      %v1695 = vadd.f32 0.0, %v1694
      %v1696 = vpop.f32.mrb[0].mxu0
      %1697 = vmatprep.mubr.bf16.mxu0 0
      %1698 = vmatmul.mubr.bf16.gmra.mrb[0].mxu0 %v1613
      %v1699 = vpop.f32.mrb[0].mxu0
      %v1700 = vadd.f32 0.0, %v1699
      %v1701 = vpop.f32.mrb[0].mxu0
      %v1702 = vpop.f32.mrb[0].mxu0
      %v1703 = vadd.f32 0.0, %v1702
      %v1704 = vpop.f32.mrb[0].mxu0
      %1705 = vmatprep.mubr.bf16.mxu0 0
      %1706 = vmatmul.mubr.bf16.gmra.mrb[0].mxu0 %v1616
      %v1707 = vpop.f32.mrb[0].mxu0
      %v1708 = vadd.f32 0.0, %v1707
      %v1709 = vpop.f32.mrb[0].mxu0
      %v1710 = vpop.f32.mrb[0].mxu0
      %v1711 = vadd.f32 0.0, %v1710
      %v1712 = vpop.f32.mrb[0].mxu0
      %1713 = vmatprep.mubr.bf16.mxu0 0
      %1714 = vmatmul.mubr.bf16.gmra.mrb[0].mxu0 %v1619
      %v1715 = vpop.f32.mrb[0].mxu0
      %v1716 = vadd.f32 0.0, %v1715
      %v1717 = vpop.f32.mrb[0].mxu0
      %v1718 = vpop.f32.mrb[0].mxu0
      %v1719 = vadd.f32 0.0, %v1718
      %v1720 = vpop.f32.mrb[0].mxu0
      %1721 = vmatprep.mubr.bf16.mxu0 0
      %1722 = vmatmul.mubr.bf16.gmra.mrb[0].mxu0 %v1622
      %v1723 = vpop.f32.mrb[0].mxu0
      %v1724 = vadd.f32 0.0, %v1723
      %v1725 = vpop.f32.mrb[0].mxu0
      %v1726 = vpop.f32.mrb[0].mxu0
      %v1727 = vadd.f32 0.0, %v1726
      %v1728 = vpop.f32.mrb[0].mxu0
      %1729 = vmatprep.mubr.bf16.mxu0 0
      %1730 = vmatmul.mubr.bf16.gmra.mrb[0].mxu0 %v1625
      %v1731 = vpop.f32.mrb[0].mxu0
      %v1732 = vadd.f32 0.0, %v1731
      %v1733 = vpop.f32.mrb[0].mxu0
      %v1734 = vpop.f32.mrb[0].mxu0
      %v1735 = vadd.f32 0.0, %v1734
      %v1736 = vpop.f32.mrb[0].mxu0
      %1737 = vmatprep.mubr.bf16.mxu0 0
      %1738 = vmatmul.mubr.bf16.gmra.mrb[0].mxu0 %v1628
      %v1739 = vpop.f32.mrb[0].mxu0
      %v1740 = vadd.f32 0.0, %v1739
      %v1741 = vpop.f32.mrb[0].mxu0
      %v1742 = vpop.f32.mrb[0].mxu0
      %v1743 = vadd.f32 0.0, %v1742
      %v1744 = vpop.f32.mrb[0].mxu0
      %1745 = vmatprep.mubr.bf16.mxu0 0
      %1746 = vmatmul.mubr.bf16.gmra.mrb[0].mxu0 %v1631
      %v1747 = vpop.f32.mrb[0].mxu0
      %v1748 = vadd.f32 0.0, %v1747
      %v1749 = vpop.f32.mrb[0].mxu0
      %v1750 = vpop.f32.mrb[0].mxu0
      %v1751 = vadd.f32 0.0, %v1750
      %v1752 = vpop.f32.mrb[0].mxu0
      %1753 = vmatprep.mubr.bf16.mxu0 0
      %1754 = vmatmul.mubr.bf16.gmra.mrb[0].mxu0 %v1634
      %v1755 = vpop.f32.mrb[0].mxu0
      %v1756 = vadd.f32 0.0, %v1755
      %v1757 = vpop.f32.mrb[0].mxu0
      %v1758 = vpop.f32.mrb[0].mxu0
      %v1759 = vadd.f32 0.0, %v1758
      %v1760 = vpop.f32.mrb[0].mxu0
      %1761 = vmatprep.mubr.bf16.mxu0 0
      %1762 = vmatmul.mubr.bf16.gmra.mrb[0].mxu0 %v1637
      %v1763 = vpop.f32.mrb[0].mxu0
      %v1764 = vadd.f32 0.0, %v1763
      %v1765 = vpop.f32.mrb[0].mxu0
      %v1766 = vpop.f32.mrb[0].mxu0
      %v1767 = vadd.f32 0.0, %v1766
      %v1768 = vpop.f32.mrb[0].mxu0
      %1769 = vmatprep.mubr.bf16.mxu0 0
      %1770 = vmatmul.mubr.bf16.gmra.mrb[0].mxu0 %v1640
      %v1771 = vpop.f32.mrb[0].mxu0
      %v1772 = vadd.f32 0.0, %v1771
      %v1773 = vpop.f32.mrb[0].mxu0
      %v1774 = vpop.f32.mrb[0].mxu0
      %v1775 = vadd.f32 0.0, %v1774
      %v1776 = vpop.f32.mrb[0].mxu0
      %1777 = vmatprep.mubr.bf16.mxu0 0
      %1778 = vmatmul.mubr.bf16.gmra.mrb[0].mxu0 %v1643
      %v1779 = vpop.f32.mrb[0].mxu0
      %v1780 = vadd.f32 0.0, %v1779
      %v1781 = vpop.f32.mrb[0].mxu0
      %v1782 = vpop.f32.mrb[0].mxu0
      %v1783 = vadd.f32 0.0, %v1782
      %v1784 = vpop.f32.mrb[0].mxu0
      %1785 = vmatprep.mubr.bf16.mxu0 0
      %1786 = vmatmul.mubr.bf16.gmra.mrb[0].mxu0 %v1646
      %v1787 = vpop.f32.mrb[0].mxu0
      %v1788 = vadd.f32 0.0, %v1787
      %v1789 = vpop.f32.mrb[0].mxu0
      %v1790 = vpop.f32.mrb[0].mxu0
      %v1791 = vadd.f32 0.0, %v1790
      %v1792 = vpop.f32.mrb[0].mxu0
      %1793 = vmatprep.mubr.bf16.mxu0 0
      %1794 = vmatmul.mubr.bf16.gmra.mrb[0].mxu0 %v1649
      %v1795 = vpop.f32.mrb[0].mxu0
      %v1796 = vadd.f32 0.0, %v1795
      %v1797 = vpop.f32.mrb[0].mxu0
      %v1798 = vpop.f32.mrb[0].mxu0
      %v1799 = vadd.f32 0.0, %v1798
      %v1800 = vpop.f32.mrb[0].mxu0
      %1801 = vmatprep.mubr.bf16.mxu0 0
      %1802 = vmatmul.mubr.bf16.gmra.mrb[0].mxu0 %v1652
      %v1803 = vpop.f32.mrb[0].mxu0
      %v1804 = vadd.f32 0.0, %v1803
      %v1805 = vpop.f32.mrb[0].mxu0
      %v1806 = vpop.f32.mrb[0].mxu0
      %v1807 = vadd.f32 0.0, %v1806
      %v1808 = vpop.f32.mrb[0].mxu0
      %1809 = vmatprep.mubr.bf16.mxu0 0
      %1810 = vmatmul.mubr.bf16.gmra.mrb[0].mxu0 %v1655
      %v1811 = vpop.f32.mrb[0].mxu0
      %v1812 = vadd.f32 0.0, %v1811
      %v1813 = vpop.f32.mrb[0].mxu0
      %v1814 = vpop.f32.mrb[0].mxu0
      %v1815 = vadd.f32 0.0, %v1814
      %v1816 = vpop.f32.mrb[0].mxu0
      %1817 = vdwg.mxu0
      %v1818 = vmax.f32 %v1692, 0.0
      %v1819 = vmax.f32 %v1695, 0.0
      %v1820 = vmax.f32 %v1700, 0.0
      %v1821 = vmax.f32 %v1703, 0.0
      %v1822 = vmax.f32 %v1708, 0.0
      %v1823 = vmax.f32 %v1711, 0.0
      %v1824 = vmax.f32 %v1716, 0.0
      %v1825 = vmax.f32 %v1719, 0.0
      %v1826 = vmax.f32 %v1724, 0.0
      %v1827 = vmax.f32 %v1727, 0.0
      %v1828 = vmax.f32 %v1732, 0.0
      %v1829 = vmax.f32 %v1735, 0.0
      %v1830 = vmax.f32 %v1740, 0.0
      %v1831 = vmax.f32 %v1743, 0.0
      %v1832 = vmax.f32 %v1748, 0.0
      %v1833 = vmax.f32 %v1751, 0.0
      %v1834 = vmax.f32 %v1756, 0.0
      %v1835 = vmax.f32 %v1759, 0.0
      %v1836 = vmax.f32 %v1764, 0.0
      %v1837 = vmax.f32 %v1767, 0.0
      %v1838 = vmax.f32 %v1772, 0.0
      %v1839 = vmax.f32 %v1775, 0.0
      %v1840 = vmax.f32 %v1780, 0.0
      %v1841 = vmax.f32 %v1783, 0.0
      %v1842 = vmax.f32 %v1788, 0.0
      %v1843 = vmax.f32 %v1791, 0.0
      %v1844 = vmax.f32 %v1796, 0.0
      %v1845 = vmax.f32 %v1799, 0.0
      %v1846 = vmax.f32 %v1804, 0.0
      %v1847 = vmax.f32 %v1807, 0.0
      %v1848 = vmax.f32 %v1812, 0.0
      %v1849 = vmax.f32 %v1815, 0.0
      %v1850 = vsel %vm1575, 1, 0
      %vm1851 = vcmp.eq.s32.totalorder %v1850, 1
      %v1852 = vsel %vm1851, %v1818, %v1692
      %v1853 = vsel %vm1851, %v1819, %v1695
      %v1854 = vsel %vm1851, %v1820, %v1700
      %v1855 = vsel %vm1851, %v1821, %v1703
      %v1856 = vsel %vm1851, %v1822, %v1708
      %v1857 = vsel %vm1851, %v1823, %v1711
      %v1858 = vsel %vm1851, %v1824, %v1716
      %v1859 = vsel %vm1851, %v1825, %v1719
      %v1860 = vsel %vm1851, %v1826, %v1724
      %v1861 = vsel %vm1851, %v1827, %v1727
      %v1862 = vsel %vm1851, %v1828, %v1732
      %v1863 = vsel %vm1851, %v1829, %v1735
      %v1864 = vsel %vm1851, %v1830, %v1740
      %v1865 = vsel %vm1851, %v1831, %v1743
      %v1866 = vsel %vm1851, %v1832, %v1748
      %v1867 = vsel %vm1851, %v1833, %v1751
      %v1868 = vsel %vm1851, %v1834, %v1756
      %v1869 = vsel %vm1851, %v1835, %v1759
      %v1870 = vsel %vm1851, %v1836, %v1764
      %v1871 = vsel %vm1851, %v1837, %v1767
      %v1872 = vsel %vm1851, %v1838, %v1772
      %v1873 = vsel %vm1851, %v1839, %v1775
      %v1874 = vsel %vm1851, %v1840, %v1780
      %v1875 = vsel %vm1851, %v1841, %v1783
      %v1876 = vsel %vm1851, %v1842, %v1788
      %v1877 = vsel %vm1851, %v1843, %v1791
      %v1878 = vsel %vm1851, %v1844, %v1796
      %v1879 = vsel %vm1851, %v1845, %v1799
      %v1880 = vsel %vm1851, %v1846, %v1804
      %v1881 = vsel %vm1851, %v1847, %v1807
      %v1882 = vsel %vm1851, %v1848, %v1812
      %v1883 = vsel %vm1851, %v1849, %v1815
      %v1884 = vpack.c.bf16 %v1853, %v1852
      %v1885 = vpack.c.bf16 %v1855, %v1854
      %v1886 = vpack.c.bf16 %v1857, %v1856
      %v1887 = vpack.c.bf16 %v1859, %v1858
      %v1888 = vpack.c.bf16 %v1861, %v1860
      %v1889 = vpack.c.bf16 %v1863, %v1862
      %v1890 = vpack.c.bf16 %v1865, %v1864
      %v1891 = vpack.c.bf16 %v1867, %v1866
      %v1892 = vpack.c.bf16 %v1869, %v1868
      %v1893 = vpack.c.bf16 %v1871, %v1870
      %v1894 = vpack.c.bf16 %v1873, %v1872
      %v1895 = vpack.c.bf16 %v1875, %v1874
      %v1896 = vpack.c.bf16 %v1877, %v1876
      %v1897 = vpack.c.bf16 %v1879, %v1878
      %v1898 = vpack.c.bf16 %v1881, %v1880
      %v1899 = vpack.c.bf16 %v1883, %v1882
      %v1900 = vld [vmem:[%s4] sm:$0xf]
      %v1901 = vld [vmem:[%s4 + $0x4] sm:$0xf]
      %v1902 = vld [vmem:[%s4 + $0x8] sm:$0xf]
      %v1903 = vld [vmem:[%s4 + $0xc] sm:$0xf]
      %v1904 = vld [vmem:[%s4 + $0x10] sm:$0xf]
      %v1905 = vld [vmem:[%s4 + $0x14] sm:$0xf]
      %v1906 = vld [vmem:[%s4 + $0x18] sm:$0xf]
      %v1907 = vld [vmem:[%s4 + $0x1c] sm:$0xf]
      %v1916 = vunpack.c.l.b16 %v1900
      %v1917 = vunpack.c.l.b16 %v1901
      %v1918 = vunpack.c.l.b16 %v1902
      %v1919 = vunpack.c.l.b16 %v1903
      %v1920 = vunpack.c.l.b16 %v1904
      %v1921 = vunpack.c.l.b16 %v1905
      %v1922 = vunpack.c.l.b16 %v1906
      %v1923 = vunpack.c.l.b16 %v1907
      %v1924 = vpack.c.b16 %v1917, %v1916
      %v1925 = vpack.c.b16 %v1919, %v1918
      %v1926 = vpack.c.b16 %v1921, %v1920
      %v1927 = vpack.c.b16 %v1923, %v1922
      %vm1932 = vcmask 523264
      %v1934 = vsel %vm1932, %v1884, 0
      %v1937 = vsel %vm1932, %v1885, 0
      %v1940 = vsel %vm1932, %v1886, 0
      %v1943 = vsel %vm1932, %v1887, 0
      %v1946 = vsel %vm1932, %v1888, 0
      %v1949 = vsel %vm1932, %v1889, 0
      %v1952 = vsel %vm1932, %v1890, 0
      %v1955 = vsel %vm1932, %v1891, 0
      %v1958 = vsel %vm1932, %v1892, 0
      %v1961 = vsel %vm1932, %v1893, 0
      %v1964 = vsel %vm1932, %v1894, 0
      %v1967 = vsel %vm1932, %v1895, 0
      %v1970 = vsel %vm1932, %v1896, 0
      %v1973 = vsel %vm1932, %v1897, 0
      %v1976 = vsel %vm1932, %v1898, 0
      %v1979 = vsel %vm1932, %v1899, 0
      %1981 = vmatprep.subr.bf16.mxu0 0
      %1982 = vmatpush1.bf16.msra.mxu0 %v1924
      %1983 = vmatprep.subr.bf16.mxu0 0
      %1984 = vmatpush1.bf16.msra.mxu0 %v1925
      %1985 = vmatprep.subr.bf16.mxu0 0
      %1986 = vmatpush1.bf16.msra.mxu0 %v1926
      %1987 = vmatprep.subr.bf16.mxu0 0
      %1988 = vmatpush1.bf16.msra.mxu0 %v1927
      %1989 = vmatprep.subr.bf16.mxu0 0
      %1990 = vmatpush1.bf16.msra.mxu0 0
      %1991 = vmatprep.subr.bf16.mxu0 0
      %1992 = vmatpush1.bf16.msra.mxu0 0
      %1993 = vmatprep.subr.bf16.mxu0 0
      %1994 = vmatpush1.bf16.msra.mxu0 0
      %1995 = vmatprep.subr.bf16.mxu0 0
      %1996 = vmatpush1.bf16.msra.mxu0 0
      %1997 = vmatprep.subr.bf16.mxu0 0
      %1998 = vmatpush1.bf16.msra.mxu0 0
      %1999 = vmatprep.subr.bf16.mxu0 0
      %2000 = vmatpush1.bf16.msra.mxu0 0
      %2001 = vmatprep.subr.bf16.mxu0 0
      %2002 = vmatpush1.bf16.msra.mxu0 0
      %2003 = vmatprep.subr.bf16.mxu0 0
      %2004 = vmatpush1.bf16.msra.mxu0 0
      %2005 = vmatprep.subr.bf16.mxu0 0
      %2006 = vmatpush1.bf16.msra.mxu0 0
      %2007 = vmatprep.subr.bf16.mxu0 0
      %2008 = vmatpush1.bf16.msra.mxu0 0
      %2009 = vmatprep.subr.bf16.mxu0 0
      %2010 = vmatpush1.bf16.msra.mxu0 0
      %2011 = vmatprep.subr.bf16.mxu0 0
      %2012 = vmatpush1.bf16.msra.mxu0 0
      %2013 = vmatprep.mubr.bf16.mxu0 0
      %2014 = vmatmul.mubr.bf16.gmra.mrb[0].mxu0 %v1934
      %v2015 = vpop.f32.mrb[0].mxu0
      %v2016 = vadd.f32 0.0, %v2015
      %v2017 = vpop.f32.mrb[0].mxu0
      %v2018 = vpop.f32.mrb[0].mxu0
      %v2019 = vadd.f32 0.0, %v2018
      %v2020 = vpop.f32.mrb[0].mxu0
      %2021 = vmatprep.mubr.bf16.mxu0 0
      %2022 = vmatmul.mubr.bf16.gmra.mrb[0].mxu0 %v1937
      %v2023 = vpop.f32.mrb[0].mxu0
      %v2024 = vadd.f32 0.0, %v2023
      %v2025 = vpop.f32.mrb[0].mxu0
      %v2026 = vpop.f32.mrb[0].mxu0
      %v2027 = vadd.f32 0.0, %v2026
      %v2028 = vpop.f32.mrb[0].mxu0
      %2029 = vmatprep.mubr.bf16.mxu0 0
      %2030 = vmatmul.mubr.bf16.gmra.mrb[0].mxu0 %v1940
      %v2031 = vpop.f32.mrb[0].mxu0
      %v2032 = vadd.f32 0.0, %v2031
      %v2033 = vpop.f32.mrb[0].mxu0
      %v2034 = vpop.f32.mrb[0].mxu0
      %v2035 = vadd.f32 0.0, %v2034
      %v2036 = vpop.f32.mrb[0].mxu0
      %2037 = vmatprep.mubr.bf16.mxu0 0
      %2038 = vmatmul.mubr.bf16.gmra.mrb[0].mxu0 %v1943
      %v2039 = vpop.f32.mrb[0].mxu0
      %v2040 = vadd.f32 0.0, %v2039
      %v2041 = vpop.f32.mrb[0].mxu0
      %v2042 = vpop.f32.mrb[0].mxu0
      %v2043 = vadd.f32 0.0, %v2042
      %v2044 = vpop.f32.mrb[0].mxu0
      %2045 = vmatprep.mubr.bf16.mxu0 0
      %2046 = vmatmul.mubr.bf16.gmra.mrb[0].mxu0 %v1946
      %v2047 = vpop.f32.mrb[0].mxu0
      %v2048 = vadd.f32 0.0, %v2047
      %v2049 = vpop.f32.mrb[0].mxu0
      %v2050 = vpop.f32.mrb[0].mxu0
      %v2051 = vadd.f32 0.0, %v2050
      %v2052 = vpop.f32.mrb[0].mxu0
      %2053 = vmatprep.mubr.bf16.mxu0 0
      %2054 = vmatmul.mubr.bf16.gmra.mrb[0].mxu0 %v1949
      %v2055 = vpop.f32.mrb[0].mxu0
      %v2056 = vadd.f32 0.0, %v2055
      %v2057 = vpop.f32.mrb[0].mxu0
      %v2058 = vpop.f32.mrb[0].mxu0
      %v2059 = vadd.f32 0.0, %v2058
      %v2060 = vpop.f32.mrb[0].mxu0
      %2061 = vmatprep.mubr.bf16.mxu0 0
      %2062 = vmatmul.mubr.bf16.gmra.mrb[0].mxu0 %v1952
      %v2063 = vpop.f32.mrb[0].mxu0
      %v2064 = vadd.f32 0.0, %v2063
      %v2065 = vpop.f32.mrb[0].mxu0
      %v2066 = vpop.f32.mrb[0].mxu0
      %v2067 = vadd.f32 0.0, %v2066
      %v2068 = vpop.f32.mrb[0].mxu0
      %2069 = vmatprep.mubr.bf16.mxu0 0
      %2070 = vmatmul.mubr.bf16.gmra.mrb[0].mxu0 %v1955
      %v2071 = vpop.f32.mrb[0].mxu0
      %v2072 = vadd.f32 0.0, %v2071
      %v2073 = vpop.f32.mrb[0].mxu0
      %v2074 = vpop.f32.mrb[0].mxu0
      %v2075 = vadd.f32 0.0, %v2074
      %v2076 = vpop.f32.mrb[0].mxu0
      %2077 = vmatprep.mubr.bf16.mxu0 0
      %2078 = vmatmul.mubr.bf16.gmra.mrb[0].mxu0 %v1958
      %v2079 = vpop.f32.mrb[0].mxu0
      %v2080 = vadd.f32 0.0, %v2079
      %v2081 = vpop.f32.mrb[0].mxu0
      %v2082 = vpop.f32.mrb[0].mxu0
      %v2083 = vadd.f32 0.0, %v2082
      %v2084 = vpop.f32.mrb[0].mxu0
      %2085 = vmatprep.mubr.bf16.mxu0 0
      %2086 = vmatmul.mubr.bf16.gmra.mrb[0].mxu0 %v1961
      %v2087 = vpop.f32.mrb[0].mxu0
      %v2088 = vadd.f32 0.0, %v2087
      %v2089 = vpop.f32.mrb[0].mxu0
      %v2090 = vpop.f32.mrb[0].mxu0
      %v2091 = vadd.f32 0.0, %v2090
      %v2092 = vpop.f32.mrb[0].mxu0
      %2093 = vmatprep.mubr.bf16.mxu0 0
      %2094 = vmatmul.mubr.bf16.gmra.mrb[0].mxu0 %v1964
      %v2095 = vpop.f32.mrb[0].mxu0
      %v2096 = vadd.f32 0.0, %v2095
      %v2097 = vpop.f32.mrb[0].mxu0
      %v2098 = vpop.f32.mrb[0].mxu0
      %v2099 = vadd.f32 0.0, %v2098
      %v2100 = vpop.f32.mrb[0].mxu0
      %2101 = vmatprep.mubr.bf16.mxu0 0
      %2102 = vmatmul.mubr.bf16.gmra.mrb[0].mxu0 %v1967
      %v2103 = vpop.f32.mrb[0].mxu0
      %v2104 = vadd.f32 0.0, %v2103
      %v2105 = vpop.f32.mrb[0].mxu0
      %v2106 = vpop.f32.mrb[0].mxu0
      %v2107 = vadd.f32 0.0, %v2106
      %v2108 = vpop.f32.mrb[0].mxu0
      %2109 = vmatprep.mubr.bf16.mxu0 0
      %2110 = vmatmul.mubr.bf16.gmra.mrb[0].mxu0 %v1970
      %v2111 = vpop.f32.mrb[0].mxu0
      %v2112 = vadd.f32 0.0, %v2111
      %v2113 = vpop.f32.mrb[0].mxu0
      %v2114 = vpop.f32.mrb[0].mxu0
      %v2115 = vadd.f32 0.0, %v2114
      %v2116 = vpop.f32.mrb[0].mxu0
      %2117 = vmatprep.mubr.bf16.mxu0 0
      %2118 = vmatmul.mubr.bf16.gmra.mrb[0].mxu0 %v1973
      %v2119 = vpop.f32.mrb[0].mxu0
      %v2120 = vadd.f32 0.0, %v2119
      %v2121 = vpop.f32.mrb[0].mxu0
      %v2122 = vpop.f32.mrb[0].mxu0
      %v2123 = vadd.f32 0.0, %v2122
      %v2124 = vpop.f32.mrb[0].mxu0
      %2125 = vmatprep.mubr.bf16.mxu0 0
      %2126 = vmatmul.mubr.bf16.gmra.mrb[0].mxu0 %v1976
      %v2127 = vpop.f32.mrb[0].mxu0
      %v2128 = vadd.f32 0.0, %v2127
      %v2129 = vpop.f32.mrb[0].mxu0
      %v2130 = vpop.f32.mrb[0].mxu0
      %v2131 = vadd.f32 0.0, %v2130
      %v2132 = vpop.f32.mrb[0].mxu0
      %2133 = vmatprep.mubr.bf16.mxu0 0
      %2134 = vmatmul.mubr.bf16.gmra.mrb[0].mxu0 %v1979
      %v2135 = vpop.f32.mrb[0].mxu0
      %v2136 = vadd.f32 0.0, %v2135
      %v2137 = vpop.f32.mrb[0].mxu0
      %v2138 = vpop.f32.mrb[0].mxu0
      %v2139 = vadd.f32 0.0, %v2138
      %v2140 = vpop.f32.mrb[0].mxu0
      %2141 = vdwg.mxu0
      %2142 = vxpose.xlu0.b32.start [1/16] %v2016, 128
      %2143 = vxpose.xlu0.b32.cont [2/16] %v2019, 128
      %2144 = vxpose.xlu0.b32.cont [3/16] 0.0, 128
      %2145 = vxpose.xlu0.b32.cont [4/16] 0.0, 128
      %2146 = vxpose.xlu0.b32.cont [5/16] 0.0, 128
      %2147 = vxpose.xlu0.b32.cont [6/16] 0.0, 128
      %2148 = vxpose.xlu0.b32.cont [7/16] 0.0, 128
      %2149 = vxpose.xlu0.b32.cont [8/16] 0.0, 128
      %2150 = vxpose.xlu0.b32.cont [9/16] 0.0, 128
      %2151 = vxpose.xlu0.b32.cont [10/16] 0.0, 128
      %2152 = vxpose.xlu0.b32.cont [11/16] 0.0, 128
      %2153 = vxpose.xlu0.b32.cont [12/16] 0.0, 128
      %2154 = vxpose.xlu0.b32.cont [13/16] 0.0, 128
      %2155 = vxpose.xlu0.b32.cont [14/16] 0.0, 128
      %2156 = vxpose.xlu0.b32.cont [15/16] 0.0, 128
      %2157 = vxpose.xlu0.b32.end [16/16] 0.0, 128
      %v2158 = vpop.trf.xlu0
      %v2159 = vpop.trf.xlu0
      %v2160 = vpop.trf.xlu0
      %v2161 = vpop.trf.xlu0
      %v2162 = vpop.trf.xlu0
      %v2163 = vpop.trf.xlu0
      %v2164 = vpop.trf.xlu0
      %v2165 = vpop.trf.xlu0
      %v2166 = vpop.trf.xlu0
      %v2167 = vpop.trf.xlu0
      %v2168 = vpop.trf.xlu0
      %v2169 = vpop.trf.xlu0
      %v2170 = vpop.trf.xlu0
      %v2171 = vpop.trf.xlu0
      %v2172 = vpop.trf.xlu0
      %v2173 = vpop.trf.xlu0
      %2174 = vxpose.xlu0.b32.start [1/16] %v2024, 128
      %2175 = vxpose.xlu0.b32.cont [2/16] %v2027, 128
      %2176 = vxpose.xlu0.b32.cont [3/16] 0.0, 128
      %2177 = vxpose.xlu0.b32.cont [4/16] 0.0, 128
      %2178 = vxpose.xlu0.b32.cont [5/16] 0.0, 128
      %2179 = vxpose.xlu0.b32.cont [6/16] 0.0, 128
      %2180 = vxpose.xlu0.b32.cont [7/16] 0.0, 128
      %2181 = vxpose.xlu0.b32.cont [8/16] 0.0, 128
      %2182 = vxpose.xlu0.b32.cont [9/16] 0.0, 128
      %2183 = vxpose.xlu0.b32.cont [10/16] 0.0, 128
      %2184 = vxpose.xlu0.b32.cont [11/16] 0.0, 128
      %2185 = vxpose.xlu0.b32.cont [12/16] 0.0, 128
      %2186 = vxpose.xlu0.b32.cont [13/16] 0.0, 128
      %2187 = vxpose.xlu0.b32.cont [14/16] 0.0, 128
      %2188 = vxpose.xlu0.b32.cont [15/16] 0.0, 128
      %2189 = vxpose.xlu0.b32.end [16/16] 0.0, 128
      %v2190 = vpop.trf.xlu0
      %v2191 = vpop.trf.xlu0
      %v2192 = vpop.trf.xlu0
      %v2193 = vpop.trf.xlu0
      %v2194 = vpop.trf.xlu0
      %v2195 = vpop.trf.xlu0
      %v2196 = vpop.trf.xlu0
      %v2197 = vpop.trf.xlu0
      %v2198 = vpop.trf.xlu0
      %v2199 = vpop.trf.xlu0
      %v2200 = vpop.trf.xlu0
      %v2201 = vpop.trf.xlu0
      %v2202 = vpop.trf.xlu0
      %v2203 = vpop.trf.xlu0
      %v2204 = vpop.trf.xlu0
      %v2205 = vpop.trf.xlu0
      %2206 = vxpose.xlu0.b32.start [1/16] %v2032, 128
      %2207 = vxpose.xlu0.b32.cont [2/16] %v2035, 128
      %2208 = vxpose.xlu0.b32.cont [3/16] 0.0, 128
      %2209 = vxpose.xlu0.b32.cont [4/16] 0.0, 128
      %2210 = vxpose.xlu0.b32.cont [5/16] 0.0, 128
      %2211 = vxpose.xlu0.b32.cont [6/16] 0.0, 128
      %2212 = vxpose.xlu0.b32.cont [7/16] 0.0, 128
      %2213 = vxpose.xlu0.b32.cont [8/16] 0.0, 128
      %2214 = vxpose.xlu0.b32.cont [9/16] 0.0, 128
      %2215 = vxpose.xlu0.b32.cont [10/16] 0.0, 128
      %2216 = vxpose.xlu0.b32.cont [11/16] 0.0, 128
      %2217 = vxpose.xlu0.b32.cont [12/16] 0.0, 128
      %2218 = vxpose.xlu0.b32.cont [13/16] 0.0, 128
      %2219 = vxpose.xlu0.b32.cont [14/16] 0.0, 128
      %2220 = vxpose.xlu0.b32.cont [15/16] 0.0, 128
      %2221 = vxpose.xlu0.b32.end [16/16] 0.0, 128
      %v2222 = vpop.trf.xlu0
      %v2223 = vpop.trf.xlu0
      %v2224 = vpop.trf.xlu0
      %v2225 = vpop.trf.xlu0
      %v2226 = vpop.trf.xlu0
      %v2227 = vpop.trf.xlu0
      %v2228 = vpop.trf.xlu0
      %v2229 = vpop.trf.xlu0
      %v2230 = vpop.trf.xlu0
      %v2231 = vpop.trf.xlu0
      %v2232 = vpop.trf.xlu0
      %v2233 = vpop.trf.xlu0
      %v2234 = vpop.trf.xlu0
      %v2235 = vpop.trf.xlu0
      %v2236 = vpop.trf.xlu0
      %v2237 = vpop.trf.xlu0
      %2238 = vxpose.xlu0.b32.start [1/16] %v2040, 128
      %2239 = vxpose.xlu0.b32.cont [2/16] %v2043, 128
      %2240 = vxpose.xlu0.b32.cont [3/16] 0.0, 128
      %2241 = vxpose.xlu0.b32.cont [4/16] 0.0, 128
      %2242 = vxpose.xlu0.b32.cont [5/16] 0.0, 128
      %2243 = vxpose.xlu0.b32.cont [6/16] 0.0, 128
      %2244 = vxpose.xlu0.b32.cont [7/16] 0.0, 128
      %2245 = vxpose.xlu0.b32.cont [8/16] 0.0, 128
      %2246 = vxpose.xlu0.b32.cont [9/16] 0.0, 128
      %2247 = vxpose.xlu0.b32.cont [10/16] 0.0, 128
      %2248 = vxpose.xlu0.b32.cont [11/16] 0.0, 128
      %2249 = vxpose.xlu0.b32.cont [12/16] 0.0, 128
      %2250 = vxpose.xlu0.b32.cont [13/16] 0.0, 128
      %2251 = vxpose.xlu0.b32.cont [14/16] 0.0, 128
      %2252 = vxpose.xlu0.b32.cont [15/16] 0.0, 128
      %2253 = vxpose.xlu0.b32.end [16/16] 0.0, 128
      %v2254 = vpop.trf.xlu0
      %v2255 = vpop.trf.xlu0
      %v2256 = vpop.trf.xlu0
      %v2257 = vpop.trf.xlu0
      %v2258 = vpop.trf.xlu0
      %v2259 = vpop.trf.xlu0
      %v2260 = vpop.trf.xlu0
      %v2261 = vpop.trf.xlu0
      %v2262 = vpop.trf.xlu0
      %v2263 = vpop.trf.xlu0
      %v2264 = vpop.trf.xlu0
      %v2265 = vpop.trf.xlu0
      %v2266 = vpop.trf.xlu0
      %v2267 = vpop.trf.xlu0
      %v2268 = vpop.trf.xlu0
      %v2269 = vpop.trf.xlu0
      %2270 = vxpose.xlu0.b32.start [1/16] %v2048, 128
      %2271 = vxpose.xlu0.b32.cont [2/16] %v2051, 128
      %2272 = vxpose.xlu0.b32.cont [3/16] 0.0, 128
      %2273 = vxpose.xlu0.b32.cont [4/16] 0.0, 128
      %2274 = vxpose.xlu0.b32.cont [5/16] 0.0, 128
      %2275 = vxpose.xlu0.b32.cont [6/16] 0.0, 128
      %2276 = vxpose.xlu0.b32.cont [7/16] 0.0, 128
      %2277 = vxpose.xlu0.b32.cont [8/16] 0.0, 128
      %2278 = vxpose.xlu0.b32.cont [9/16] 0.0, 128
      %2279 = vxpose.xlu0.b32.cont [10/16] 0.0, 128
      %2280 = vxpose.xlu0.b32.cont [11/16] 0.0, 128
      %2281 = vxpose.xlu0.b32.cont [12/16] 0.0, 128
      %2282 = vxpose.xlu0.b32.cont [13/16] 0.0, 128
      %2283 = vxpose.xlu0.b32.cont [14/16] 0.0, 128
      %2284 = vxpose.xlu0.b32.cont [15/16] 0.0, 128
      %2285 = vxpose.xlu0.b32.end [16/16] 0.0, 128
      %v2286 = vpop.trf.xlu0
      %v2287 = vpop.trf.xlu0
      %v2288 = vpop.trf.xlu0
      %v2289 = vpop.trf.xlu0
      %v2290 = vpop.trf.xlu0
      %v2291 = vpop.trf.xlu0
      %v2292 = vpop.trf.xlu0
      %v2293 = vpop.trf.xlu0
      %v2294 = vpop.trf.xlu0
      %v2295 = vpop.trf.xlu0
      %v2296 = vpop.trf.xlu0
      %v2297 = vpop.trf.xlu0
      %v2298 = vpop.trf.xlu0
      %v2299 = vpop.trf.xlu0
      %v2300 = vpop.trf.xlu0
      %v2301 = vpop.trf.xlu0
      %2302 = vxpose.xlu0.b32.start [1/16] %v2056, 128
      %2303 = vxpose.xlu0.b32.cont [2/16] %v2059, 128
      %2304 = vxpose.xlu0.b32.cont [3/16] 0.0, 128
      %2305 = vxpose.xlu0.b32.cont [4/16] 0.0, 128
      %2306 = vxpose.xlu0.b32.cont [5/16] 0.0, 128
      %2307 = vxpose.xlu0.b32.cont [6/16] 0.0, 128
      %2308 = vxpose.xlu0.b32.cont [7/16] 0.0, 128
      %2309 = vxpose.xlu0.b32.cont [8/16] 0.0, 128
      %2310 = vxpose.xlu0.b32.cont [9/16] 0.0, 128
      %2311 = vxpose.xlu0.b32.cont [10/16] 0.0, 128
      %2312 = vxpose.xlu0.b32.cont [11/16] 0.0, 128
      %2313 = vxpose.xlu0.b32.cont [12/16] 0.0, 128
      %2314 = vxpose.xlu0.b32.cont [13/16] 0.0, 128
      %2315 = vxpose.xlu0.b32.cont [14/16] 0.0, 128
      %2316 = vxpose.xlu0.b32.cont [15/16] 0.0, 128
      %2317 = vxpose.xlu0.b32.end [16/16] 0.0, 128
      %v2318 = vpop.trf.xlu0
      %v2319 = vpop.trf.xlu0
      %v2320 = vpop.trf.xlu0
      %v2321 = vpop.trf.xlu0
      %v2322 = vpop.trf.xlu0
      %v2323 = vpop.trf.xlu0
      %v2324 = vpop.trf.xlu0
      %v2325 = vpop.trf.xlu0
      %v2326 = vpop.trf.xlu0
      %v2327 = vpop.trf.xlu0
      %v2328 = vpop.trf.xlu0
      %v2329 = vpop.trf.xlu0
      %v2330 = vpop.trf.xlu0
      %v2331 = vpop.trf.xlu0
      %v2332 = vpop.trf.xlu0
      %v2333 = vpop.trf.xlu0
      %2334 = vxpose.xlu0.b32.start [1/16] %v2064, 128
      %2335 = vxpose.xlu0.b32.cont [2/16] %v2067, 128
      %2336 = vxpose.xlu0.b32.cont [3/16] 0.0, 128
      %2337 = vxpose.xlu0.b32.cont [4/16] 0.0, 128
      %2338 = vxpose.xlu0.b32.cont [5/16] 0.0, 128
      %2339 = vxpose.xlu0.b32.cont [6/16] 0.0, 128
      %2340 = vxpose.xlu0.b32.cont [7/16] 0.0, 128
      %2341 = vxpose.xlu0.b32.cont [8/16] 0.0, 128
      %2342 = vxpose.xlu0.b32.cont [9/16] 0.0, 128
      %2343 = vxpose.xlu0.b32.cont [10/16] 0.0, 128
      %2344 = vxpose.xlu0.b32.cont [11/16] 0.0, 128
      %2345 = vxpose.xlu0.b32.cont [12/16] 0.0, 128
      %2346 = vxpose.xlu0.b32.cont [13/16] 0.0, 128
      %2347 = vxpose.xlu0.b32.cont [14/16] 0.0, 128
      %2348 = vxpose.xlu0.b32.cont [15/16] 0.0, 128
      %2349 = vxpose.xlu0.b32.end [16/16] 0.0, 128
      %v2350 = vpop.trf.xlu0
      %v2351 = vpop.trf.xlu0
      %v2352 = vpop.trf.xlu0
      %v2353 = vpop.trf.xlu0
      %v2354 = vpop.trf.xlu0
      %v2355 = vpop.trf.xlu0
      %v2356 = vpop.trf.xlu0
      %v2357 = vpop.trf.xlu0
      %v2358 = vpop.trf.xlu0
      %v2359 = vpop.trf.xlu0
      %v2360 = vpop.trf.xlu0
      %v2361 = vpop.trf.xlu0
      %v2362 = vpop.trf.xlu0
      %v2363 = vpop.trf.xlu0
      %v2364 = vpop.trf.xlu0
      %v2365 = vpop.trf.xlu0
      %2366 = vxpose.xlu0.b32.start [1/16] %v2072, 128
      %2367 = vxpose.xlu0.b32.cont [2/16] %v2075, 128
      %2368 = vxpose.xlu0.b32.cont [3/16] 0.0, 128
      %2369 = vxpose.xlu0.b32.cont [4/16] 0.0, 128
      %2370 = vxpose.xlu0.b32.cont [5/16] 0.0, 128
      %2371 = vxpose.xlu0.b32.cont [6/16] 0.0, 128
      %2372 = vxpose.xlu0.b32.cont [7/16] 0.0, 128
      %2373 = vxpose.xlu0.b32.cont [8/16] 0.0, 128
      %2374 = vxpose.xlu0.b32.cont [9/16] 0.0, 128
      %2375 = vxpose.xlu0.b32.cont [10/16] 0.0, 128
      %2376 = vxpose.xlu0.b32.cont [11/16] 0.0, 128
      %2377 = vxpose.xlu0.b32.cont [12/16] 0.0, 128
      %2378 = vxpose.xlu0.b32.cont [13/16] 0.0, 128
      %2379 = vxpose.xlu0.b32.cont [14/16] 0.0, 128
      %2380 = vxpose.xlu0.b32.cont [15/16] 0.0, 128
      %2381 = vxpose.xlu0.b32.end [16/16] 0.0, 128
      %v2382 = vpop.trf.xlu0
      %v2383 = vpop.trf.xlu0
      %v2384 = vpop.trf.xlu0
      %v2385 = vpop.trf.xlu0
      %v2386 = vpop.trf.xlu0
      %v2387 = vpop.trf.xlu0
      %v2388 = vpop.trf.xlu0
      %v2389 = vpop.trf.xlu0
      %v2390 = vpop.trf.xlu0
      %v2391 = vpop.trf.xlu0
      %v2392 = vpop.trf.xlu0
      %v2393 = vpop.trf.xlu0
      %v2394 = vpop.trf.xlu0
      %v2395 = vpop.trf.xlu0
      %v2396 = vpop.trf.xlu0
      %v2397 = vpop.trf.xlu0
      %2398 = vxpose.xlu0.b32.start [1/16] %v2080, 128
      %2399 = vxpose.xlu0.b32.cont [2/16] %v2083, 128
      %2400 = vxpose.xlu0.b32.cont [3/16] 0.0, 128
      %2401 = vxpose.xlu0.b32.cont [4/16] 0.0, 128
      %2402 = vxpose.xlu0.b32.cont [5/16] 0.0, 128
      %2403 = vxpose.xlu0.b32.cont [6/16] 0.0, 128
      %2404 = vxpose.xlu0.b32.cont [7/16] 0.0, 128
      %2405 = vxpose.xlu0.b32.cont [8/16] 0.0, 128
      %2406 = vxpose.xlu0.b32.cont [9/16] 0.0, 128
      %2407 = vxpose.xlu0.b32.cont [10/16] 0.0, 128
      %2408 = vxpose.xlu0.b32.cont [11/16] 0.0, 128
      %2409 = vxpose.xlu0.b32.cont [12/16] 0.0, 128
      %2410 = vxpose.xlu0.b32.cont [13/16] 0.0, 128
      %2411 = vxpose.xlu0.b32.cont [14/16] 0.0, 128
      %2412 = vxpose.xlu0.b32.cont [15/16] 0.0, 128
      %2413 = vxpose.xlu0.b32.end [16/16] 0.0, 128
      %v2414 = vpop.trf.xlu0
      %v2415 = vpop.trf.xlu0
      %v2416 = vpop.trf.xlu0
      %v2417 = vpop.trf.xlu0
      %v2418 = vpop.trf.xlu0
      %v2419 = vpop.trf.xlu0
      %v2420 = vpop.trf.xlu0
      %v2421 = vpop.trf.xlu0
      %v2422 = vpop.trf.xlu0
      %v2423 = vpop.trf.xlu0
      %v2424 = vpop.trf.xlu0
      %v2425 = vpop.trf.xlu0
      %v2426 = vpop.trf.xlu0
      %v2427 = vpop.trf.xlu0
      %v2428 = vpop.trf.xlu0
      %v2429 = vpop.trf.xlu0
      %2430 = vxpose.xlu0.b32.start [1/16] %v2088, 128
      %2431 = vxpose.xlu0.b32.cont [2/16] %v2091, 128
      %2432 = vxpose.xlu0.b32.cont [3/16] 0.0, 128
      %2433 = vxpose.xlu0.b32.cont [4/16] 0.0, 128
      %2434 = vxpose.xlu0.b32.cont [5/16] 0.0, 128
      %2435 = vxpose.xlu0.b32.cont [6/16] 0.0, 128
      %2436 = vxpose.xlu0.b32.cont [7/16] 0.0, 128
      %2437 = vxpose.xlu0.b32.cont [8/16] 0.0, 128
      %2438 = vxpose.xlu0.b32.cont [9/16] 0.0, 128
      %2439 = vxpose.xlu0.b32.cont [10/16] 0.0, 128
      %2440 = vxpose.xlu0.b32.cont [11/16] 0.0, 128
      %2441 = vxpose.xlu0.b32.cont [12/16] 0.0, 128
      %2442 = vxpose.xlu0.b32.cont [13/16] 0.0, 128
      %2443 = vxpose.xlu0.b32.cont [14/16] 0.0, 128
      %2444 = vxpose.xlu0.b32.cont [15/16] 0.0, 128
      %2445 = vxpose.xlu0.b32.end [16/16] 0.0, 128
      %v2446 = vpop.trf.xlu0
      %v2447 = vpop.trf.xlu0
      %v2448 = vpop.trf.xlu0
      %v2449 = vpop.trf.xlu0
      %v2450 = vpop.trf.xlu0
      %v2451 = vpop.trf.xlu0
      %v2452 = vpop.trf.xlu0
      %v2453 = vpop.trf.xlu0
      %v2454 = vpop.trf.xlu0
      %v2455 = vpop.trf.xlu0
      %v2456 = vpop.trf.xlu0
      %v2457 = vpop.trf.xlu0
      %v2458 = vpop.trf.xlu0
      %v2459 = vpop.trf.xlu0
      %v2460 = vpop.trf.xlu0
      %v2461 = vpop.trf.xlu0
      %2462 = vxpose.xlu0.b32.start [1/16] %v2096, 128
      %2463 = vxpose.xlu0.b32.cont [2/16] %v2099, 128
      %2464 = vxpose.xlu0.b32.cont [3/16] 0.0, 128
      %2465 = vxpose.xlu0.b32.cont [4/16] 0.0, 128
      %2466 = vxpose.xlu0.b32.cont [5/16] 0.0, 128
      %2467 = vxpose.xlu0.b32.cont [6/16] 0.0, 128
      %2468 = vxpose.xlu0.b32.cont [7/16] 0.0, 128
      %2469 = vxpose.xlu0.b32.cont [8/16] 0.0, 128
      %2470 = vxpose.xlu0.b32.cont [9/16] 0.0, 128
      %2471 = vxpose.xlu0.b32.cont [10/16] 0.0, 128
      %2472 = vxpose.xlu0.b32.cont [11/16] 0.0, 128
      %2473 = vxpose.xlu0.b32.cont [12/16] 0.0, 128
      %2474 = vxpose.xlu0.b32.cont [13/16] 0.0, 128
      %2475 = vxpose.xlu0.b32.cont [14/16] 0.0, 128
      %2476 = vxpose.xlu0.b32.cont [15/16] 0.0, 128
      %2477 = vxpose.xlu0.b32.end [16/16] 0.0, 128
      %v2478 = vpop.trf.xlu0
      %v2479 = vpop.trf.xlu0
      %v2480 = vpop.trf.xlu0
      %v2481 = vpop.trf.xlu0
      %v2482 = vpop.trf.xlu0
      %v2483 = vpop.trf.xlu0
      %v2484 = vpop.trf.xlu0
      %v2485 = vpop.trf.xlu0
      %v2486 = vpop.trf.xlu0
      %v2487 = vpop.trf.xlu0
      %v2488 = vpop.trf.xlu0
      %v2489 = vpop.trf.xlu0
      %v2490 = vpop.trf.xlu0
      %v2491 = vpop.trf.xlu0
      %v2492 = vpop.trf.xlu0
      %v2493 = vpop.trf.xlu0
      %2494 = vxpose.xlu0.b32.start [1/16] %v2104, 128
      %2495 = vxpose.xlu0.b32.cont [2/16] %v2107, 128
      %2496 = vxpose.xlu0.b32.cont [3/16] 0.0, 128
      %2497 = vxpose.xlu0.b32.cont [4/16] 0.0, 128
      %2498 = vxpose.xlu0.b32.cont [5/16] 0.0, 128
      %2499 = vxpose.xlu0.b32.cont [6/16] 0.0, 128
      %2500 = vxpose.xlu0.b32.cont [7/16] 0.0, 128
      %2501 = vxpose.xlu0.b32.cont [8/16] 0.0, 128
      %2502 = vxpose.xlu0.b32.cont [9/16] 0.0, 128
      %2503 = vxpose.xlu0.b32.cont [10/16] 0.0, 128
      %2504 = vxpose.xlu0.b32.cont [11/16] 0.0, 128
      %2505 = vxpose.xlu0.b32.cont [12/16] 0.0, 128
      %2506 = vxpose.xlu0.b32.cont [13/16] 0.0, 128
      %2507 = vxpose.xlu0.b32.cont [14/16] 0.0, 128
      %2508 = vxpose.xlu0.b32.cont [15/16] 0.0, 128
      %2509 = vxpose.xlu0.b32.end [16/16] 0.0, 128
      %v2510 = vpop.trf.xlu0
      %v2511 = vpop.trf.xlu0
      %v2512 = vpop.trf.xlu0
      %v2513 = vpop.trf.xlu0
      %v2514 = vpop.trf.xlu0
      %v2515 = vpop.trf.xlu0
      %v2516 = vpop.trf.xlu0
      %v2517 = vpop.trf.xlu0
      %v2518 = vpop.trf.xlu0
      %v2519 = vpop.trf.xlu0
      %v2520 = vpop.trf.xlu0
      %v2521 = vpop.trf.xlu0
      %v2522 = vpop.trf.xlu0
      %v2523 = vpop.trf.xlu0
      %v2524 = vpop.trf.xlu0
      %v2525 = vpop.trf.xlu0
      %2526 = vxpose.xlu0.b32.start [1/16] %v2112, 128
      %2527 = vxpose.xlu0.b32.cont [2/16] %v2115, 128
      %2528 = vxpose.xlu0.b32.cont [3/16] 0.0, 128
      %2529 = vxpose.xlu0.b32.cont [4/16] 0.0, 128
      %2530 = vxpose.xlu0.b32.cont [5/16] 0.0, 128
      %2531 = vxpose.xlu0.b32.cont [6/16] 0.0, 128
      %2532 = vxpose.xlu0.b32.cont [7/16] 0.0, 128
      %2533 = vxpose.xlu0.b32.cont [8/16] 0.0, 128
      %2534 = vxpose.xlu0.b32.cont [9/16] 0.0, 128
      %2535 = vxpose.xlu0.b32.cont [10/16] 0.0, 128
      %2536 = vxpose.xlu0.b32.cont [11/16] 0.0, 128
      %2537 = vxpose.xlu0.b32.cont [12/16] 0.0, 128
      %2538 = vxpose.xlu0.b32.cont [13/16] 0.0, 128
      %2539 = vxpose.xlu0.b32.cont [14/16] 0.0, 128
      %2540 = vxpose.xlu0.b32.cont [15/16] 0.0, 128
      %2541 = vxpose.xlu0.b32.end [16/16] 0.0, 128
      %v2542 = vpop.trf.xlu0
      %v2543 = vpop.trf.xlu0
      %v2544 = vpop.trf.xlu0
      %v2545 = vpop.trf.xlu0
      %v2546 = vpop.trf.xlu0
      %v2547 = vpop.trf.xlu0
      %v2548 = vpop.trf.xlu0
      %v2549 = vpop.trf.xlu0
      %v2550 = vpop.trf.xlu0
      %v2551 = vpop.trf.xlu0
      %v2552 = vpop.trf.xlu0
      %v2553 = vpop.trf.xlu0
      %v2554 = vpop.trf.xlu0
      %v2555 = vpop.trf.xlu0
      %v2556 = vpop.trf.xlu0
      %v2557 = vpop.trf.xlu0
      %2558 = vxpose.xlu0.b32.start [1/16] %v2120, 128
      %2559 = vxpose.xlu0.b32.cont [2/16] %v2123, 128
      %2560 = vxpose.xlu0.b32.cont [3/16] 0.0, 128
      %2561 = vxpose.xlu0.b32.cont [4/16] 0.0, 128
      %2562 = vxpose.xlu0.b32.cont [5/16] 0.0, 128
      %2563 = vxpose.xlu0.b32.cont [6/16] 0.0, 128
      %2564 = vxpose.xlu0.b32.cont [7/16] 0.0, 128
      %2565 = vxpose.xlu0.b32.cont [8/16] 0.0, 128
      %2566 = vxpose.xlu0.b32.cont [9/16] 0.0, 128
      %2567 = vxpose.xlu0.b32.cont [10/16] 0.0, 128
      %2568 = vxpose.xlu0.b32.cont [11/16] 0.0, 128
      %2569 = vxpose.xlu0.b32.cont [12/16] 0.0, 128
      %2570 = vxpose.xlu0.b32.cont [13/16] 0.0, 128
      %2571 = vxpose.xlu0.b32.cont [14/16] 0.0, 128
      %2572 = vxpose.xlu0.b32.cont [15/16] 0.0, 128
      %2573 = vxpose.xlu0.b32.end [16/16] 0.0, 128
      %v2574 = vpop.trf.xlu0
      %v2575 = vpop.trf.xlu0
      %v2576 = vpop.trf.xlu0
      %v2577 = vpop.trf.xlu0
      %v2578 = vpop.trf.xlu0
      %v2579 = vpop.trf.xlu0
      %v2580 = vpop.trf.xlu0
      %v2581 = vpop.trf.xlu0
      %v2582 = vpop.trf.xlu0
      %v2583 = vpop.trf.xlu0
      %v2584 = vpop.trf.xlu0
      %v2585 = vpop.trf.xlu0
      %v2586 = vpop.trf.xlu0
      %v2587 = vpop.trf.xlu0
      %v2588 = vpop.trf.xlu0
      %v2589 = vpop.trf.xlu0
      %2590 = vxpose.xlu0.b32.start [1/16] %v2128, 128
      %2591 = vxpose.xlu0.b32.cont [2/16] %v2131, 128
      %2592 = vxpose.xlu0.b32.cont [3/16] 0.0, 128
      %2593 = vxpose.xlu0.b32.cont [4/16] 0.0, 128
      %2594 = vxpose.xlu0.b32.cont [5/16] 0.0, 128
      %2595 = vxpose.xlu0.b32.cont [6/16] 0.0, 128
      %2596 = vxpose.xlu0.b32.cont [7/16] 0.0, 128
      %2597 = vxpose.xlu0.b32.cont [8/16] 0.0, 128
      %2598 = vxpose.xlu0.b32.cont [9/16] 0.0, 128
      %2599 = vxpose.xlu0.b32.cont [10/16] 0.0, 128
      %2600 = vxpose.xlu0.b32.cont [11/16] 0.0, 128
      %2601 = vxpose.xlu0.b32.cont [12/16] 0.0, 128
      %2602 = vxpose.xlu0.b32.cont [13/16] 0.0, 128
      %2603 = vxpose.xlu0.b32.cont [14/16] 0.0, 128
      %2604 = vxpose.xlu0.b32.cont [15/16] 0.0, 128
      %2605 = vxpose.xlu0.b32.end [16/16] 0.0, 128
      %v2606 = vpop.trf.xlu0
      %v2607 = vpop.trf.xlu0
      %v2608 = vpop.trf.xlu0
      %v2609 = vpop.trf.xlu0
      %v2610 = vpop.trf.xlu0
      %v2611 = vpop.trf.xlu0
      %v2612 = vpop.trf.xlu0
      %v2613 = vpop.trf.xlu0
      %v2614 = vpop.trf.xlu0
      %v2615 = vpop.trf.xlu0
      %v2616 = vpop.trf.xlu0
      %v2617 = vpop.trf.xlu0
      %v2618 = vpop.trf.xlu0
      %v2619 = vpop.trf.xlu0
      %v2620 = vpop.trf.xlu0
      %v2621 = vpop.trf.xlu0
      %2622 = vxpose.xlu0.b32.start [1/16] %v2136, 128
      %2623 = vxpose.xlu0.b32.cont [2/16] %v2139, 128
      %2624 = vxpose.xlu0.b32.cont [3/16] 0.0, 128
      %2625 = vxpose.xlu0.b32.cont [4/16] 0.0, 128
      %2626 = vxpose.xlu0.b32.cont [5/16] 0.0, 128
      %2627 = vxpose.xlu0.b32.cont [6/16] 0.0, 128
      %2628 = vxpose.xlu0.b32.cont [7/16] 0.0, 128
      %2629 = vxpose.xlu0.b32.cont [8/16] 0.0, 128
      %2630 = vxpose.xlu0.b32.cont [9/16] 0.0, 128
      %2631 = vxpose.xlu0.b32.cont [10/16] 0.0, 128
      %2632 = vxpose.xlu0.b32.cont [11/16] 0.0, 128
      %2633 = vxpose.xlu0.b32.cont [12/16] 0.0, 128
      %2634 = vxpose.xlu0.b32.cont [13/16] 0.0, 128
      %2635 = vxpose.xlu0.b32.cont [14/16] 0.0, 128
      %2636 = vxpose.xlu0.b32.cont [15/16] 0.0, 128
      %2637 = vxpose.xlu0.b32.end [16/16] 0.0, 128
      %v2638 = vpop.trf.xlu0
      %v2639 = vpop.trf.xlu0
      %v2640 = vpop.trf.xlu0
      %v2641 = vpop.trf.xlu0
      %v2642 = vpop.trf.xlu0
      %v2643 = vpop.trf.xlu0
      %v2644 = vpop.trf.xlu0
      %v2645 = vpop.trf.xlu0
      %v2646 = vpop.trf.xlu0
      %v2647 = vpop.trf.xlu0
      %v2648 = vpop.trf.xlu0
      %v2649 = vpop.trf.xlu0
      %v2650 = vpop.trf.xlu0
      %v2651 = vpop.trf.xlu0
      %v2652 = vpop.trf.xlu0
      %v2653 = vpop.trf.xlu0
      %v2654 = vpack.c.bf16 %v2159, %v2158
      %v2655 = vpack.c.bf16 %v2161, %v2160
      %v2656 = vpack.c.bf16 %v2191, %v2190
      %v2657 = vpack.c.bf16 %v2193, %v2192
      %v2658 = vpack.c.bf16 %v2223, %v2222
      %v2659 = vpack.c.bf16 %v2225, %v2224
      %v2660 = vpack.c.bf16 %v2255, %v2254
      %v2661 = vpack.c.bf16 %v2257, %v2256
      %v2662 = vpack.c.bf16 %v2287, %v2286
      %v2663 = vpack.c.bf16 %v2289, %v2288
      %v2664 = vpack.c.bf16 %v2319, %v2318
      %v2665 = vpack.c.bf16 %v2321, %v2320
      %v2666 = vpack.c.bf16 %v2351, %v2350
      %v2667 = vpack.c.bf16 %v2353, %v2352
      %v2668 = vpack.c.bf16 %v2383, %v2382
      %v2669 = vpack.c.bf16 %v2385, %v2384
      %v2670 = vpack.c.bf16 %v2415, %v2414
      %v2671 = vpack.c.bf16 %v2417, %v2416
      %v2672 = vpack.c.bf16 %v2447, %v2446
      %v2673 = vpack.c.bf16 %v2449, %v2448
      %v2674 = vpack.c.bf16 %v2479, %v2478
      %v2675 = vpack.c.bf16 %v2481, %v2480
      %v2676 = vpack.c.bf16 %v2511, %v2510
      %v2677 = vpack.c.bf16 %v2513, %v2512
      %v2678 = vpack.c.bf16 %v2543, %v2542
      %v2679 = vpack.c.bf16 %v2545, %v2544
      %v2680 = vpack.c.bf16 %v2575, %v2574
      %v2681 = vpack.c.bf16 %v2577, %v2576
      %v2682 = vpack.c.bf16 %v2607, %v2606
      %v2683 = vpack.c.bf16 %v2609, %v2608
      %v2684 = vpack.c.bf16 %v2639, %v2638
      %v2685 = vpack.c.bf16 %v2641, %v2640
      %v2686 = vld [vmem:[%s274] sm:$0xf]
      %v2687 = vld [vmem:[%s274 + $0x4] sm:$0xf]
      %v2688 = vld [vmem:[%s274 + $0x8] sm:$0xf]
      %v2689 = vld [vmem:[%s274 + $0xc] sm:$0xf]
      %v2690 = vld [vmem:[%s274 + $0x10] sm:$0xf]
      %v2691 = vld [vmem:[%s274 + $0x14] sm:$0xf]
      %v2692 = vld [vmem:[%s274 + $0x18] sm:$0xf]
      %v2693 = vld [vmem:[%s274 + $0x1c] sm:$0xf]
      %v2694 = vld [vmem:[%s274 + $0x20] sm:$0xf]
      %v2695 = vld [vmem:[%s274 + $0x24] sm:$0xf]
      %v2696 = vld [vmem:[%s274 + $0x28] sm:$0xf]
      %v2697 = vld [vmem:[%s274 + $0x2c] sm:$0xf]
      %v2698 = vld [vmem:[%s274 + $0x30] sm:$0xf]
      %v2699 = vld [vmem:[%s274 + $0x34] sm:$0xf]
      %v2700 = vld [vmem:[%s274 + $0x38] sm:$0xf]
      %v2701 = vld [vmem:[%s274 + $0x3c] sm:$0xf]
      %v2704 = vunpack.c.l.b16 %v2686
      %v2705 = vunpack.c.l.b16 %v2687
      %v2706 = vpack.c.b16 %v2705, %v2704
      %v2709 = vsel %vm402, %v2654, 0
      %v2712 = vsel %vm402, %v2655, 0
      %v2715 = vsel %vm402, %v2656, 0
      %v2718 = vsel %vm402, %v2657, 0
      %2720 = vmatprep.subr.bf16.mxu0 0
      %2721 = vmatpush1.bf16.msra.mxu0 %v2706
      %2722 = vmatprep.subr.bf16.mxu0 0
      %2723 = vmatpush1.bf16.msra.mxu0 0
      %2724 = vmatprep.subr.bf16.mxu0 0
      %2725 = vmatpush1.bf16.msra.mxu0 0
      %2726 = vmatprep.subr.bf16.mxu0 0
      %2727 = vmatpush1.bf16.msra.mxu0 0
      %2728 = vmatprep.subr.bf16.mxu0 0
      %2729 = vmatpush1.bf16.msra.mxu0 0
      %2730 = vmatprep.subr.bf16.mxu0 0
      %2731 = vmatpush1.bf16.msra.mxu0 0
      %2732 = vmatprep.subr.bf16.mxu0 0
      %2733 = vmatpush1.bf16.msra.mxu0 0
      %2734 = vmatprep.subr.bf16.mxu0 0
      %2735 = vmatpush1.bf16.msra.mxu0 0
      %2736 = vmatprep.subr.bf16.mxu0 0
      %2737 = vmatpush1.bf16.msra.mxu0 0
      %2738 = vmatprep.subr.bf16.mxu0 0
      %2739 = vmatpush1.bf16.msra.mxu0 0
      %2740 = vmatprep.subr.bf16.mxu0 0
      %2741 = vmatpush1.bf16.msra.mxu0 0
      %2742 = vmatprep.subr.bf16.mxu0 0
      %2743 = vmatpush1.bf16.msra.mxu0 0
      %2744 = vmatprep.subr.bf16.mxu0 0
      %2745 = vmatpush1.bf16.msra.mxu0 0
      %2746 = vmatprep.subr.bf16.mxu0 0
      %2747 = vmatpush1.bf16.msra.mxu0 0
      %2748 = vmatprep.subr.bf16.mxu0 0
      %2749 = vmatpush1.bf16.msra.mxu0 0
      %2750 = vmatprep.subr.bf16.mxu0 0
      %2751 = vmatpush1.bf16.msra.mxu0 0
      %2752 = vmatprep.mubr.bf16.mxu0 0
      %2753 = vmatmul.mubr.bf16.gmra.mrb[0].mxu0 %v2709
      %v2754 = vpop.f32.mrb[0].mxu0
      %v2755 = vadd.f32 0.0, %v2754
      %v2756 = vpop.f32.mrb[0].mxu0
      %v2757 = vpop.f32.mrb[0].mxu0
      %v2758 = vadd.f32 0.0, %v2757
      %v2759 = vpop.f32.mrb[0].mxu0
      %2760 = vmatprep.mubr.bf16.mxu0 0
      %2761 = vmatmul.mubr.bf16.gmra.mrb[0].mxu0 %v2712
      %v2762 = vpop.f32.mrb[0].mxu0
      %v2763 = vadd.f32 0.0, %v2762
      %v2764 = vpop.f32.mrb[0].mxu0
      %v2765 = vpop.f32.mrb[0].mxu0
      %v2766 = vadd.f32 0.0, %v2765
      %v2767 = vpop.f32.mrb[0].mxu0
      %2768 = vmatprep.mubr.bf16.mxu0 0
      %2769 = vmatmul.mubr.bf16.gmra.mrb[0].mxu0 %v2715
      %v2770 = vpop.f32.mrb[0].mxu0
      %v2771 = vadd.f32 0.0, %v2770
      %v2772 = vpop.f32.mrb[0].mxu0
      %v2773 = vpop.f32.mrb[0].mxu0
      %v2774 = vadd.f32 0.0, %v2773
      %v2775 = vpop.f32.mrb[0].mxu0
      %2776 = vmatprep.mubr.bf16.mxu0 0
      %2777 = vmatmul.mubr.bf16.gmra.mrb[0].mxu0 %v2718
      %v2778 = vpop.f32.mrb[0].mxu0
      %v2779 = vadd.f32 0.0, %v2778
      %v2780 = vpop.f32.mrb[0].mxu0
      %v2781 = vpop.f32.mrb[0].mxu0
      %v2782 = vadd.f32 0.0, %v2781
      %v2783 = vpop.f32.mrb[0].mxu0
      %2784 = vdwg.mxu0
      %v2787 = vunpack.c.l.b16 %v2688
      %v2788 = vunpack.c.l.b16 %v2689
      %v2789 = vpack.c.b16 %v2788, %v2787
      %v2792 = vsel %vm402, %v2658, 0
      %v2795 = vsel %vm402, %v2659, 0
      %v2798 = vsel %vm402, %v2660, 0
      %v2801 = vsel %vm402, %v2661, 0
      %2803 = vmatprep.subr.bf16.mxu0 0
      %2804 = vmatpush1.bf16.msra.mxu0 %v2789
      %2805 = vmatprep.subr.bf16.mxu0 0
      %2806 = vmatpush1.bf16.msra.mxu0 0
      %2807 = vmatprep.subr.bf16.mxu0 0
      %2808 = vmatpush1.bf16.msra.mxu0 0
      %2809 = vmatprep.subr.bf16.mxu0 0
      %2810 = vmatpush1.bf16.msra.mxu0 0
      %2811 = vmatprep.subr.bf16.mxu0 0
      %2812 = vmatpush1.bf16.msra.mxu0 0
      %2813 = vmatprep.subr.bf16.mxu0 0
      %2814 = vmatpush1.bf16.msra.mxu0 0
      %2815 = vmatprep.subr.bf16.mxu0 0
      %2816 = vmatpush1.bf16.msra.mxu0 0
      %2817 = vmatprep.subr.bf16.mxu0 0
      %2818 = vmatpush1.bf16.msra.mxu0 0
      %2819 = vmatprep.subr.bf16.mxu0 0
      %2820 = vmatpush1.bf16.msra.mxu0 0
      %2821 = vmatprep.subr.bf16.mxu0 0
      %2822 = vmatpush1.bf16.msra.mxu0 0
      %2823 = vmatprep.subr.bf16.mxu0 0
      %2824 = vmatpush1.bf16.msra.mxu0 0
      %2825 = vmatprep.subr.bf16.mxu0 0
      %2826 = vmatpush1.bf16.msra.mxu0 0
      %2827 = vmatprep.subr.bf16.mxu0 0
      %2828 = vmatpush1.bf16.msra.mxu0 0
      %2829 = vmatprep.subr.bf16.mxu0 0
      %2830 = vmatpush1.bf16.msra.mxu0 0
      %2831 = vmatprep.subr.bf16.mxu0 0
      %2832 = vmatpush1.bf16.msra.mxu0 0
      %2833 = vmatprep.subr.bf16.mxu0 0
      %2834 = vmatpush1.bf16.msra.mxu0 0
      %2835 = vmatprep.mubr.bf16.mxu0 0
      %2836 = vmatmul.mubr.bf16.gmra.mrb[0].mxu0 %v2792
      %v2837 = vpop.f32.mrb[0].mxu0
      %v2838 = vadd.f32 0.0, %v2837
      %v2839 = vpop.f32.mrb[0].mxu0
      %v2840 = vpop.f32.mrb[0].mxu0
      %v2841 = vadd.f32 0.0, %v2840
      %v2842 = vpop.f32.mrb[0].mxu0
      %2843 = vmatprep.mubr.bf16.mxu0 0
      %2844 = vmatmul.mubr.bf16.gmra.mrb[0].mxu0 %v2795
      %v2845 = vpop.f32.mrb[0].mxu0
      %v2846 = vadd.f32 0.0, %v2845
      %v2847 = vpop.f32.mrb[0].mxu0
      %v2848 = vpop.f32.mrb[0].mxu0
      %v2849 = vadd.f32 0.0, %v2848
      %v2850 = vpop.f32.mrb[0].mxu0
      %2851 = vmatprep.mubr.bf16.mxu0 0
      %2852 = vmatmul.mubr.bf16.gmra.mrb[0].mxu0 %v2798
      %v2853 = vpop.f32.mrb[0].mxu0
      %v2854 = vadd.f32 0.0, %v2853
      %v2855 = vpop.f32.mrb[0].mxu0
      %v2856 = vpop.f32.mrb[0].mxu0
      %v2857 = vadd.f32 0.0, %v2856
      %v2858 = vpop.f32.mrb[0].mxu0
      %2859 = vmatprep.mubr.bf16.mxu0 0
      %2860 = vmatmul.mubr.bf16.gmra.mrb[0].mxu0 %v2801
      %v2861 = vpop.f32.mrb[0].mxu0
      %v2862 = vadd.f32 0.0, %v2861
      %v2863 = vpop.f32.mrb[0].mxu0
      %v2864 = vpop.f32.mrb[0].mxu0
      %v2865 = vadd.f32 0.0, %v2864
      %v2866 = vpop.f32.mrb[0].mxu0
      %2867 = vdwg.mxu0
      %v2870 = vunpack.c.l.b16 %v2690
      %v2871 = vunpack.c.l.b16 %v2691
      %v2872 = vpack.c.b16 %v2871, %v2870
      %v2875 = vsel %vm402, %v2662, 0
      %v2878 = vsel %vm402, %v2663, 0
      %v2881 = vsel %vm402, %v2664, 0
      %v2884 = vsel %vm402, %v2665, 0
      %2886 = vmatprep.subr.bf16.mxu0 0
      %2887 = vmatpush1.bf16.msra.mxu0 %v2872
      %2888 = vmatprep.subr.bf16.mxu0 0
      %2889 = vmatpush1.bf16.msra.mxu0 0
      %2890 = vmatprep.subr.bf16.mxu0 0
      %2891 = vmatpush1.bf16.msra.mxu0 0
      %2892 = vmatprep.subr.bf16.mxu0 0
      %2893 = vmatpush1.bf16.msra.mxu0 0
      %2894 = vmatprep.subr.bf16.mxu0 0
      %2895 = vmatpush1.bf16.msra.mxu0 0
      %2896 = vmatprep.subr.bf16.mxu0 0
      %2897 = vmatpush1.bf16.msra.mxu0 0
      %2898 = vmatprep.subr.bf16.mxu0 0
      %2899 = vmatpush1.bf16.msra.mxu0 0
      %2900 = vmatprep.subr.bf16.mxu0 0
      %2901 = vmatpush1.bf16.msra.mxu0 0
      %2902 = vmatprep.subr.bf16.mxu0 0
      %2903 = vmatpush1.bf16.msra.mxu0 0
      %2904 = vmatprep.subr.bf16.mxu0 0
      %2905 = vmatpush1.bf16.msra.mxu0 0
      %2906 = vmatprep.subr.bf16.mxu0 0
      %2907 = vmatpush1.bf16.msra.mxu0 0
      %2908 = vmatprep.subr.bf16.mxu0 0
      %2909 = vmatpush1.bf16.msra.mxu0 0
      %2910 = vmatprep.subr.bf16.mxu0 0
      %2911 = vmatpush1.bf16.msra.mxu0 0
      %2912 = vmatprep.subr.bf16.mxu0 0
      %2913 = vmatpush1.bf16.msra.mxu0 0
      %2914 = vmatprep.subr.bf16.mxu0 0
      %2915 = vmatpush1.bf16.msra.mxu0 0
      %2916 = vmatprep.subr.bf16.mxu0 0
      %2917 = vmatpush1.bf16.msra.mxu0 0
      %2918 = vmatprep.mubr.bf16.mxu0 0
      %2919 = vmatmul.mubr.bf16.gmra.mrb[0].mxu0 %v2875
      %v2920 = vpop.f32.mrb[0].mxu0
      %v2921 = vadd.f32 0.0, %v2920
      %v2922 = vpop.f32.mrb[0].mxu0
      %v2923 = vpop.f32.mrb[0].mxu0
      %v2924 = vadd.f32 0.0, %v2923
      %v2925 = vpop.f32.mrb[0].mxu0
      %2926 = vmatprep.mubr.bf16.mxu0 0
      %2927 = vmatmul.mubr.bf16.gmra.mrb[0].mxu0 %v2878
      %v2928 = vpop.f32.mrb[0].mxu0
      %v2929 = vadd.f32 0.0, %v2928
      %v2930 = vpop.f32.mrb[0].mxu0
      %v2931 = vpop.f32.mrb[0].mxu0
      %v2932 = vadd.f32 0.0, %v2931
      %v2933 = vpop.f32.mrb[0].mxu0
      %2934 = vmatprep.mubr.bf16.mxu0 0
      %2935 = vmatmul.mubr.bf16.gmra.mrb[0].mxu0 %v2881
      %v2936 = vpop.f32.mrb[0].mxu0
      %v2937 = vadd.f32 0.0, %v2936
      %v2938 = vpop.f32.mrb[0].mxu0
      %v2939 = vpop.f32.mrb[0].mxu0
      %v2940 = vadd.f32 0.0, %v2939
      %v2941 = vpop.f32.mrb[0].mxu0
      %2942 = vmatprep.mubr.bf16.mxu0 0
      %2943 = vmatmul.mubr.bf16.gmra.mrb[0].mxu0 %v2884
      %v2944 = vpop.f32.mrb[0].mxu0
      %v2945 = vadd.f32 0.0, %v2944
      %v2946 = vpop.f32.mrb[0].mxu0
      %v2947 = vpop.f32.mrb[0].mxu0
      %v2948 = vadd.f32 0.0, %v2947
      %v2949 = vpop.f32.mrb[0].mxu0
      %2950 = vdwg.mxu0
      %v2953 = vunpack.c.l.b16 %v2692
      %v2954 = vunpack.c.l.b16 %v2693
      %v2955 = vpack.c.b16 %v2954, %v2953
      %v2958 = vsel %vm402, %v2666, 0
      %v2961 = vsel %vm402, %v2667, 0
      %v2964 = vsel %vm402, %v2668, 0
      %v2967 = vsel %vm402, %v2669, 0
      %2969 = vmatprep.subr.bf16.mxu0 0
      %2970 = vmatpush1.bf16.msra.mxu0 %v2955
      %2971 = vmatprep.subr.bf16.mxu0 0
      %2972 = vmatpush1.bf16.msra.mxu0 0
      %2973 = vmatprep.subr.bf16.mxu0 0
      %2974 = vmatpush1.bf16.msra.mxu0 0
      %2975 = vmatprep.subr.bf16.mxu0 0
      %2976 = vmatpush1.bf16.msra.mxu0 0
      %2977 = vmatprep.subr.bf16.mxu0 0
      %2978 = vmatpush1.bf16.msra.mxu0 0
      %2979 = vmatprep.subr.bf16.mxu0 0
      %2980 = vmatpush1.bf16.msra.mxu0 0
      %2981 = vmatprep.subr.bf16.mxu0 0
      %2982 = vmatpush1.bf16.msra.mxu0 0
      %2983 = vmatprep.subr.bf16.mxu0 0
      %2984 = vmatpush1.bf16.msra.mxu0 0
      %2985 = vmatprep.subr.bf16.mxu0 0
      %2986 = vmatpush1.bf16.msra.mxu0 0
      %2987 = vmatprep.subr.bf16.mxu0 0
      %2988 = vmatpush1.bf16.msra.mxu0 0
      %2989 = vmatprep.subr.bf16.mxu0 0
      %2990 = vmatpush1.bf16.msra.mxu0 0
      %2991 = vmatprep.subr.bf16.mxu0 0
      %2992 = vmatpush1.bf16.msra.mxu0 0
      %2993 = vmatprep.subr.bf16.mxu0 0
      %2994 = vmatpush1.bf16.msra.mxu0 0
      %2995 = vmatprep.subr.bf16.mxu0 0
      %2996 = vmatpush1.bf16.msra.mxu0 0
      %2997 = vmatprep.subr.bf16.mxu0 0
      %2998 = vmatpush1.bf16.msra.mxu0 0
      %2999 = vmatprep.subr.bf16.mxu0 0
      %3000 = vmatpush1.bf16.msra.mxu0 0
      %3001 = vmatprep.mubr.bf16.mxu0 0
      %3002 = vmatmul.mubr.bf16.gmra.mrb[0].mxu0 %v2958
      %v3003 = vpop.f32.mrb[0].mxu0
      %v3004 = vadd.f32 0.0, %v3003
      %v3005 = vpop.f32.mrb[0].mxu0
      %v3006 = vpop.f32.mrb[0].mxu0
      %v3007 = vadd.f32 0.0, %v3006
      %v3008 = vpop.f32.mrb[0].mxu0
      %3009 = vmatprep.mubr.bf16.mxu0 0
      %3010 = vmatmul.mubr.bf16.gmra.mrb[0].mxu0 %v2961
      %v3011 = vpop.f32.mrb[0].mxu0
      %v3012 = vadd.f32 0.0, %v3011
      %v3013 = vpop.f32.mrb[0].mxu0
      %v3014 = vpop.f32.mrb[0].mxu0
      %v3015 = vadd.f32 0.0, %v3014
      %v3016 = vpop.f32.mrb[0].mxu0
      %3017 = vmatprep.mubr.bf16.mxu0 0
      %3018 = vmatmul.mubr.bf16.gmra.mrb[0].mxu0 %v2964
      %v3019 = vpop.f32.mrb[0].mxu0
      %v3020 = vadd.f32 0.0, %v3019
      %v3021 = vpop.f32.mrb[0].mxu0
      %v3022 = vpop.f32.mrb[0].mxu0
      %v3023 = vadd.f32 0.0, %v3022
      %v3024 = vpop.f32.mrb[0].mxu0
      %3025 = vmatprep.mubr.bf16.mxu0 0
      %3026 = vmatmul.mubr.bf16.gmra.mrb[0].mxu0 %v2967
      %v3027 = vpop.f32.mrb[0].mxu0
      %v3028 = vadd.f32 0.0, %v3027
      %v3029 = vpop.f32.mrb[0].mxu0
      %v3030 = vpop.f32.mrb[0].mxu0
      %v3031 = vadd.f32 0.0, %v3030
      %v3032 = vpop.f32.mrb[0].mxu0
      %3033 = vdwg.mxu0
      %v3036 = vunpack.c.l.b16 %v2694
      %v3037 = vunpack.c.l.b16 %v2695
      %v3038 = vpack.c.b16 %v3037, %v3036
      %v3041 = vsel %vm402, %v2670, 0
      %v3044 = vsel %vm402, %v2671, 0
      %v3047 = vsel %vm402, %v2672, 0
      %v3050 = vsel %vm402, %v2673, 0
      %3052 = vmatprep.subr.bf16.mxu0 0
      %3053 = vmatpush1.bf16.msra.mxu0 %v3038
      %3054 = vmatprep.subr.bf16.mxu0 0
      %3055 = vmatpush1.bf16.msra.mxu0 0
      %3056 = vmatprep.subr.bf16.mxu0 0
      %3057 = vmatpush1.bf16.msra.mxu0 0
      %3058 = vmatprep.subr.bf16.mxu0 0
      %3059 = vmatpush1.bf16.msra.mxu0 0
      %3060 = vmatprep.subr.bf16.mxu0 0
      %3061 = vmatpush1.bf16.msra.mxu0 0
      %3062 = vmatprep.subr.bf16.mxu0 0
      %3063 = vmatpush1.bf16.msra.mxu0 0
      %3064 = vmatprep.subr.bf16.mxu0 0
      %3065 = vmatpush1.bf16.msra.mxu0 0
      %3066 = vmatprep.subr.bf16.mxu0 0
      %3067 = vmatpush1.bf16.msra.mxu0 0
      %3068 = vmatprep.subr.bf16.mxu0 0
      %3069 = vmatpush1.bf16.msra.mxu0 0
      %3070 = vmatprep.subr.bf16.mxu0 0
      %3071 = vmatpush1.bf16.msra.mxu0 0
      %3072 = vmatprep.subr.bf16.mxu0 0
      %3073 = vmatpush1.bf16.msra.mxu0 0
      %3074 = vmatprep.subr.bf16.mxu0 0
      %3075 = vmatpush1.bf16.msra.mxu0 0
      %3076 = vmatprep.subr.bf16.mxu0 0
      %3077 = vmatpush1.bf16.msra.mxu0 0
      %3078 = vmatprep.subr.bf16.mxu0 0
      %3079 = vmatpush1.bf16.msra.mxu0 0
      %3080 = vmatprep.subr.bf16.mxu0 0
      %3081 = vmatpush1.bf16.msra.mxu0 0
      %3082 = vmatprep.subr.bf16.mxu0 0
      %3083 = vmatpush1.bf16.msra.mxu0 0
      %3084 = vmatprep.mubr.bf16.mxu0 0
      %3085 = vmatmul.mubr.bf16.gmra.mrb[0].mxu0 %v3041
      %v3086 = vpop.f32.mrb[0].mxu0
      %v3087 = vadd.f32 0.0, %v3086
      %v3088 = vpop.f32.mrb[0].mxu0
      %v3089 = vpop.f32.mrb[0].mxu0
      %v3090 = vadd.f32 0.0, %v3089
      %v3091 = vpop.f32.mrb[0].mxu0
      %3092 = vmatprep.mubr.bf16.mxu0 0
      %3093 = vmatmul.mubr.bf16.gmra.mrb[0].mxu0 %v3044
      %v3094 = vpop.f32.mrb[0].mxu0
      %v3095 = vadd.f32 0.0, %v3094
      %v3096 = vpop.f32.mrb[0].mxu0
      %v3097 = vpop.f32.mrb[0].mxu0
      %v3098 = vadd.f32 0.0, %v3097
      %v3099 = vpop.f32.mrb[0].mxu0
      %3100 = vmatprep.mubr.bf16.mxu0 0
      %3101 = vmatmul.mubr.bf16.gmra.mrb[0].mxu0 %v3047
      %v3102 = vpop.f32.mrb[0].mxu0
      %v3103 = vadd.f32 0.0, %v3102
      %v3104 = vpop.f32.mrb[0].mxu0
      %v3105 = vpop.f32.mrb[0].mxu0
      %v3106 = vadd.f32 0.0, %v3105
      %v3107 = vpop.f32.mrb[0].mxu0
      %3108 = vmatprep.mubr.bf16.mxu0 0
      %3109 = vmatmul.mubr.bf16.gmra.mrb[0].mxu0 %v3050
      %v3110 = vpop.f32.mrb[0].mxu0
      %v3111 = vadd.f32 0.0, %v3110
      %v3112 = vpop.f32.mrb[0].mxu0
      %v3113 = vpop.f32.mrb[0].mxu0
      %v3114 = vadd.f32 0.0, %v3113
      %v3115 = vpop.f32.mrb[0].mxu0
      %3116 = vdwg.mxu0
      %v3119 = vunpack.c.l.b16 %v2696
      %v3120 = vunpack.c.l.b16 %v2697
      %v3121 = vpack.c.b16 %v3120, %v3119
      %v3124 = vsel %vm402, %v2674, 0
      %v3127 = vsel %vm402, %v2675, 0
      %v3130 = vsel %vm402, %v2676, 0
      %v3133 = vsel %vm402, %v2677, 0
      %3135 = vmatprep.subr.bf16.mxu0 0
      %3136 = vmatpush1.bf16.msra.mxu0 %v3121
      %3137 = vmatprep.subr.bf16.mxu0 0
      %3138 = vmatpush1.bf16.msra.mxu0 0
      %3139 = vmatprep.subr.bf16.mxu0 0
      %3140 = vmatpush1.bf16.msra.mxu0 0
      %3141 = vmatprep.subr.bf16.mxu0 0
      %3142 = vmatpush1.bf16.msra.mxu0 0
      %3143 = vmatprep.subr.bf16.mxu0 0
      %3144 = vmatpush1.bf16.msra.mxu0 0
      %3145 = vmatprep.subr.bf16.mxu0 0
      %3146 = vmatpush1.bf16.msra.mxu0 0
      %3147 = vmatprep.subr.bf16.mxu0 0
      %3148 = vmatpush1.bf16.msra.mxu0 0
      %3149 = vmatprep.subr.bf16.mxu0 0
      %3150 = vmatpush1.bf16.msra.mxu0 0
      %3151 = vmatprep.subr.bf16.mxu0 0
      %3152 = vmatpush1.bf16.msra.mxu0 0
      %3153 = vmatprep.subr.bf16.mxu0 0
      %3154 = vmatpush1.bf16.msra.mxu0 0
      %3155 = vmatprep.subr.bf16.mxu0 0
      %3156 = vmatpush1.bf16.msra.mxu0 0
      %3157 = vmatprep.subr.bf16.mxu0 0
      %3158 = vmatpush1.bf16.msra.mxu0 0
      %3159 = vmatprep.subr.bf16.mxu0 0
      %3160 = vmatpush1.bf16.msra.mxu0 0
      %3161 = vmatprep.subr.bf16.mxu0 0
      %3162 = vmatpush1.bf16.msra.mxu0 0
      %3163 = vmatprep.subr.bf16.mxu0 0
      %3164 = vmatpush1.bf16.msra.mxu0 0
      %3165 = vmatprep.subr.bf16.mxu0 0
      %3166 = vmatpush1.bf16.msra.mxu0 0
      %3167 = vmatprep.mubr.bf16.mxu0 0
      %3168 = vmatmul.mubr.bf16.gmra.mrb[0].mxu0 %v3124
      %v3169 = vpop.f32.mrb[0].mxu0
      %v3170 = vadd.f32 0.0, %v3169
      %v3171 = vpop.f32.mrb[0].mxu0
      %v3172 = vpop.f32.mrb[0].mxu0
      %v3173 = vadd.f32 0.0, %v3172
      %v3174 = vpop.f32.mrb[0].mxu0
      %3175 = vmatprep.mubr.bf16.mxu0 0
      %3176 = vmatmul.mubr.bf16.gmra.mrb[0].mxu0 %v3127
      %v3177 = vpop.f32.mrb[0].mxu0
      %v3178 = vadd.f32 0.0, %v3177
      %v3179 = vpop.f32.mrb[0].mxu0
      %v3180 = vpop.f32.mrb[0].mxu0
      %v3181 = vadd.f32 0.0, %v3180
      %v3182 = vpop.f32.mrb[0].mxu0
      %3183 = vmatprep.mubr.bf16.mxu0 0
      %3184 = vmatmul.mubr.bf16.gmra.mrb[0].mxu0 %v3130
      %v3185 = vpop.f32.mrb[0].mxu0
      %v3186 = vadd.f32 0.0, %v3185
      %v3187 = vpop.f32.mrb[0].mxu0
      %v3188 = vpop.f32.mrb[0].mxu0
      %v3189 = vadd.f32 0.0, %v3188
      %v3190 = vpop.f32.mrb[0].mxu0
      %3191 = vmatprep.mubr.bf16.mxu0 0
      %3192 = vmatmul.mubr.bf16.gmra.mrb[0].mxu0 %v3133
      %v3193 = vpop.f32.mrb[0].mxu0
      %v3194 = vadd.f32 0.0, %v3193
      %v3195 = vpop.f32.mrb[0].mxu0
      %v3196 = vpop.f32.mrb[0].mxu0
      %v3197 = vadd.f32 0.0, %v3196
      %v3198 = vpop.f32.mrb[0].mxu0
      %3199 = vdwg.mxu0
      %v3202 = vunpack.c.l.b16 %v2698
      %v3203 = vunpack.c.l.b16 %v2699
      %v3204 = vpack.c.b16 %v3203, %v3202
      %v3207 = vsel %vm402, %v2678, 0
      %v3210 = vsel %vm402, %v2679, 0
      %v3213 = vsel %vm402, %v2680, 0
      %v3216 = vsel %vm402, %v2681, 0
      %3218 = vmatprep.subr.bf16.mxu0 0
      %3219 = vmatpush1.bf16.msra.mxu0 %v3204
      %3220 = vmatprep.subr.bf16.mxu0 0
      %3221 = vmatpush1.bf16.msra.mxu0 0
      %3222 = vmatprep.subr.bf16.mxu0 0
      %3223 = vmatpush1.bf16.msra.mxu0 0
      %3224 = vmatprep.subr.bf16.mxu0 0
      %3225 = vmatpush1.bf16.msra.mxu0 0
      %3226 = vmatprep.subr.bf16.mxu0 0
      %3227 = vmatpush1.bf16.msra.mxu0 0
      %3228 = vmatprep.subr.bf16.mxu0 0
      %3229 = vmatpush1.bf16.msra.mxu0 0
      %3230 = vmatprep.subr.bf16.mxu0 0
      %3231 = vmatpush1.bf16.msra.mxu0 0
      %3232 = vmatprep.subr.bf16.mxu0 0
      %3233 = vmatpush1.bf16.msra.mxu0 0
      %3234 = vmatprep.subr.bf16.mxu0 0
      %3235 = vmatpush1.bf16.msra.mxu0 0
      %3236 = vmatprep.subr.bf16.mxu0 0
      %3237 = vmatpush1.bf16.msra.mxu0 0
      %3238 = vmatprep.subr.bf16.mxu0 0
      %3239 = vmatpush1.bf16.msra.mxu0 0
      %3240 = vmatprep.subr.bf16.mxu0 0
      %3241 = vmatpush1.bf16.msra.mxu0 0
      %3242 = vmatprep.subr.bf16.mxu0 0
      %3243 = vmatpush1.bf16.msra.mxu0 0
      %3244 = vmatprep.subr.bf16.mxu0 0
      %3245 = vmatpush1.bf16.msra.mxu0 0
      %3246 = vmatprep.subr.bf16.mxu0 0
      %3247 = vmatpush1.bf16.msra.mxu0 0
      %3248 = vmatprep.subr.bf16.mxu0 0
      %3249 = vmatpush1.bf16.msra.mxu0 0
      %3250 = vmatprep.mubr.bf16.mxu0 0
      %3251 = vmatmul.mubr.bf16.gmra.mrb[0].mxu0 %v3207
      %v3252 = vpop.f32.mrb[0].mxu0
      %v3253 = vadd.f32 0.0, %v3252
      %v3254 = vpop.f32.mrb[0].mxu0
      %v3255 = vpop.f32.mrb[0].mxu0
      %v3256 = vadd.f32 0.0, %v3255
      %v3257 = vpop.f32.mrb[0].mxu0
      %3258 = vmatprep.mubr.bf16.mxu0 0
      %3259 = vmatmul.mubr.bf16.gmra.mrb[0].mxu0 %v3210
      %v3260 = vpop.f32.mrb[0].mxu0
      %v3261 = vadd.f32 0.0, %v3260
      %v3262 = vpop.f32.mrb[0].mxu0
      %v3263 = vpop.f32.mrb[0].mxu0
      %v3264 = vadd.f32 0.0, %v3263
      %v3265 = vpop.f32.mrb[0].mxu0
      %3266 = vmatprep.mubr.bf16.mxu0 0
      %3267 = vmatmul.mubr.bf16.gmra.mrb[0].mxu0 %v3213
      %v3268 = vpop.f32.mrb[0].mxu0
      %v3269 = vadd.f32 0.0, %v3268
      %v3270 = vpop.f32.mrb[0].mxu0
      %v3271 = vpop.f32.mrb[0].mxu0
      %v3272 = vadd.f32 0.0, %v3271
      %v3273 = vpop.f32.mrb[0].mxu0
      %3274 = vmatprep.mubr.bf16.mxu0 0
      %3275 = vmatmul.mubr.bf16.gmra.mrb[0].mxu0 %v3216
      %v3276 = vpop.f32.mrb[0].mxu0
      %v3277 = vadd.f32 0.0, %v3276
      %v3278 = vpop.f32.mrb[0].mxu0
      %v3279 = vpop.f32.mrb[0].mxu0
      %v3280 = vadd.f32 0.0, %v3279
      %v3281 = vpop.f32.mrb[0].mxu0
      %3282 = vdwg.mxu0
      %v3285 = vunpack.c.l.b16 %v2700
      %v3286 = vunpack.c.l.b16 %v2701
      %v3287 = vpack.c.b16 %v3286, %v3285
      %v3290 = vsel %vm402, %v2682, 0
      %v3293 = vsel %vm402, %v2683, 0
      %v3296 = vsel %vm402, %v2684, 0
      %v3299 = vsel %vm402, %v2685, 0
      %3301 = vmatprep.subr.bf16.mxu0 0
      %3302 = vmatpush1.bf16.msra.mxu0 %v3287
      %3303 = vmatprep.subr.bf16.mxu0 0
      %3304 = vmatpush1.bf16.msra.mxu0 0
      %3305 = vmatprep.subr.bf16.mxu0 0
      %3306 = vmatpush1.bf16.msra.mxu0 0
      %3307 = vmatprep.subr.bf16.mxu0 0
      %3308 = vmatpush1.bf16.msra.mxu0 0
      %3309 = vmatprep.subr.bf16.mxu0 0
      %3310 = vmatpush1.bf16.msra.mxu0 0
      %3311 = vmatprep.subr.bf16.mxu0 0
      %3312 = vmatpush1.bf16.msra.mxu0 0
      %3313 = vmatprep.subr.bf16.mxu0 0
      %3314 = vmatpush1.bf16.msra.mxu0 0
      %3315 = vmatprep.subr.bf16.mxu0 0
      %3316 = vmatpush1.bf16.msra.mxu0 0
      %3317 = vmatprep.subr.bf16.mxu0 0
      %3318 = vmatpush1.bf16.msra.mxu0 0
      %3319 = vmatprep.subr.bf16.mxu0 0
      %3320 = vmatpush1.bf16.msra.mxu0 0
      %3321 = vmatprep.subr.bf16.mxu0 0
      %3322 = vmatpush1.bf16.msra.mxu0 0
      %3323 = vmatprep.subr.bf16.mxu0 0
      %3324 = vmatpush1.bf16.msra.mxu0 0
      %3325 = vmatprep.subr.bf16.mxu0 0
      %3326 = vmatpush1.bf16.msra.mxu0 0
      %3327 = vmatprep.subr.bf16.mxu0 0
      %3328 = vmatpush1.bf16.msra.mxu0 0
      %3329 = vmatprep.subr.bf16.mxu0 0
      %3330 = vmatpush1.bf16.msra.mxu0 0
      %3331 = vmatprep.subr.bf16.mxu0 0
      %3332 = vmatpush1.bf16.msra.mxu0 0
      %3333 = vmatprep.mubr.bf16.mxu0 0
      %3334 = vmatmul.mubr.bf16.gmra.mrb[0].mxu0 %v3290
      %v3335 = vpop.f32.mrb[0].mxu0
      %v3336 = vadd.f32 0.0, %v3335
      %v3337 = vpop.f32.mrb[0].mxu0
      %v3338 = vpop.f32.mrb[0].mxu0
      %v3339 = vadd.f32 0.0, %v3338
      %v3340 = vpop.f32.mrb[0].mxu0
      %3341 = vmatprep.mubr.bf16.mxu0 0
      %3342 = vmatmul.mubr.bf16.gmra.mrb[0].mxu0 %v3293
      %v3343 = vpop.f32.mrb[0].mxu0
      %v3344 = vadd.f32 0.0, %v3343
      %v3345 = vpop.f32.mrb[0].mxu0
      %v3346 = vpop.f32.mrb[0].mxu0
      %v3347 = vadd.f32 0.0, %v3346
      %v3348 = vpop.f32.mrb[0].mxu0
      %3349 = vmatprep.mubr.bf16.mxu0 0
      %3350 = vmatmul.mubr.bf16.gmra.mrb[0].mxu0 %v3296
      %v3351 = vpop.f32.mrb[0].mxu0
      %v3352 = vadd.f32 0.0, %v3351
      %v3353 = vpop.f32.mrb[0].mxu0
      %v3354 = vpop.f32.mrb[0].mxu0
      %v3355 = vadd.f32 0.0, %v3354
      %v3356 = vpop.f32.mrb[0].mxu0
      %3357 = vmatprep.mubr.bf16.mxu0 0
      %3358 = vmatmul.mubr.bf16.gmra.mrb[0].mxu0 %v3299
      %v3359 = vpop.f32.mrb[0].mxu0
      %v3360 = vadd.f32 0.0, %v3359
      %v3361 = vpop.f32.mrb[0].mxu0
      %v3362 = vpop.f32.mrb[0].mxu0
      %v3363 = vadd.f32 0.0, %v3362
      %v3364 = vpop.f32.mrb[0].mxu0
      %3365 = vdwg.mxu0
      %3366 = vst.msk [vmem:[%s281] sm:$0xff] %vm402, %v2755
      %3367 = vst.msk [vmem:[%s281 + $0x8] sm:$0xff] %vm402, %v2758
      %3368 = vst.msk [vmem:[%s281 + $0x10] sm:$0xff] %vm402, %v2763
      %3369 = vst.msk [vmem:[%s281 + $0x18] sm:$0xff] %vm402, %v2766
      %3370 = vst.msk [vmem:[%s281 + $0x20] sm:$0xff] %vm402, %v2771
      %3371 = vst.msk [vmem:[%s281 + $0x28] sm:$0xff] %vm402, %v2774
      %3372 = vst.msk [vmem:[%s281 + $0x30] sm:$0xff] %vm402, %v2779
      %3373 = vst.msk [vmem:[%s281 + $0x38] sm:$0xff] %vm402, %v2782
      %3374 = vst.msk [vmem:[%s281 + $0x40] sm:$0xff] %vm402, %v2838
      %3375 = vst.msk [vmem:[%s281 + $0x48] sm:$0xff] %vm402, %v2841
      %3376 = vst.msk [vmem:[%s281 + $0x50] sm:$0xff] %vm402, %v2846
      %3377 = vst.msk [vmem:[%s281 + $0x58] sm:$0xff] %vm402, %v2849
      %3378 = vst.msk [vmem:[%s281 + $0x60] sm:$0xff] %vm402, %v2854
      %3379 = vst.msk [vmem:[%s281 + $0x68] sm:$0xff] %vm402, %v2857
      %3380 = vst.msk [vmem:[%s281 + $0x70] sm:$0xff] %vm402, %v2862
      %3381 = vst.msk [vmem:[%s281 + $0x78] sm:$0xff] %vm402, %v2865
      %3382 = vst.msk [vmem:[%s281 + $0x80] sm:$0xff] %vm402, %v2921
      %3383 = vst.msk [vmem:[%s281 + $0x88] sm:$0xff] %vm402, %v2924
      %3384 = vst.msk [vmem:[%s281 + $0x90] sm:$0xff] %vm402, %v2929
      %3385 = vst.msk [vmem:[%s281 + $0x98] sm:$0xff] %vm402, %v2932
      %3386 = vst.msk [vmem:[%s281 + $0xa0] sm:$0xff] %vm402, %v2937
      %3387 = vst.msk [vmem:[%s281 + $0xa8] sm:$0xff] %vm402, %v2940
      %3388 = vst.msk [vmem:[%s281 + $0xb0] sm:$0xff] %vm402, %v2945
      %3389 = vst.msk [vmem:[%s281 + $0xb8] sm:$0xff] %vm402, %v2948
      %3390 = vst.msk [vmem:[%s281 + $0xc0] sm:$0xff] %vm402, %v3004
      %3391 = vst.msk [vmem:[%s281 + $0xc8] sm:$0xff] %vm402, %v3007
      %3392 = vst.msk [vmem:[%s281 + $0xd0] sm:$0xff] %vm402, %v3012
      %3393 = vst.msk [vmem:[%s281 + $0xd8] sm:$0xff] %vm402, %v3015
      %3394 = vst.msk [vmem:[%s281 + $0xe0] sm:$0xff] %vm402, %v3020
      %3395 = vst.msk [vmem:[%s281 + $0xe8] sm:$0xff] %vm402, %v3023
      %3396 = vst.msk [vmem:[%s281 + $0xf0] sm:$0xff] %vm402, %v3028
      %3397 = vst.msk [vmem:[%s281 + $0xf8] sm:$0xff] %vm402, %v3031
      %3398 = vst.msk [vmem:[%s281 + $0x100] sm:$0xff] %vm402, %v3087
      %3399 = vst.msk [vmem:[%s281 + $0x108] sm:$0xff] %vm402, %v3090
      %3400 = vst.msk [vmem:[%s281 + $0x110] sm:$0xff] %vm402, %v3095
      %3401 = vst.msk [vmem:[%s281 + $0x118] sm:$0xff] %vm402, %v3098
      %3402 = vst.msk [vmem:[%s281 + $0x120] sm:$0xff] %vm402, %v3103
      %3403 = vst.msk [vmem:[%s281 + $0x128] sm:$0xff] %vm402, %v3106
      %3404 = vst.msk [vmem:[%s281 + $0x130] sm:$0xff] %vm402, %v3111
      %3405 = vst.msk [vmem:[%s281 + $0x138] sm:$0xff] %vm402, %v3114
      %3406 = vst.msk [vmem:[%s281 + $0x140] sm:$0xff] %vm402, %v3170
      %3407 = vst.msk [vmem:[%s281 + $0x148] sm:$0xff] %vm402, %v3173
      %3408 = vst.msk [vmem:[%s281 + $0x150] sm:$0xff] %vm402, %v3178
      %3409 = vst.msk [vmem:[%s281 + $0x158] sm:$0xff] %vm402, %v3181
      %3410 = vst.msk [vmem:[%s281 + $0x160] sm:$0xff] %vm402, %v3186
      %3411 = vst.msk [vmem:[%s281 + $0x168] sm:$0xff] %vm402, %v3189
      %3412 = vst.msk [vmem:[%s281 + $0x170] sm:$0xff] %vm402, %v3194
      %3413 = vst.msk [vmem:[%s281 + $0x178] sm:$0xff] %vm402, %v3197
      %3414 = vst.msk [vmem:[%s281 + $0x180] sm:$0xff] %vm402, %v3253
      %3415 = vst.msk [vmem:[%s281 + $0x188] sm:$0xff] %vm402, %v3256
      %3416 = vst.msk [vmem:[%s281 + $0x190] sm:$0xff] %vm402, %v3261
      %3417 = vst.msk [vmem:[%s281 + $0x198] sm:$0xff] %vm402, %v3264
      %3418 = vst.msk [vmem:[%s281 + $0x1a0] sm:$0xff] %vm402, %v3269
      %3419 = vst.msk [vmem:[%s281 + $0x1a8] sm:$0xff] %vm402, %v3272
      %3420 = vst.msk [vmem:[%s281 + $0x1b0] sm:$0xff] %vm402, %v3277
      %3421 = vst.msk [vmem:[%s281 + $0x1b8] sm:$0xff] %vm402, %v3280
      %3422 = vst.msk [vmem:[%s281 + $0x1c0] sm:$0xff] %vm402, %v3336
      %3423 = vst.msk [vmem:[%s281 + $0x1c8] sm:$0xff] %vm402, %v3339
      %3424 = vst.msk [vmem:[%s281 + $0x1d0] sm:$0xff] %vm402, %v3344
      %3425 = vst.msk [vmem:[%s281 + $0x1d8] sm:$0xff] %vm402, %v3347
      %3426 = vst.msk [vmem:[%s281 + $0x1e0] sm:$0xff] %vm402, %v3352
      %3427 = vst.msk [vmem:[%s281 + $0x1e8] sm:$0xff] %vm402, %v3355
      %3428 = vst.msk [vmem:[%s281 + $0x1f0] sm:$0xff] %vm402, %v3360
      %3429 = vst.msk [vmem:[%s281 + $0x1f8] sm:$0xff] %vm402, %v3363
      %s3430 = smul.u32 8, %s16
      %p3431 = scmp.lt.s32.totalorder %s3430, 23
      %s3432 = scalar_select %p3431, %s3430, 23
      %s3433 = smul.addr %s3432, 8
      %s3434 = smul.addr %s3433, 8
      %s3435 = scalar_lea.vmem %s5, %s3434
      // Predicated region
      $region41: #{_lambda_.1} parent=39 // pred_check
        %p3436 = pneg %p154
      $region42: #{_lambda_.1} parent=39 // pred_check_branch
        %3438 = sbr.rel (%p3436) target = $region44
      $region43: #{_lambda_.1} parent=39 // pred_region
        %s3439 = smul.u32 8, %s16
      $region44: #{_lambda_.1} parent=39 // pred_fallthru
        _
    $region40: #{_lambda_.1} parent=5 // pred_fallthru
      _
    %p3440 = scmp.le.s32.totalorder 2, %s11
    // Predicated region
    $region45: #{_lambda_.1} parent=5 // pred_check
      %p3441 = pneg %p3440
    $region46: #{_lambda_.1} parent=5 // pred_check_branch
      %3443 = sbr.rel (%p3441) target = $region48
    $region47: #{_lambda_.1} parent=5 // pred_region
      %s3444 = ssub.s32 %s11, 2
      // Predicated region
      $region49: #{_lambda_.1} parent=47 // pred_check
        %p3445 = pneg %p160
      $region50: #{_lambda_.1} parent=47 // pred_check_branch
        %3447 = sbr.rel (%p3445) target = $region52
      $region51: #{_lambda_.1} parent=47 // pred_region
        %s3448 = smul.u32 8, %s17
        %p3449 = scmp.lt.s32.totalorder %s3448, 23
        %s3450 = scalar_select %p3449, %s3448, 23
        %s3451 = smul.addr %s3450, 8
        %s3452 = smul.addr %s3451, 8
        %s3453 = scalar_lea.vmem %s5, %s3452
      $region52: #{_lambda_.1} parent=47 // pred_fallthru
        _
    $region48: #{_lambda_.1} parent=5 // pred_fallthru
      _
  $region6: #{_lambda_.1} parent=0 // loop_footer
    %s15 = sadd.s32 1, %s11
  $region7: #{_lambda_.1} parent=0 // loop_footer_branch
    %10 = sbr.rel target = $region3
  $region8: #{_lambda_.1} parent=0 // loop_exit
    _

</llo_original>
